<compile_context>
chip_gen: v7x
topology: tpu7x:2x2x1
jax: 0.10.0
libtpu: 0.0.40
codegen_flags: <defaults>
</compile_context>

<pallas_src>
import functools

import jax
import jax.numpy as jnp
from jax import lax
from jax.experimental import pallas as pl
from jax.experimental.pallas import tpu as pltpu


def _layernorm(x, g, b, eps=1e-5):
    # x: (M, D) f32, g/b: (1, D).  PyTorch LayerNorm: biased variance, eps=1e-5.
    mu = jnp.mean(x, axis=-1, keepdims=True)
    var = jnp.mean((x - mu) * (x - mu), axis=-1, keepdims=True)
    return (x - mu) * lax.rsqrt(var + eps) * g + b


# ----------------------------------------------------------------------------
# Kernel 1: batched embedding row gather (+ positional add)
# ----------------------------------------------------------------------------
def embed_kernel(tok_ref, pos_ref, emb_hbm, out_ref, rowbuf, sems, *, rows):
    base = pl.program_id(0) * rows
    copies = []
    for r in range(rows):                        # all row DMAs in flight at once
        cp = pltpu.make_async_copy(emb_hbm.at[tok_ref[base + r]],
                                   rowbuf.at[r], sems.at[r])
        cp.start()
        copies.append(cp)
    for cp in copies:
        cp.wait()
    out_ref[...] = rowbuf[...] + pos_ref[...]


def _embed(tokens_flat, emb, pos_tiled, *, rows):
    n_rows, d = pos_tiled.shape
    kernel = functools.partial(embed_kernel, rows=rows)
    return pl.pallas_call(
        kernel,
        out_shape=jax.ShapeDtypeStruct((n_rows, d), jnp.float32),
        grid_spec=pltpu.PrefetchScalarGridSpec(
            num_scalar_prefetch=1,
            grid=(n_rows // rows,),
            in_specs=[
                pl.BlockSpec((rows, d), lambda i, tok: (i, 0)),   # positional rows
                pl.BlockSpec(memory_space=pl.ANY),                # embedding table (HBM)
            ],
            out_specs=pl.BlockSpec((rows, d), lambda i, tok: (i, 0)),
            scratch_shapes=[
                pltpu.VMEM((rows, d), jnp.float32),
                pltpu.SemaphoreType.DMA((rows,)),
            ],
        ),
        compiler_params=pltpu.CompilerParams(
            dimension_semantics=("parallel",)),   # rows independent -> megacore splits
    )(tokens_flat, pos_tiled, emb)


# ----------------------------------------------------------------------------
# Kernel 2: fused transformer stack (all layers + final LayerNorm)
# ----------------------------------------------------------------------------
def clip_layers_kernel(x_ref, ln1_g_ref, ln1_b_ref, wqkv_ref, bqkv_ref,
                       wo_ref, bo_ref, ln2_g_ref, ln2_b_ref,
                       w1_ref, b1_ref, w2_ref, b2_ref, lnf_g_ref, lnf_b_ref,
                       out_ref, qh_sc, kh_sc, vh_sc, attn_sc,
                       *, n_head, t_real):
    layer = pl.program_id(1)
    bf16 = jnp.bfloat16

    # Layer 0: seed the resident f32 residual stream from the embeddings.
    @pl.when(layer == 0)
    def _():
        out_ref[...] = x_ref[...]

    x3 = out_ref[...]                              # (Bb, Tp, D) f32 residual stream
    Bb, T, D = x3.shape
    M = Bb * T
    H = n_head
    dh = D // H
    scale = 1.0 / float(dh) ** 0.5

    x = x3.reshape(M, D)                           # Tp % 8 == 0 -> free reshape

    # ----------------------------- attention -------------------------------
    residual = x
    h = _layernorm(x, ln1_g_ref[...], ln1_b_ref[...])
    qkv = jnp.dot(h.astype(bf16), wqkv_ref[...],
                  preferred_element_type=jnp.float32) + bqkv_ref[...]   # (M, 3D) f32
    qkv = qkv.reshape(Bb, T, 3 * D)

    # Stage q/k/v head-major in VMEM scratch (static copies).  Value-level
    # 'bthd->hbtd' transposes are not reliably lowered by Mosaic, so the
    # layout change goes through scratch; the matmuls below stay batched.
    for hh in range(H):
        qh_sc[hh] = qkv[:, :, hh * dh:(hh + 1) * dh].astype(bf16)
        kh_sc[hh] = qkv[:, :, D + hh * dh:D + (hh + 1) * dh].astype(bf16)
        vh_sc[hh] = qkv[:, :, 2 * D + hh * dh:2 * D + (hh + 1) * dh].astype(bf16)
    q = qh_sc[...].reshape(H * Bb, T, dh)
    k = kh_sc[...].reshape(H * Bb, T, dh)
    v = vh_sc[...].reshape(H * Bb, T, dh)

    # One batched score matmul / softmax / PV matmul over (head*batch).
    s = jnp.einsum("nqd,nkd->nqk", q, k,
                   preferred_element_type=jnp.float32) * scale          # (HB, T, T) f32
    kidx = lax.broadcasted_iota(jnp.int32, (T, T), 1)
    qidx = lax.broadcasted_iota(jnp.int32, (T, T), 0)
    mask = (kidx > qidx) | (kidx >= t_real)        # causal + padded-key mask (scores f32)
    s = jnp.where(mask[None], jnp.float32(-1e30), s)
    m = jnp.max(s, axis=-1, keepdims=True)
    e = jnp.exp(s - m)
    p = e * pl.reciprocal(jnp.sum(e, axis=-1, keepdims=True), approx=True)
    o = jnp.einsum("nqk,nkd->nqd", p.astype(bf16), v,
                   preferred_element_type=jnp.float32)                  # (HB, T, dh)
    o = o.reshape(H, Bb, T, dh)
    for hh in range(H):                            # scatter back to (Bb, T, D)
        attn_sc[:, :, hh * dh:(hh + 1) * dh] = o[hh].astype(bf16)

    attn = jnp.dot(attn_sc[...].reshape(M, D), wo_ref[...],
                   preferred_element_type=jnp.float32) + bo_ref[...]
    x = attn + residual

    # ------------------------------- MLP ------------------------------------
    residual = x
    hm = _layernorm(x, ln2_g_ref[...], ln2_b_ref[...]).astype(bf16)
    t = jnp.dot(hm, w1_ref[...], preferred_element_type=jnp.float32) + b1_ref[...]
    t = t * jax.nn.sigmoid(1.702 * t)              # quick-GELU
    y = jnp.dot(t.astype(bf16), w2_ref[...],
                preferred_element_type=jnp.float32) + b2_ref[...] + residual

    is_last = layer == pl.num_programs(1) - 1

    @pl.when(jnp.logical_not(is_last))
    def _():
        out_ref[...] = y.reshape(Bb, T, D)

    # Final LayerNorm fused into the last layer step (no extra HBM round trip).
    @pl.when(is_last)
    def _():
        out_ref[...] = _layernorm(y, lnf_g_ref[...],
                                  lnf_b_ref[...]).reshape(Bb, T, D)


# ----------------------------------------------------------------------------
# VMEM budgeting / block sizing
# ----------------------------------------------------------------------------
def _vmem_budget_bytes():
    try:
        cap = int(pltpu.get_tpu_info().vmem_capacity_bytes)
    except Exception:
        cap = 64 * 2**20                     # conservative (v7x per-TC) fallback
    return max(24 * 2**20, min(int(0.75 * cap), cap - (8 << 20), 112 * 2**20))


def _choose_block_b(B, Tp, D, hidden, n_head, budget):
    # Prefer a single batch tile (weights streamed exactly once); otherwise
    # the largest divisor of B whose estimated VMEM footprint fits the budget.
    def pad8(n):
        return -(-n // 8) * 8

    def pad128(n):
        return -(-n // 128) * 128

    dh = D // n_head
    w_bytes = 2 * (D * 3 * D + D * D + D * hidden + hidden * D)   # bf16 weights / layer
    fixed = 2 * w_bytes + (4 << 20)                               # double-buffered + slack

    def est(bb):
        m = bb * Tp
        act = 4 * bb * Tp * D                                      # f32 act block
        scr = (2 * 3 * n_head * bb * pad8(Tp) * pad128(dh)         # q/k/v bf16
               + 2 * bb * pad8(Tp) * pad128(D))                    # attn bf16
        temps = (4 * m * 3 * D                                     # qkv f32
                 + 4 * n_head * bb * Tp * Tp                       # scores f32
                 + 4 * m * hidden                                  # MLP hidden f32
                 + 8 * 4 * m * D)                                  # assorted f32 temps
        return fixed + 4 * act + scr + temps                       # x + out double-buffered

    best = 1
    for d in range(1, B + 1):
        if B % d == 0 and est(d) <= budget:
            best = d
    return best


# ----------------------------------------------------------------------------
# Wrapper
# ----------------------------------------------------------------------------
def clip_forward(tokens, params, *, n_head):
    tokens = tokens.astype(jnp.int32)          # PyTorch casts to long; int32 on TPU
    B, T = tokens.shape
    V, D = params["tok_emb"].shape
    lyr = params["layers"]
    L = lyr["w_qkv"].shape[0]
    hidden = lyr["w1"].shape[-1]
    assert D % n_head == 0, (D, n_head)

    # ---- pad sequence length to a sublane multiple (8): 77 -> 80 -------------
    Tp = -(-T // 8) * 8
    if Tp != T:
        tokens_p = jnp.pad(tokens, ((0, 0), (0, Tp - T)))
        pos_p = jnp.pad(params["pos_emb"], ((0, Tp - T), (0, 0)))
    else:
        tokens_p, pos_p = tokens, params["pos_emb"]

    # ---- embedding: batched manual row gather --------------------------------
    pos_tiled = jnp.tile(pos_p, (B, 1))        # (B*Tp, D): pos rows aligned with out rows
    n_rows = B * Tp
    rows = 16 if n_rows % 16 == 0 else 8
    x = _embed(tokens_p.reshape(n_rows), params["tok_emb"], pos_tiled, rows=rows)
    x = x.reshape(B, Tp, D)

    # ---- fused transformer stack ---------------------------------------------
    budget = _vmem_budget_bytes()
    block_b = _choose_block_b(B, Tp, D, hidden, n_head, budget)

    weights = (lyr["ln1_g"], lyr["ln1_b"], lyr["w_qkv"], lyr["b_qkv"],
               lyr["w_o"], lyr["b_o"], lyr["ln2_g"], lyr["ln2_b"],
               lyr["w1"], lyr["b1"], lyr["w2"], lyr["b2"])

    def per_layer_spec(a):   # (L, r, c) stacked weights: one layer per grid step
        return pl.BlockSpec((None,) + a.shape[1:], lambda b, l: (l, 0, 0))

    act_spec = pl.BlockSpec((block_b, Tp, D), lambda b, l: (b, 0, 0))
    lnf_spec = pl.BlockSpec((1, D), lambda b, l: (0, 0))
    dh = D // n_head

    # Note: the x input keeps its own (small) double buffer; its cost is
    # included in the block_b budget above.
    kernel = functools.partial(clip_layers_kernel, n_head=n_head, t_real=T)
    out = pl.pallas_call(
        kernel,
        out_shape=jax.ShapeDtypeStruct((B, Tp, D), jnp.float32),
        grid_spec=pltpu.PrefetchScalarGridSpec(
            num_scalar_prefetch=0,
            grid=(B // block_b, L),
            in_specs=[act_spec] + [per_layer_spec(w) for w in weights]
                     + [lnf_spec, lnf_spec],
            out_specs=act_spec,
            scratch_shapes=[
                pltpu.VMEM((n_head, block_b, Tp, dh), jnp.bfloat16),
                pltpu.VMEM((n_head, block_b, Tp, dh), jnp.bfloat16),
                pltpu.VMEM((n_head, block_b, Tp, dh), jnp.bfloat16),
                pltpu.VMEM((block_b, Tp, D), jnp.bfloat16),
            ],
        ),
        compiler_params=pltpu.CompilerParams(
            dimension_semantics=("parallel", "arbitrary"),
            vmem_limit_bytes=int(budget)),
    )(x, *weights, params["ln_f_g"], params["ln_f_b"])

    return out[:, :T, :] if Tp != T else out


# ----------------------------------------------------------------------------
# Pure-JAX reference (same semantics) for a loose numerical self-check
# ----------------------------------------------------------------------------
def clip_reference(tokens, params, *, n_head):
    f32 = jnp.float32
    tok = tokens.astype(jnp.int32)
    x = jnp.take(params["tok_emb"], tok, axis=0) + params["pos_emb"]
    lyr = params["layers"]
    L = lyr["w_qkv"].shape[0]
    B, T, D = x.shape
    dh = D // n_head

    def ln(v, g, b, eps=1e-5):
        mu = v.mean(-1, keepdims=True)
        var = ((v - mu) ** 2).mean(-1, keepdims=True)
        return (v - mu) / jnp.sqrt(var + eps) * g + b

    causal = jnp.triu(jnp.ones((T, T), bool), 1)
    for l in range(L):
        res = x
        h = ln(x, lyr["ln1_g"][l], lyr["ln1_b"][l])
        qkv = h @ lyr["w_qkv"][l].astype(f32) + lyr["b_qkv"][l]
        q, k, v = jnp.split(qkv, 3, axis=-1)
        q = q.reshape(B, T, n_head, dh).transpose(0, 2, 1, 3)
        k = k.reshape(B, T, n_head, dh).transpose(0, 2, 1, 3)
        v = v.reshape(B, T, n_head, dh).transpose(0, 2, 1, 3)
        s = jnp.einsum("bhqd,bhkd->bhqk", q, k)
        s = jnp.where(causal, -jnp.inf, s) / (dh ** 0.5)
        p = jax.nn.softmax(s, axis=-1)
        o = jnp.einsum("bhqk,bhkd->bhqd", p, v).transpose(0, 2, 1, 3).reshape(B, T, D)
        x = o @ lyr["w_o"][l].astype(f32) + lyr["b_o"][l] + res
        res = x
        h = ln(x, lyr["ln2_g"][l], lyr["ln2_b"][l])
        h = h @ lyr["w1"][l].astype(f32) + lyr["b1"][l]
        h = h * jax.nn.sigmoid(1.702 * h)
        x = h @ lyr["w2"][l].astype(f32) + lyr["b2"][l] + res
    return ln(x, params["ln_f_g"], params["ln_f_b"])


# ----------------------------------------------------------------------------
# Deterministic parameter init (shapes follow the PyTorch __init__, scaled down).
# Matmul weights are stored pre-transposed to (in, out) AND in bf16 ONCE here,
# so the forward never re-casts them (no extra HBM round trip per call).
# ----------------------------------------------------------------------------
def init_params(key, *, vocab, n_tokens, d_embed, n_layers):
    ks = jax.random.split(key, 6)

    def normal(k, shape, scale=0.02):
        return scale * jax.random.normal(k, shape, dtype=jnp.float32)

    D, L = d_embed, n_layers
    bf16 = jnp.bfloat16
    return {
        "tok_emb": normal(ks[0], (vocab, D)),
        "pos_emb": normal(ks[1], (n_tokens, D), 0.01),
        "ln_f_g": jnp.ones((1, D), jnp.float32),
        "ln_f_b": jnp.zeros((1, D), jnp.float32),
        "layers": {
            "ln1_g": jnp.ones((L, 1, D), jnp.float32),
            "ln1_b": jnp.zeros((L, 1, D), jnp.float32),
            "w_qkv": normal(ks[2], (L, D, 3 * D)).astype(bf16),
            "b_qkv": jnp.zeros((L, 1, 3 * D), jnp.float32),
            "w_o": normal(ks[3], (L, D, D)).astype(bf16),
            "b_o": jnp.zeros((L, 1, D), jnp.float32),
            "ln2_g": jnp.ones((L, 1, D), jnp.float32),
            "ln2_b": jnp.zeros((L, 1, D), jnp.float32),
            "w1": normal(ks[4], (L, D, 4 * D)).astype(bf16),
            "b1": jnp.zeros((L, 1, 4 * D), jnp.float32),
            "w2": normal(ks[5], (L, 4 * D, D)).astype(bf16),
            "b2": jnp.zeros((L, 1, D), jnp.float32),
        },
    }


if __name__ == "__main__":
    # Small-shape instantiation of CLIP(vocab=49408, d=768, T=77, 12 layers, 12 heads):
    VOCAB, N_TOKENS, D_EMBED, N_HEAD, N_LAYERS = 64, 8, 64, 4, 12
    B = 2

    key = jax.random.PRNGKey(0)
    pkey, tkey = jax.random.split(key)
    params = init_params(pkey, vocab=VOCAB, n_tokens=N_TOKENS,
                         d_embed=D_EMBED, n_layers=N_LAYERS)
    tokens = jax.random.randint(tkey, (B, N_TOKENS), 0, VOCAB, dtype=jnp.int32)

    fwd = jax.jit(functools.partial(clip_forward, n_head=N_HEAD))
    out = jax.block_until_ready(fwd(tokens, params))

    assert out.shape == (B, N_TOKENS, D_EMBED), out.shape
    assert bool(jnp.all(jnp.isfinite(out)))

    # Loose check vs f32 reference (kernel uses bf16 matmuls + approx reciprocal).
    ref = clip_reference(tokens, params, n_head=N_HEAD)
    max_err = float(jnp.max(jnp.abs(out - ref)))
    assert max_err < 0.25, max_err

    print("KERNEL_OK")
</pallas_src>

<mosaic_0001>
module attributes {stable_mosaic.version = 11 : i64} {
  func.func @embed_kernel(%arg0: i32, %arg1: memref<16xi32, #tpu.memory_space<smem>>, %arg2: memref<16x64xf32, #tpu.memory_space<vmem>>, %arg3: memref<64x64xf32, #tpu.memory_space<any>>, %arg4: memref<16x64xf32, #tpu.memory_space<vmem>>, %arg5: memref<16x64xf32, #tpu.memory_space<vmem>>, %arg6: memref<16x!tpu.dma_semaphore, #tpu.memory_space<semaphore_mem>>) attributes {dimension_semantics = [#tpu.dimension_semantics<parallel>], iteration_bounds = array<i64: 1>, scalar_prefetch = 1 : i64, scratch_operands = 2 : i64, tpu.core_type = #tpu.core_type<tc>, window_params = [{transform_indices = @transform_0, window_bounds = array<i64: 16, 64>}, {}, {transform_indices = @transform_2, window_bounds = array<i64: 16, 64>}]} {
    %c16_i32 = arith.constant 16 : i32
    %0 = arith.muli %arg0, %c16_i32 : i32
    %c0_i32 = arith.constant 0 : i32
    %1 = arith.addi %0, %c0_i32 : i32
    %2 = arith.index_cast %1 : i32 to index
    %3 = memref.load %arg1[%2] : memref<16xi32, #tpu.memory_space<smem>>
    %c0_i32_0 = arith.constant 0 : i32
    %c0_i32_1 = arith.constant 0 : i32
    %c0_i32_2 = arith.constant 0 : i32
    %4 = tpu.memref_slice %arg3[%3, %c0_i32_2] : memref<64x64xf32, #tpu.memory_space<any>> -> memref<1x64xf32, #tpu.memory_space<any>>
    %5 = tpu.memref_squeeze %4 : memref<1x64xf32, #tpu.memory_space<any>> -> memref<64xf32, #tpu.memory_space<any>>
    %c0_i32_3 = arith.constant 0 : i32
    %6 = tpu.memref_slice %arg5[%c0_i32_0, %c0_i32_3] : memref<16x64xf32, #tpu.memory_space<vmem>> -> memref<1x64xf32, #tpu.memory_space<vmem>>
    %7 = tpu.memref_squeeze %6 : memref<1x64xf32, #tpu.memory_space<vmem>> -> memref<64xf32, #tpu.memory_space<vmem>>
    %8 = tpu.memref_slice %arg6[%c0_i32_1] : memref<16x!tpu.dma_semaphore, #tpu.memory_space<semaphore_mem>> -> memref<1x!tpu.dma_semaphore, #tpu.memory_space<semaphore_mem>>
    %9 = tpu.memref_squeeze %8 : memref<1x!tpu.dma_semaphore, #tpu.memory_space<semaphore_mem>> -> memref<!tpu.dma_semaphore, #tpu.memory_space<semaphore_mem>>
    tpu.enqueue_dma source(%5 : memref<64xf32, #tpu.memory_space<any>>) target(%7 : memref<64xf32, #tpu.memory_space<vmem>>) target_semaphore(%9 : memref<!tpu.dma_semaphore, #tpu.memory_space<semaphore_mem>>)
    %c1_i32 = arith.constant 1 : i32
    %10 = arith.addi %0, %c1_i32 : i32
    %11 = arith.index_cast %10 : i32 to index
    %12 = memref.load %arg1[%11] : memref<16xi32, #tpu.memory_space<smem>>
    %c1_i32_4 = arith.constant 1 : i32
    %c1_i32_5 = arith.constant 1 : i32
    %c0_i32_6 = arith.constant 0 : i32
    %13 = tpu.memref_slice %arg3[%12, %c0_i32_6] : memref<64x64xf32, #tpu.memory_space<any>> -> memref<1x64xf32, #tpu.memory_space<any>>
    %14 = tpu.memref_squeeze %13 : memref<1x64xf32, #tpu.memory_space<any>> -> memref<64xf32, #tpu.memory_space<any>>
    %c0_i32_7 = arith.constant 0 : i32
    %15 = tpu.memref_slice %arg5[%c1_i32_4, %c0_i32_7] : memref<16x64xf32, #tpu.memory_space<vmem>> -> memref<1x64xf32, #tpu.memory_space<vmem>>
    %16 = tpu.memref_squeeze %15 : memref<1x64xf32, #tpu.memory_space<vmem>> -> memref<64xf32, #tpu.memory_space<vmem>>
    %17 = tpu.memref_slice %arg6[%c1_i32_5] : memref<16x!tpu.dma_semaphore, #tpu.memory_space<semaphore_mem>> -> memref<1x!tpu.dma_semaphore, #tpu.memory_space<semaphore_mem>>
    %18 = tpu.memref_squeeze %17 : memref<1x!tpu.dma_semaphore, #tpu.memory_space<semaphore_mem>> -> memref<!tpu.dma_semaphore, #tpu.memory_space<semaphore_mem>>
    tpu.enqueue_dma source(%14 : memref<64xf32, #tpu.memory_space<any>>) target(%16 : memref<64xf32, #tpu.memory_space<vmem>>) target_semaphore(%18 : memref<!tpu.dma_semaphore, #tpu.memory_space<semaphore_mem>>)
    %c2_i32 = arith.constant 2 : i32
    %19 = arith.addi %0, %c2_i32 : i32
    %20 = arith.index_cast %19 : i32 to index
    %21 = memref.load %arg1[%20] : memref<16xi32, #tpu.memory_space<smem>>
    %c2_i32_8 = arith.constant 2 : i32
    %c2_i32_9 = arith.constant 2 : i32
    %c0_i32_10 = arith.constant 0 : i32
    %22 = tpu.memref_slice %arg3[%21, %c0_i32_10] : memref<64x64xf32, #tpu.memory_space<any>> -> memref<1x64xf32, #tpu.memory_space<any>>
    %23 = tpu.memref_squeeze %22 : memref<1x64xf32, #tpu.memory_space<any>> -> memref<64xf32, #tpu.memory_space<any>>
    %c0_i32_11 = arith.constant 0 : i32
    %24 = tpu.memref_slice %arg5[%c2_i32_8, %c0_i32_11] : memref<16x64xf32, #tpu.memory_space<vmem>> -> memref<1x64xf32, #tpu.memory_space<vmem>>
    %25 = tpu.memref_squeeze %24 : memref<1x64xf32, #tpu.memory_space<vmem>> -> memref<64xf32, #tpu.memory_space<vmem>>
    %26 = tpu.memref_slice %arg6[%c2_i32_9] : memref<16x!tpu.dma_semaphore, #tpu.memory_space<semaphore_mem>> -> memref<1x!tpu.dma_semaphore, #tpu.memory_space<semaphore_mem>>
    %27 = tpu.memref_squeeze %26 : memref<1x!tpu.dma_semaphore, #tpu.memory_space<semaphore_mem>> -> memref<!tpu.dma_semaphore, #tpu.memory_space<semaphore_mem>>
    tpu.enqueue_dma source(%23 : memref<64xf32, #tpu.memory_space<any>>) target(%25 : memref<64xf32, #tpu.memory_space<vmem>>) target_semaphore(%27 : memref<!tpu.dma_semaphore, #tpu.memory_space<semaphore_mem>>)
    %c3_i32 = arith.constant 3 : i32
    %28 = arith.addi %0, %c3_i32 : i32
    %29 = arith.index_cast %28 : i32 to index
    %30 = memref.load %arg1[%29] : memref<16xi32, #tpu.memory_space<smem>>
    %c3_i32_12 = arith.constant 3 : i32
    %c3_i32_13 = arith.constant 3 : i32
    %c0_i32_14 = arith.constant 0 : i32
    %31 = tpu.memref_slice %arg3[%30, %c0_i32_14] : memref<64x64xf32, #tpu.memory_space<any>> -> memref<1x64xf32, #tpu.memory_space<any>>
    %32 = tpu.memref_squeeze %31 : memref<1x64xf32, #tpu.memory_space<any>> -> memref<64xf32, #tpu.memory_space<any>>
    %c0_i32_15 = arith.constant 0 : i32
    %33 = tpu.memref_slice %arg5[%c3_i32_12, %c0_i32_15] : memref<16x64xf32, #tpu.memory_space<vmem>> -> memref<1x64xf32, #tpu.memory_space<vmem>>
    %34 = tpu.memref_squeeze %33 : memref<1x64xf32, #tpu.memory_space<vmem>> -> memref<64xf32, #tpu.memory_space<vmem>>
    %35 = tpu.memref_slice %arg6[%c3_i32_13] : memref<16x!tpu.dma_semaphore, #tpu.memory_space<semaphore_mem>> -> memref<1x!tpu.dma_semaphore, #tpu.memory_space<semaphore_mem>>
    %36 = tpu.memref_squeeze %35 : memref<1x!tpu.dma_semaphore, #tpu.memory_space<semaphore_mem>> -> memref<!tpu.dma_semaphore, #tpu.memory_space<semaphore_mem>>
    tpu.enqueue_dma source(%32 : memref<64xf32, #tpu.memory_space<any>>) target(%34 : memref<64xf32, #tpu.memory_space<vmem>>) target_semaphore(%36 : memref<!tpu.dma_semaphore, #tpu.memory_space<semaphore_mem>>)
    %c4_i32 = arith.constant 4 : i32
    %37 = arith.addi %0, %c4_i32 : i32
    %38 = arith.index_cast %37 : i32 to index
    %39 = memref.load %arg1[%38] : memref<16xi32, #tpu.memory_space<smem>>
    %c4_i32_16 = arith.constant 4 : i32
    %c4_i32_17 = arith.constant 4 : i32
    %c0_i32_18 = arith.constant 0 : i32
    %40 = tpu.memref_slice %arg3[%39, %c0_i32_18] : memref<64x64xf32, #tpu.memory_space<any>> -> memref<1x64xf32, #tpu.memory_space<any>>
    %41 = tpu.memref_squeeze %40 : memref<1x64xf32, #tpu.memory_space<any>> -> memref<64xf32, #tpu.memory_space<any>>
    %c0_i32_19 = arith.constant 0 : i32
    %42 = tpu.memref_slice %arg5[%c4_i32_16, %c0_i32_19] : memref<16x64xf32, #tpu.memory_space<vmem>> -> memref<1x64xf32, #tpu.memory_space<vmem>>
    %43 = tpu.memref_squeeze %42 : memref<1x64xf32, #tpu.memory_space<vmem>> -> memref<64xf32, #tpu.memory_space<vmem>>
    %44 = tpu.memref_slice %arg6[%c4_i32_17] : memref<16x!tpu.dma_semaphore, #tpu.memory_space<semaphore_mem>> -> memref<1x!tpu.dma_semaphore, #tpu.memory_space<semaphore_mem>>
    %45 = tpu.memref_squeeze %44 : memref<1x!tpu.dma_semaphore, #tpu.memory_space<semaphore_mem>> -> memref<!tpu.dma_semaphore, #tpu.memory_space<semaphore_mem>>
    tpu.enqueue_dma source(%41 : memref<64xf32, #tpu.memory_space<any>>) target(%43 : memref<64xf32, #tpu.memory_space<vmem>>) target_semaphore(%45 : memref<!tpu.dma_semaphore, #tpu.memory_space<semaphore_mem>>)
    %c5_i32 = arith.constant 5 : i32
    %46 = arith.addi %0, %c5_i32 : i32
    %47 = arith.index_cast %46 : i32 to index
    %48 = memref.load %arg1[%47] : memref<16xi32, #tpu.memory_space<smem>>
    %c5_i32_20 = arith.constant 5 : i32
    %c5_i32_21 = arith.constant 5 : i32
    %c0_i32_22 = arith.constant 0 : i32
    %49 = tpu.memref_slice %arg3[%48, %c0_i32_22] : memref<64x64xf32, #tpu.memory_space<any>> -> memref<1x64xf32, #tpu.memory_space<any>>
    %50 = tpu.memref_squeeze %49 : memref<1x64xf32, #tpu.memory_space<any>> -> memref<64xf32, #tpu.memory_space<any>>
    %c0_i32_23 = arith.constant 0 : i32
    %51 = tpu.memref_slice %arg5[%c5_i32_20, %c0_i32_23] : memref<16x64xf32, #tpu.memory_space<vmem>> -> memref<1x64xf32, #tpu.memory_space<vmem>>
    %52 = tpu.memref_squeeze %51 : memref<1x64xf32, #tpu.memory_space<vmem>> -> memref<64xf32, #tpu.memory_space<vmem>>
    %53 = tpu.memref_slice %arg6[%c5_i32_21] : memref<16x!tpu.dma_semaphore, #tpu.memory_space<semaphore_mem>> -> memref<1x!tpu.dma_semaphore, #tpu.memory_space<semaphore_mem>>
    %54 = tpu.memref_squeeze %53 : memref<1x!tpu.dma_semaphore, #tpu.memory_space<semaphore_mem>> -> memref<!tpu.dma_semaphore, #tpu.memory_space<semaphore_mem>>
    tpu.enqueue_dma source(%50 : memref<64xf32, #tpu.memory_space<any>>) target(%52 : memref<64xf32, #tpu.memory_space<vmem>>) target_semaphore(%54 : memref<!tpu.dma_semaphore, #tpu.memory_space<semaphore_mem>>)
    %c6_i32 = arith.constant 6 : i32
    %55 = arith.addi %0, %c6_i32 : i32
    %56 = arith.index_cast %55 : i32 to index
    %57 = memref.load %arg1[%56] : memref<16xi32, #tpu.memory_space<smem>>
    %c6_i32_24 = arith.constant 6 : i32
    %c6_i32_25 = arith.constant 6 : i32
    %c0_i32_26 = arith.constant 0 : i32
    %58 = tpu.memref_slice %arg3[%57, %c0_i32_26] : memref<64x64xf32, #tpu.memory_space<any>> -> memref<1x64xf32, #tpu.memory_space<any>>
    %59 = tpu.memref_squeeze %58 : memref<1x64xf32, #tpu.memory_space<any>> -> memref<64xf32, #tpu.memory_space<any>>
    %c0_i32_27 = arith.constant 0 : i32
    %60 = tpu.memref_slice %arg5[%c6_i32_24, %c0_i32_27] : memref<16x64xf32, #tpu.memory_space<vmem>> -> memref<1x64xf32, #tpu.memory_space<vmem>>
    %61 = tpu.memref_squeeze %60 : memref<1x64xf32, #tpu.memory_space<vmem>> -> memref<64xf32, #tpu.memory_space<vmem>>
    %62 = tpu.memref_slice %arg6[%c6_i32_25] : memref<16x!tpu.dma_semaphore, #tpu.memory_space<semaphore_mem>> -> memref<1x!tpu.dma_semaphore, #tpu.memory_space<semaphore_mem>>
    %63 = tpu.memref_squeeze %62 : memref<1x!tpu.dma_semaphore, #tpu.memory_space<semaphore_mem>> -> memref<!tpu.dma_semaphore, #tpu.memory_space<semaphore_mem>>
    tpu.enqueue_dma source(%59 : memref<64xf32, #tpu.memory_space<any>>) target(%61 : memref<64xf32, #tpu.memory_space<vmem>>) target_semaphore(%63 : memref<!tpu.dma_semaphore, #tpu.memory_space<semaphore_mem>>)
    %c7_i32 = arith.constant 7 : i32
    %64 = arith.addi %0, %c7_i32 : i32
    %65 = arith.index_cast %64 : i32 to index
    %66 = memref.load %arg1[%65] : memref<16xi32, #tpu.memory_space<smem>>
    %c7_i32_28 = arith.constant 7 : i32
    %c7_i32_29 = arith.constant 7 : i32
    %c0_i32_30 = arith.constant 0 : i32
    %67 = tpu.memref_slice %arg3[%66, %c0_i32_30] : memref<64x64xf32, #tpu.memory_space<any>> -> memref<1x64xf32, #tpu.memory_space<any>>
    %68 = tpu.memref_squeeze %67 : memref<1x64xf32, #tpu.memory_space<any>> -> memref<64xf32, #tpu.memory_space<any>>
    %c0_i32_31 = arith.constant 0 : i32
    %69 = tpu.memref_slice %arg5[%c7_i32_28, %c0_i32_31] : memref<16x64xf32, #tpu.memory_space<vmem>> -> memref<1x64xf32, #tpu.memory_space<vmem>>
    %70 = tpu.memref_squeeze %69 : memref<1x64xf32, #tpu.memory_space<vmem>> -> memref<64xf32, #tpu.memory_space<vmem>>
    %71 = tpu.memref_slice %arg6[%c7_i32_29] : memref<16x!tpu.dma_semaphore, #tpu.memory_space<semaphore_mem>> -> memref<1x!tpu.dma_semaphore, #tpu.memory_space<semaphore_mem>>
    %72 = tpu.memref_squeeze %71 : memref<1x!tpu.dma_semaphore, #tpu.memory_space<semaphore_mem>> -> memref<!tpu.dma_semaphore, #tpu.memory_space<semaphore_mem>>
    tpu.enqueue_dma source(%68 : memref<64xf32, #tpu.memory_space<any>>) target(%70 : memref<64xf32, #tpu.memory_space<vmem>>) target_semaphore(%72 : memref<!tpu.dma_semaphore, #tpu.memory_space<semaphore_mem>>)
    %c8_i32 = arith.constant 8 : i32
    %73 = arith.addi %0, %c8_i32 : i32
    %74 = arith.index_cast %73 : i32 to index
    %75 = memref.load %arg1[%74] : memref<16xi32, #tpu.memory_space<smem>>
    %c8_i32_32 = arith.constant 8 : i32
    %c8_i32_33 = arith.constant 8 : i32
    %c0_i32_34 = arith.constant 0 : i32
    %76 = tpu.memref_slice %arg3[%75, %c0_i32_34] : memref<64x64xf32, #tpu.memory_space<any>> -> memref<1x64xf32, #tpu.memory_space<any>>
    %77 = tpu.memref_squeeze %76 : memref<1x64xf32, #tpu.memory_space<any>> -> memref<64xf32, #tpu.memory_space<any>>
    %c0_i32_35 = arith.constant 0 : i32
    %78 = tpu.memref_slice %arg5[%c8_i32_32, %c0_i32_35] : memref<16x64xf32, #tpu.memory_space<vmem>> -> memref<1x64xf32, #tpu.memory_space<vmem>>
    %79 = tpu.memref_squeeze %78 : memref<1x64xf32, #tpu.memory_space<vmem>> -> memref<64xf32, #tpu.memory_space<vmem>>
    %80 = tpu.memref_slice %arg6[%c8_i32_33] : memref<16x!tpu.dma_semaphore, #tpu.memory_space<semaphore_mem>> -> memref<1x!tpu.dma_semaphore, #tpu.memory_space<semaphore_mem>>
    %81 = tpu.memref_squeeze %80 : memref<1x!tpu.dma_semaphore, #tpu.memory_space<semaphore_mem>> -> memref<!tpu.dma_semaphore, #tpu.memory_space<semaphore_mem>>
    tpu.enqueue_dma source(%77 : memref<64xf32, #tpu.memory_space<any>>) target(%79 : memref<64xf32, #tpu.memory_space<vmem>>) target_semaphore(%81 : memref<!tpu.dma_semaphore, #tpu.memory_space<semaphore_mem>>)
    %c9_i32 = arith.constant 9 : i32
    %82 = arith.addi %0, %c9_i32 : i32
    %83 = arith.index_cast %82 : i32 to index
    %84 = memref.load %arg1[%83] : memref<16xi32, #tpu.memory_space<smem>>
    %c9_i32_36 = arith.constant 9 : i32
    %c9_i32_37 = arith.constant 9 : i32
    %c0_i32_38 = arith.constant 0 : i32
    %85 = tpu.memref_slice %arg3[%84, %c0_i32_38] : memref<64x64xf32, #tpu.memory_space<any>> -> memref<1x64xf32, #tpu.memory_space<any>>
    %86 = tpu.memref_squeeze %85 : memref<1x64xf32, #tpu.memory_space<any>> -> memref<64xf32, #tpu.memory_space<any>>
    %c0_i32_39 = arith.constant 0 : i32
    %87 = tpu.memref_slice %arg5[%c9_i32_36, %c0_i32_39] : memref<16x64xf32, #tpu.memory_space<vmem>> -> memref<1x64xf32, #tpu.memory_space<vmem>>
    %88 = tpu.memref_squeeze %87 : memref<1x64xf32, #tpu.memory_space<vmem>> -> memref<64xf32, #tpu.memory_space<vmem>>
    %89 = tpu.memref_slice %arg6[%c9_i32_37] : memref<16x!tpu.dma_semaphore, #tpu.memory_space<semaphore_mem>> -> memref<1x!tpu.dma_semaphore, #tpu.memory_space<semaphore_mem>>
    %90 = tpu.memref_squeeze %89 : memref<1x!tpu.dma_semaphore, #tpu.memory_space<semaphore_mem>> -> memref<!tpu.dma_semaphore, #tpu.memory_space<semaphore_mem>>
    tpu.enqueue_dma source(%86 : memref<64xf32, #tpu.memory_space<any>>) target(%88 : memref<64xf32, #tpu.memory_space<vmem>>) target_semaphore(%90 : memref<!tpu.dma_semaphore, #tpu.memory_space<semaphore_mem>>)
    %c10_i32 = arith.constant 10 : i32
    %91 = arith.addi %0, %c10_i32 : i32
    %92 = arith.index_cast %91 : i32 to index
    %93 = memref.load %arg1[%92] : memref<16xi32, #tpu.memory_space<smem>>
    %c10_i32_40 = arith.constant 10 : i32
    %c10_i32_41 = arith.constant 10 : i32
    %c0_i32_42 = arith.constant 0 : i32
    %94 = tpu.memref_slice %arg3[%93, %c0_i32_42] : memref<64x64xf32, #tpu.memory_space<any>> -> memref<1x64xf32, #tpu.memory_space<any>>
    %95 = tpu.memref_squeeze %94 : memref<1x64xf32, #tpu.memory_space<any>> -> memref<64xf32, #tpu.memory_space<any>>
    %c0_i32_43 = arith.constant 0 : i32
    %96 = tpu.memref_slice %arg5[%c10_i32_40, %c0_i32_43] : memref<16x64xf32, #tpu.memory_space<vmem>> -> memref<1x64xf32, #tpu.memory_space<vmem>>
    %97 = tpu.memref_squeeze %96 : memref<1x64xf32, #tpu.memory_space<vmem>> -> memref<64xf32, #tpu.memory_space<vmem>>
    %98 = tpu.memref_slice %arg6[%c10_i32_41] : memref<16x!tpu.dma_semaphore, #tpu.memory_space<semaphore_mem>> -> memref<1x!tpu.dma_semaphore, #tpu.memory_space<semaphore_mem>>
    %99 = tpu.memref_squeeze %98 : memref<1x!tpu.dma_semaphore, #tpu.memory_space<semaphore_mem>> -> memref<!tpu.dma_semaphore, #tpu.memory_space<semaphore_mem>>
    tpu.enqueue_dma source(%95 : memref<64xf32, #tpu.memory_space<any>>) target(%97 : memref<64xf32, #tpu.memory_space<vmem>>) target_semaphore(%99 : memref<!tpu.dma_semaphore, #tpu.memory_space<semaphore_mem>>)
    %c11_i32 = arith.constant 11 : i32
    %100 = arith.addi %0, %c11_i32 : i32
    %101 = arith.index_cast %100 : i32 to index
    %102 = memref.load %arg1[%101] : memref<16xi32, #tpu.memory_space<smem>>
    %c11_i32_44 = arith.constant 11 : i32
    %c11_i32_45 = arith.constant 11 : i32
    %c0_i32_46 = arith.constant 0 : i32
    %103 = tpu.memref_slice %arg3[%102, %c0_i32_46] : memref<64x64xf32, #tpu.memory_space<any>> -> memref<1x64xf32, #tpu.memory_space<any>>
    %104 = tpu.memref_squeeze %103 : memref<1x64xf32, #tpu.memory_space<any>> -> memref<64xf32, #tpu.memory_space<any>>
    %c0_i32_47 = arith.constant 0 : i32
    %105 = tpu.memref_slice %arg5[%c11_i32_44, %c0_i32_47] : memref<16x64xf32, #tpu.memory_space<vmem>> -> memref<1x64xf32, #tpu.memory_space<vmem>>
    %106 = tpu.memref_squeeze %105 : memref<1x64xf32, #tpu.memory_space<vmem>> -> memref<64xf32, #tpu.memory_space<vmem>>
    %107 = tpu.memref_slice %arg6[%c11_i32_45] : memref<16x!tpu.dma_semaphore, #tpu.memory_space<semaphore_mem>> -> memref<1x!tpu.dma_semaphore, #tpu.memory_space<semaphore_mem>>
    %108 = tpu.memref_squeeze %107 : memref<1x!tpu.dma_semaphore, #tpu.memory_space<semaphore_mem>> -> memref<!tpu.dma_semaphore, #tpu.memory_space<semaphore_mem>>
    tpu.enqueue_dma source(%104 : memref<64xf32, #tpu.memory_space<any>>) target(%106 : memref<64xf32, #tpu.memory_space<vmem>>) target_semaphore(%108 : memref<!tpu.dma_semaphore, #tpu.memory_space<semaphore_mem>>)
    %c12_i32 = arith.constant 12 : i32
    %109 = arith.addi %0, %c12_i32 : i32
    %110 = arith.index_cast %109 : i32 to index
    %111 = memref.load %arg1[%110] : memref<16xi32, #tpu.memory_space<smem>>
    %c12_i32_48 = arith.constant 12 : i32
    %c12_i32_49 = arith.constant 12 : i32
    %c0_i32_50 = arith.constant 0 : i32
    %112 = tpu.memref_slice %arg3[%111, %c0_i32_50] : memref<64x64xf32, #tpu.memory_space<any>> -> memref<1x64xf32, #tpu.memory_space<any>>
    %113 = tpu.memref_squeeze %112 : memref<1x64xf32, #tpu.memory_space<any>> -> memref<64xf32, #tpu.memory_space<any>>
    %c0_i32_51 = arith.constant 0 : i32
    %114 = tpu.memref_slice %arg5[%c12_i32_48, %c0_i32_51] : memref<16x64xf32, #tpu.memory_space<vmem>> -> memref<1x64xf32, #tpu.memory_space<vmem>>
    %115 = tpu.memref_squeeze %114 : memref<1x64xf32, #tpu.memory_space<vmem>> -> memref<64xf32, #tpu.memory_space<vmem>>
    %116 = tpu.memref_slice %arg6[%c12_i32_49] : memref<16x!tpu.dma_semaphore, #tpu.memory_space<semaphore_mem>> -> memref<1x!tpu.dma_semaphore, #tpu.memory_space<semaphore_mem>>
    %117 = tpu.memref_squeeze %116 : memref<1x!tpu.dma_semaphore, #tpu.memory_space<semaphore_mem>> -> memref<!tpu.dma_semaphore, #tpu.memory_space<semaphore_mem>>
    tpu.enqueue_dma source(%113 : memref<64xf32, #tpu.memory_space<any>>) target(%115 : memref<64xf32, #tpu.memory_space<vmem>>) target_semaphore(%117 : memref<!tpu.dma_semaphore, #tpu.memory_space<semaphore_mem>>)
    %c13_i32 = arith.constant 13 : i32
    %118 = arith.addi %0, %c13_i32 : i32
    %119 = arith.index_cast %118 : i32 to index
    %120 = memref.load %arg1[%119] : memref<16xi32, #tpu.memory_space<smem>>
    %c13_i32_52 = arith.constant 13 : i32
    %c13_i32_53 = arith.constant 13 : i32
    %c0_i32_54 = arith.constant 0 : i32
    %121 = tpu.memref_slice %arg3[%120, %c0_i32_54] : memref<64x64xf32, #tpu.memory_space<any>> -> memref<1x64xf32, #tpu.memory_space<any>>
    %122 = tpu.memref_squeeze %121 : memref<1x64xf32, #tpu.memory_space<any>> -> memref<64xf32, #tpu.memory_space<any>>
    %c0_i32_55 = arith.constant 0 : i32
    %123 = tpu.memref_slice %arg5[%c13_i32_52, %c0_i32_55] : memref<16x64xf32, #tpu.memory_space<vmem>> -> memref<1x64xf32, #tpu.memory_space<vmem>>
    %124 = tpu.memref_squeeze %123 : memref<1x64xf32, #tpu.memory_space<vmem>> -> memref<64xf32, #tpu.memory_space<vmem>>
    %125 = tpu.memref_slice %arg6[%c13_i32_53] : memref<16x!tpu.dma_semaphore, #tpu.memory_space<semaphore_mem>> -> memref<1x!tpu.dma_semaphore, #tpu.memory_space<semaphore_mem>>
    %126 = tpu.memref_squeeze %125 : memref<1x!tpu.dma_semaphore, #tpu.memory_space<semaphore_mem>> -> memref<!tpu.dma_semaphore, #tpu.memory_space<semaphore_mem>>
    tpu.enqueue_dma source(%122 : memref<64xf32, #tpu.memory_space<any>>) target(%124 : memref<64xf32, #tpu.memory_space<vmem>>) target_semaphore(%126 : memref<!tpu.dma_semaphore, #tpu.memory_space<semaphore_mem>>)
    %c14_i32 = arith.constant 14 : i32
    %127 = arith.addi %0, %c14_i32 : i32
    %128 = arith.index_cast %127 : i32 to index
    %129 = memref.load %arg1[%128] : memref<16xi32, #tpu.memory_space<smem>>
    %c14_i32_56 = arith.constant 14 : i32
    %c14_i32_57 = arith.constant 14 : i32
    %c0_i32_58 = arith.constant 0 : i32
    %130 = tpu.memref_slice %arg3[%129, %c0_i32_58] : memref<64x64xf32, #tpu.memory_space<any>> -> memref<1x64xf32, #tpu.memory_space<any>>
    %131 = tpu.memref_squeeze %130 : memref<1x64xf32, #tpu.memory_space<any>> -> memref<64xf32, #tpu.memory_space<any>>
    %c0_i32_59 = arith.constant 0 : i32
    %132 = tpu.memref_slice %arg5[%c14_i32_56, %c0_i32_59] : memref<16x64xf32, #tpu.memory_space<vmem>> -> memref<1x64xf32, #tpu.memory_space<vmem>>
    %133 = tpu.memref_squeeze %132 : memref<1x64xf32, #tpu.memory_space<vmem>> -> memref<64xf32, #tpu.memory_space<vmem>>
    %134 = tpu.memref_slice %arg6[%c14_i32_57] : memref<16x!tpu.dma_semaphore, #tpu.memory_space<semaphore_mem>> -> memref<1x!tpu.dma_semaphore, #tpu.memory_space<semaphore_mem>>
    %135 = tpu.memref_squeeze %134 : memref<1x!tpu.dma_semaphore, #tpu.memory_space<semaphore_mem>> -> memref<!tpu.dma_semaphore, #tpu.memory_space<semaphore_mem>>
    tpu.enqueue_dma source(%131 : memref<64xf32, #tpu.memory_space<any>>) target(%133 : memref<64xf32, #tpu.memory_space<vmem>>) target_semaphore(%135 : memref<!tpu.dma_semaphore, #tpu.memory_space<semaphore_mem>>)
    %c15_i32 = arith.constant 15 : i32
    %136 = arith.addi %0, %c15_i32 : i32
    %137 = arith.index_cast %136 : i32 to index
    %138 = memref.load %arg1[%137] : memref<16xi32, #tpu.memory_space<smem>>
    %c15_i32_60 = arith.constant 15 : i32
    %c15_i32_61 = arith.constant 15 : i32
    %c0_i32_62 = arith.constant 0 : i32
    %139 = tpu.memref_slice %arg3[%138, %c0_i32_62] : memref<64x64xf32, #tpu.memory_space<any>> -> memref<1x64xf32, #tpu.memory_space<any>>
    %140 = tpu.memref_squeeze %139 : memref<1x64xf32, #tpu.memory_space<any>> -> memref<64xf32, #tpu.memory_space<any>>
    %c0_i32_63 = arith.constant 0 : i32
    %141 = tpu.memref_slice %arg5[%c15_i32_60, %c0_i32_63] : memref<16x64xf32, #tpu.memory_space<vmem>> -> memref<1x64xf32, #tpu.memory_space<vmem>>
    %142 = tpu.memref_squeeze %141 : memref<1x64xf32, #tpu.memory_space<vmem>> -> memref<64xf32, #tpu.memory_space<vmem>>
    %143 = tpu.memref_slice %arg6[%c15_i32_61] : memref<16x!tpu.dma_semaphore, #tpu.memory_space<semaphore_mem>> -> memref<1x!tpu.dma_semaphore, #tpu.memory_space<semaphore_mem>>
    %144 = tpu.memref_squeeze %143 : memref<1x!tpu.dma_semaphore, #tpu.memory_space<semaphore_mem>> -> memref<!tpu.dma_semaphore, #tpu.memory_space<semaphore_mem>>
    tpu.enqueue_dma source(%140 : memref<64xf32, #tpu.memory_space<any>>) target(%142 : memref<64xf32, #tpu.memory_space<vmem>>) target_semaphore(%144 : memref<!tpu.dma_semaphore, #tpu.memory_space<semaphore_mem>>)
    %c0_i32_64 = arith.constant 0 : i32
    %c0_i32_65 = arith.constant 0 : i32
    %c0_i32_66 = arith.constant 0 : i32
    %145 = tpu.memref_slice %arg3[%3, %c0_i32_66] : memref<64x64xf32, #tpu.memory_space<any>> -> memref<1x64xf32, #tpu.memory_space<any>>
    %146 = tpu.memref_squeeze %145 : memref<1x64xf32, #tpu.memory_space<any>> -> memref<64xf32, #tpu.memory_space<any>>
    %c0_i32_67 = arith.constant 0 : i32
    %147 = tpu.memref_slice %arg5[%c0_i32_64, %c0_i32_67] : memref<16x64xf32, #tpu.memory_space<vmem>> -> memref<1x64xf32, #tpu.memory_space<vmem>>
    %148 = tpu.memref_squeeze %147 : memref<1x64xf32, #tpu.memory_space<vmem>> -> memref<64xf32, #tpu.memory_space<vmem>>
    %149 = tpu.memref_slice %arg6[%c0_i32_65] : memref<16x!tpu.dma_semaphore, #tpu.memory_space<semaphore_mem>> -> memref<1x!tpu.dma_semaphore, #tpu.memory_space<semaphore_mem>>
    %150 = tpu.memref_squeeze %149 : memref<1x!tpu.dma_semaphore, #tpu.memory_space<semaphore_mem>> -> memref<!tpu.dma_semaphore, #tpu.memory_space<semaphore_mem>>
    tpu.wait_dma2 semaphore(%150 : memref<!tpu.dma_semaphore, #tpu.memory_space<semaphore_mem>>) src(%146 : memref<64xf32, #tpu.memory_space<any>>) dst(%148 : memref<64xf32, #tpu.memory_space<vmem>>)
    %c1_i32_68 = arith.constant 1 : i32
    %c1_i32_69 = arith.constant 1 : i32
    %c0_i32_70 = arith.constant 0 : i32
    %151 = tpu.memref_slice %arg3[%12, %c0_i32_70] : memref<64x64xf32, #tpu.memory_space<any>> -> memref<1x64xf32, #tpu.memory_space<any>>
    %152 = tpu.memref_squeeze %151 : memref<1x64xf32, #tpu.memory_space<any>> -> memref<64xf32, #tpu.memory_space<any>>
    %c0_i32_71 = arith.constant 0 : i32
    %153 = tpu.memref_slice %arg5[%c1_i32_68, %c0_i32_71] : memref<16x64xf32, #tpu.memory_space<vmem>> -> memref<1x64xf32, #tpu.memory_space<vmem>>
    %154 = tpu.memref_squeeze %153 : memref<1x64xf32, #tpu.memory_space<vmem>> -> memref<64xf32, #tpu.memory_space<vmem>>
    %155 = tpu.memref_slice %arg6[%c1_i32_69] : memref<16x!tpu.dma_semaphore, #tpu.memory_space<semaphore_mem>> -> memref<1x!tpu.dma_semaphore, #tpu.memory_space<semaphore_mem>>
    %156 = tpu.memref_squeeze %155 : memref<1x!tpu.dma_semaphore, #tpu.memory_space<semaphore_mem>> -> memref<!tpu.dma_semaphore, #tpu.memory_space<semaphore_mem>>
    tpu.wait_dma2 semaphore(%156 : memref<!tpu.dma_semaphore, #tpu.memory_space<semaphore_mem>>) src(%152 : memref<64xf32, #tpu.memory_space<any>>) dst(%154 : memref<64xf32, #tpu.memory_space<vmem>>)
    %c2_i32_72 = arith.constant 2 : i32
    %c2_i32_73 = arith.constant 2 : i32
    %c0_i32_74 = arith.constant 0 : i32
    %157 = tpu.memref_slice %arg3[%21, %c0_i32_74] : memref<64x64xf32, #tpu.memory_space<any>> -> memref<1x64xf32, #tpu.memory_space<any>>
    %158 = tpu.memref_squeeze %157 : memref<1x64xf32, #tpu.memory_space<any>> -> memref<64xf32, #tpu.memory_space<any>>
    %c0_i32_75 = arith.constant 0 : i32
    %159 = tpu.memref_slice %arg5[%c2_i32_72, %c0_i32_75] : memref<16x64xf32, #tpu.memory_space<vmem>> -> memref<1x64xf32, #tpu.memory_space<vmem>>
    %160 = tpu.memref_squeeze %159 : memref<1x64xf32, #tpu.memory_space<vmem>> -> memref<64xf32, #tpu.memory_space<vmem>>
    %161 = tpu.memref_slice %arg6[%c2_i32_73] : memref<16x!tpu.dma_semaphore, #tpu.memory_space<semaphore_mem>> -> memref<1x!tpu.dma_semaphore, #tpu.memory_space<semaphore_mem>>
    %162 = tpu.memref_squeeze %161 : memref<1x!tpu.dma_semaphore, #tpu.memory_space<semaphore_mem>> -> memref<!tpu.dma_semaphore, #tpu.memory_space<semaphore_mem>>
    tpu.wait_dma2 semaphore(%162 : memref<!tpu.dma_semaphore, #tpu.memory_space<semaphore_mem>>) src(%158 : memref<64xf32, #tpu.memory_space<any>>) dst(%160 : memref<64xf32, #tpu.memory_space<vmem>>)
    %c3_i32_76 = arith.constant 3 : i32
    %c3_i32_77 = arith.constant 3 : i32
    %c0_i32_78 = arith.constant 0 : i32
    %163 = tpu.memref_slice %arg3[%30, %c0_i32_78] : memref<64x64xf32, #tpu.memory_space<any>> -> memref<1x64xf32, #tpu.memory_space<any>>
    %164 = tpu.memref_squeeze %163 : memref<1x64xf32, #tpu.memory_space<any>> -> memref<64xf32, #tpu.memory_space<any>>
    %c0_i32_79 = arith.constant 0 : i32
    %165 = tpu.memref_slice %arg5[%c3_i32_76, %c0_i32_79] : memref<16x64xf32, #tpu.memory_space<vmem>> -> memref<1x64xf32, #tpu.memory_space<vmem>>
    %166 = tpu.memref_squeeze %165 : memref<1x64xf32, #tpu.memory_space<vmem>> -> memref<64xf32, #tpu.memory_space<vmem>>
    %167 = tpu.memref_slice %arg6[%c3_i32_77] : memref<16x!tpu.dma_semaphore, #tpu.memory_space<semaphore_mem>> -> memref<1x!tpu.dma_semaphore, #tpu.memory_space<semaphore_mem>>
    %168 = tpu.memref_squeeze %167 : memref<1x!tpu.dma_semaphore, #tpu.memory_space<semaphore_mem>> -> memref<!tpu.dma_semaphore, #tpu.memory_space<semaphore_mem>>
    tpu.wait_dma2 semaphore(%168 : memref<!tpu.dma_semaphore, #tpu.memory_space<semaphore_mem>>) src(%164 : memref<64xf32, #tpu.memory_space<any>>) dst(%166 : memref<64xf32, #tpu.memory_space<vmem>>)
    %c4_i32_80 = arith.constant 4 : i32
    %c4_i32_81 = arith.constant 4 : i32
    %c0_i32_82 = arith.constant 0 : i32
    %169 = tpu.memref_slice %arg3[%39, %c0_i32_82] : memref<64x64xf32, #tpu.memory_space<any>> -> memref<1x64xf32, #tpu.memory_space<any>>
    %170 = tpu.memref_squeeze %169 : memref<1x64xf32, #tpu.memory_space<any>> -> memref<64xf32, #tpu.memory_space<any>>
    %c0_i32_83 = arith.constant 0 : i32
    %171 = tpu.memref_slice %arg5[%c4_i32_80, %c0_i32_83] : memref<16x64xf32, #tpu.memory_space<vmem>> -> memref<1x64xf32, #tpu.memory_space<vmem>>
    %172 = tpu.memref_squeeze %171 : memref<1x64xf32, #tpu.memory_space<vmem>> -> memref<64xf32, #tpu.memory_space<vmem>>
    %173 = tpu.memref_slice %arg6[%c4_i32_81] : memref<16x!tpu.dma_semaphore, #tpu.memory_space<semaphore_mem>> -> memref<1x!tpu.dma_semaphore, #tpu.memory_space<semaphore_mem>>
    %174 = tpu.memref_squeeze %173 : memref<1x!tpu.dma_semaphore, #tpu.memory_space<semaphore_mem>> -> memref<!tpu.dma_semaphore, #tpu.memory_space<semaphore_mem>>
    tpu.wait_dma2 semaphore(%174 : memref<!tpu.dma_semaphore, #tpu.memory_space<semaphore_mem>>) src(%170 : memref<64xf32, #tpu.memory_space<any>>) dst(%172 : memref<64xf32, #tpu.memory_space<vmem>>)
    %c5_i32_84 = arith.constant 5 : i32
    %c5_i32_85 = arith.constant 5 : i32
    %c0_i32_86 = arith.constant 0 : i32
    %175 = tpu.memref_slice %arg3[%48, %c0_i32_86] : memref<64x64xf32, #tpu.memory_space<any>> -> memref<1x64xf32, #tpu.memory_space<any>>
    %176 = tpu.memref_squeeze %175 : memref<1x64xf32, #tpu.memory_space<any>> -> memref<64xf32, #tpu.memory_space<any>>
    %c0_i32_87 = arith.constant 0 : i32
    %177 = tpu.memref_slice %arg5[%c5_i32_84, %c0_i32_87] : memref<16x64xf32, #tpu.memory_space<vmem>> -> memref<1x64xf32, #tpu.memory_space<vmem>>
    %178 = tpu.memref_squeeze %177 : memref<1x64xf32, #tpu.memory_space<vmem>> -> memref<64xf32, #tpu.memory_space<vmem>>
    %179 = tpu.memref_slice %arg6[%c5_i32_85] : memref<16x!tpu.dma_semaphore, #tpu.memory_space<semaphore_mem>> -> memref<1x!tpu.dma_semaphore, #tpu.memory_space<semaphore_mem>>
    %180 = tpu.memref_squeeze %179 : memref<1x!tpu.dma_semaphore, #tpu.memory_space<semaphore_mem>> -> memref<!tpu.dma_semaphore, #tpu.memory_space<semaphore_mem>>
    tpu.wait_dma2 semaphore(%180 : memref<!tpu.dma_semaphore, #tpu.memory_space<semaphore_mem>>) src(%176 : memref<64xf32, #tpu.memory_space<any>>) dst(%178 : memref<64xf32, #tpu.memory_space<vmem>>)
    %c6_i32_88 = arith.constant 6 : i32
    %c6_i32_89 = arith.constant 6 : i32
    %c0_i32_90 = arith.constant 0 : i32
    %181 = tpu.memref_slice %arg3[%57, %c0_i32_90] : memref<64x64xf32, #tpu.memory_space<any>> -> memref<1x64xf32, #tpu.memory_space<any>>
    %182 = tpu.memref_squeeze %181 : memref<1x64xf32, #tpu.memory_space<any>> -> memref<64xf32, #tpu.memory_space<any>>
    %c0_i32_91 = arith.constant 0 : i32
    %183 = tpu.memref_slice %arg5[%c6_i32_88, %c0_i32_91] : memref<16x64xf32, #tpu.memory_space<vmem>> -> memref<1x64xf32, #tpu.memory_space<vmem>>
    %184 = tpu.memref_squeeze %183 : memref<1x64xf32, #tpu.memory_space<vmem>> -> memref<64xf32, #tpu.memory_space<vmem>>
    %185 = tpu.memref_slice %arg6[%c6_i32_89] : memref<16x!tpu.dma_semaphore, #tpu.memory_space<semaphore_mem>> -> memref<1x!tpu.dma_semaphore, #tpu.memory_space<semaphore_mem>>
    %186 = tpu.memref_squeeze %185 : memref<1x!tpu.dma_semaphore, #tpu.memory_space<semaphore_mem>> -> memref<!tpu.dma_semaphore, #tpu.memory_space<semaphore_mem>>
    tpu.wait_dma2 semaphore(%186 : memref<!tpu.dma_semaphore, #tpu.memory_space<semaphore_mem>>) src(%182 : memref<64xf32, #tpu.memory_space<any>>) dst(%184 : memref<64xf32, #tpu.memory_space<vmem>>)
    %c7_i32_92 = arith.constant 7 : i32
    %c7_i32_93 = arith.constant 7 : i32
    %c0_i32_94 = arith.constant 0 : i32
    %187 = tpu.memref_slice %arg3[%66, %c0_i32_94] : memref<64x64xf32, #tpu.memory_space<any>> -> memref<1x64xf32, #tpu.memory_space<any>>
    %188 = tpu.memref_squeeze %187 : memref<1x64xf32, #tpu.memory_space<any>> -> memref<64xf32, #tpu.memory_space<any>>
    %c0_i32_95 = arith.constant 0 : i32
    %189 = tpu.memref_slice %arg5[%c7_i32_92, %c0_i32_95] : memref<16x64xf32, #tpu.memory_space<vmem>> -> memref<1x64xf32, #tpu.memory_space<vmem>>
    %190 = tpu.memref_squeeze %189 : memref<1x64xf32, #tpu.memory_space<vmem>> -> memref<64xf32, #tpu.memory_space<vmem>>
    %191 = tpu.memref_slice %arg6[%c7_i32_93] : memref<16x!tpu.dma_semaphore, #tpu.memory_space<semaphore_mem>> -> memref<1x!tpu.dma_semaphore, #tpu.memory_space<semaphore_mem>>
    %192 = tpu.memref_squeeze %191 : memref<1x!tpu.dma_semaphore, #tpu.memory_space<semaphore_mem>> -> memref<!tpu.dma_semaphore, #tpu.memory_space<semaphore_mem>>
    tpu.wait_dma2 semaphore(%192 : memref<!tpu.dma_semaphore, #tpu.memory_space<semaphore_mem>>) src(%188 : memref<64xf32, #tpu.memory_space<any>>) dst(%190 : memref<64xf32, #tpu.memory_space<vmem>>)
    %c8_i32_96 = arith.constant 8 : i32
    %c8_i32_97 = arith.constant 8 : i32
    %c0_i32_98 = arith.constant 0 : i32
    %193 = tpu.memref_slice %arg3[%75, %c0_i32_98] : memref<64x64xf32, #tpu.memory_space<any>> -> memref<1x64xf32, #tpu.memory_space<any>>
    %194 = tpu.memref_squeeze %193 : memref<1x64xf32, #tpu.memory_space<any>> -> memref<64xf32, #tpu.memory_space<any>>
    %c0_i32_99 = arith.constant 0 : i32
    %195 = tpu.memref_slice %arg5[%c8_i32_96, %c0_i32_99] : memref<16x64xf32, #tpu.memory_space<vmem>> -> memref<1x64xf32, #tpu.memory_space<vmem>>
    %196 = tpu.memref_squeeze %195 : memref<1x64xf32, #tpu.memory_space<vmem>> -> memref<64xf32, #tpu.memory_space<vmem>>
    %197 = tpu.memref_slice %arg6[%c8_i32_97] : memref<16x!tpu.dma_semaphore, #tpu.memory_space<semaphore_mem>> -> memref<1x!tpu.dma_semaphore, #tpu.memory_space<semaphore_mem>>
    %198 = tpu.memref_squeeze %197 : memref<1x!tpu.dma_semaphore, #tpu.memory_space<semaphore_mem>> -> memref<!tpu.dma_semaphore, #tpu.memory_space<semaphore_mem>>
    tpu.wait_dma2 semaphore(%198 : memref<!tpu.dma_semaphore, #tpu.memory_space<semaphore_mem>>) src(%194 : memref<64xf32, #tpu.memory_space<any>>) dst(%196 : memref<64xf32, #tpu.memory_space<vmem>>)
    %c9_i32_100 = arith.constant 9 : i32
    %c9_i32_101 = arith.constant 9 : i32
    %c0_i32_102 = arith.constant 0 : i32
    %199 = tpu.memref_slice %arg3[%84, %c0_i32_102] : memref<64x64xf32, #tpu.memory_space<any>> -> memref<1x64xf32, #tpu.memory_space<any>>
    %200 = tpu.memref_squeeze %199 : memref<1x64xf32, #tpu.memory_space<any>> -> memref<64xf32, #tpu.memory_space<any>>
    %c0_i32_103 = arith.constant 0 : i32
    %201 = tpu.memref_slice %arg5[%c9_i32_100, %c0_i32_103] : memref<16x64xf32, #tpu.memory_space<vmem>> -> memref<1x64xf32, #tpu.memory_space<vmem>>
    %202 = tpu.memref_squeeze %201 : memref<1x64xf32, #tpu.memory_space<vmem>> -> memref<64xf32, #tpu.memory_space<vmem>>
    %203 = tpu.memref_slice %arg6[%c9_i32_101] : memref<16x!tpu.dma_semaphore, #tpu.memory_space<semaphore_mem>> -> memref<1x!tpu.dma_semaphore, #tpu.memory_space<semaphore_mem>>
    %204 = tpu.memref_squeeze %203 : memref<1x!tpu.dma_semaphore, #tpu.memory_space<semaphore_mem>> -> memref<!tpu.dma_semaphore, #tpu.memory_space<semaphore_mem>>
    tpu.wait_dma2 semaphore(%204 : memref<!tpu.dma_semaphore, #tpu.memory_space<semaphore_mem>>) src(%200 : memref<64xf32, #tpu.memory_space<any>>) dst(%202 : memref<64xf32, #tpu.memory_space<vmem>>)
    %c10_i32_104 = arith.constant 10 : i32
    %c10_i32_105 = arith.constant 10 : i32
    %c0_i32_106 = arith.constant 0 : i32
    %205 = tpu.memref_slice %arg3[%93, %c0_i32_106] : memref<64x64xf32, #tpu.memory_space<any>> -> memref<1x64xf32, #tpu.memory_space<any>>
    %206 = tpu.memref_squeeze %205 : memref<1x64xf32, #tpu.memory_space<any>> -> memref<64xf32, #tpu.memory_space<any>>
    %c0_i32_107 = arith.constant 0 : i32
    %207 = tpu.memref_slice %arg5[%c10_i32_104, %c0_i32_107] : memref<16x64xf32, #tpu.memory_space<vmem>> -> memref<1x64xf32, #tpu.memory_space<vmem>>
    %208 = tpu.memref_squeeze %207 : memref<1x64xf32, #tpu.memory_space<vmem>> -> memref<64xf32, #tpu.memory_space<vmem>>
    %209 = tpu.memref_slice %arg6[%c10_i32_105] : memref<16x!tpu.dma_semaphore, #tpu.memory_space<semaphore_mem>> -> memref<1x!tpu.dma_semaphore, #tpu.memory_space<semaphore_mem>>
    %210 = tpu.memref_squeeze %209 : memref<1x!tpu.dma_semaphore, #tpu.memory_space<semaphore_mem>> -> memref<!tpu.dma_semaphore, #tpu.memory_space<semaphore_mem>>
    tpu.wait_dma2 semaphore(%210 : memref<!tpu.dma_semaphore, #tpu.memory_space<semaphore_mem>>) src(%206 : memref<64xf32, #tpu.memory_space<any>>) dst(%208 : memref<64xf32, #tpu.memory_space<vmem>>)
    %c11_i32_108 = arith.constant 11 : i32
    %c11_i32_109 = arith.constant 11 : i32
    %c0_i32_110 = arith.constant 0 : i32
    %211 = tpu.memref_slice %arg3[%102, %c0_i32_110] : memref<64x64xf32, #tpu.memory_space<any>> -> memref<1x64xf32, #tpu.memory_space<any>>
    %212 = tpu.memref_squeeze %211 : memref<1x64xf32, #tpu.memory_space<any>> -> memref<64xf32, #tpu.memory_space<any>>
    %c0_i32_111 = arith.constant 0 : i32
    %213 = tpu.memref_slice %arg5[%c11_i32_108, %c0_i32_111] : memref<16x64xf32, #tpu.memory_space<vmem>> -> memref<1x64xf32, #tpu.memory_space<vmem>>
    %214 = tpu.memref_squeeze %213 : memref<1x64xf32, #tpu.memory_space<vmem>> -> memref<64xf32, #tpu.memory_space<vmem>>
    %215 = tpu.memref_slice %arg6[%c11_i32_109] : memref<16x!tpu.dma_semaphore, #tpu.memory_space<semaphore_mem>> -> memref<1x!tpu.dma_semaphore, #tpu.memory_space<semaphore_mem>>
    %216 = tpu.memref_squeeze %215 : memref<1x!tpu.dma_semaphore, #tpu.memory_space<semaphore_mem>> -> memref<!tpu.dma_semaphore, #tpu.memory_space<semaphore_mem>>
    tpu.wait_dma2 semaphore(%216 : memref<!tpu.dma_semaphore, #tpu.memory_space<semaphore_mem>>) src(%212 : memref<64xf32, #tpu.memory_space<any>>) dst(%214 : memref<64xf32, #tpu.memory_space<vmem>>)
    %c12_i32_112 = arith.constant 12 : i32
    %c12_i32_113 = arith.constant 12 : i32
    %c0_i32_114 = arith.constant 0 : i32
    %217 = tpu.memref_slice %arg3[%111, %c0_i32_114] : memref<64x64xf32, #tpu.memory_space<any>> -> memref<1x64xf32, #tpu.memory_space<any>>
    %218 = tpu.memref_squeeze %217 : memref<1x64xf32, #tpu.memory_space<any>> -> memref<64xf32, #tpu.memory_space<any>>
    %c0_i32_115 = arith.constant 0 : i32
    %219 = tpu.memref_slice %arg5[%c12_i32_112, %c0_i32_115] : memref<16x64xf32, #tpu.memory_space<vmem>> -> memref<1x64xf32, #tpu.memory_space<vmem>>
    %220 = tpu.memref_squeeze %219 : memref<1x64xf32, #tpu.memory_space<vmem>> -> memref<64xf32, #tpu.memory_space<vmem>>
    %221 = tpu.memref_slice %arg6[%c12_i32_113] : memref<16x!tpu.dma_semaphore, #tpu.memory_space<semaphore_mem>> -> memref<1x!tpu.dma_semaphore, #tpu.memory_space<semaphore_mem>>
    %222 = tpu.memref_squeeze %221 : memref<1x!tpu.dma_semaphore, #tpu.memory_space<semaphore_mem>> -> memref<!tpu.dma_semaphore, #tpu.memory_space<semaphore_mem>>
    tpu.wait_dma2 semaphore(%222 : memref<!tpu.dma_semaphore, #tpu.memory_space<semaphore_mem>>) src(%218 : memref<64xf32, #tpu.memory_space<any>>) dst(%220 : memref<64xf32, #tpu.memory_space<vmem>>)
    %c13_i32_116 = arith.constant 13 : i32
    %c13_i32_117 = arith.constant 13 : i32
    %c0_i32_118 = arith.constant 0 : i32
    %223 = tpu.memref_slice %arg3[%120, %c0_i32_118] : memref<64x64xf32, #tpu.memory_space<any>> -> memref<1x64xf32, #tpu.memory_space<any>>
    %224 = tpu.memref_squeeze %223 : memref<1x64xf32, #tpu.memory_space<any>> -> memref<64xf32, #tpu.memory_space<any>>
    %c0_i32_119 = arith.constant 0 : i32
    %225 = tpu.memref_slice %arg5[%c13_i32_116, %c0_i32_119] : memref<16x64xf32, #tpu.memory_space<vmem>> -> memref<1x64xf32, #tpu.memory_space<vmem>>
    %226 = tpu.memref_squeeze %225 : memref<1x64xf32, #tpu.memory_space<vmem>> -> memref<64xf32, #tpu.memory_space<vmem>>
    %227 = tpu.memref_slice %arg6[%c13_i32_117] : memref<16x!tpu.dma_semaphore, #tpu.memory_space<semaphore_mem>> -> memref<1x!tpu.dma_semaphore, #tpu.memory_space<semaphore_mem>>
    %228 = tpu.memref_squeeze %227 : memref<1x!tpu.dma_semaphore, #tpu.memory_space<semaphore_mem>> -> memref<!tpu.dma_semaphore, #tpu.memory_space<semaphore_mem>>
    tpu.wait_dma2 semaphore(%228 : memref<!tpu.dma_semaphore, #tpu.memory_space<semaphore_mem>>) src(%224 : memref<64xf32, #tpu.memory_space<any>>) dst(%226 : memref<64xf32, #tpu.memory_space<vmem>>)
    %c14_i32_120 = arith.constant 14 : i32
    %c14_i32_121 = arith.constant 14 : i32
    %c0_i32_122 = arith.constant 0 : i32
    %229 = tpu.memref_slice %arg3[%129, %c0_i32_122] : memref<64x64xf32, #tpu.memory_space<any>> -> memref<1x64xf32, #tpu.memory_space<any>>
    %230 = tpu.memref_squeeze %229 : memref<1x64xf32, #tpu.memory_space<any>> -> memref<64xf32, #tpu.memory_space<any>>
    %c0_i32_123 = arith.constant 0 : i32
    %231 = tpu.memref_slice %arg5[%c14_i32_120, %c0_i32_123] : memref<16x64xf32, #tpu.memory_space<vmem>> -> memref<1x64xf32, #tpu.memory_space<vmem>>
    %232 = tpu.memref_squeeze %231 : memref<1x64xf32, #tpu.memory_space<vmem>> -> memref<64xf32, #tpu.memory_space<vmem>>
    %233 = tpu.memref_slice %arg6[%c14_i32_121] : memref<16x!tpu.dma_semaphore, #tpu.memory_space<semaphore_mem>> -> memref<1x!tpu.dma_semaphore, #tpu.memory_space<semaphore_mem>>
    %234 = tpu.memref_squeeze %233 : memref<1x!tpu.dma_semaphore, #tpu.memory_space<semaphore_mem>> -> memref<!tpu.dma_semaphore, #tpu.memory_space<semaphore_mem>>
    tpu.wait_dma2 semaphore(%234 : memref<!tpu.dma_semaphore, #tpu.memory_space<semaphore_mem>>) src(%230 : memref<64xf32, #tpu.memory_space<any>>) dst(%232 : memref<64xf32, #tpu.memory_space<vmem>>)
    %c15_i32_124 = arith.constant 15 : i32
    %c15_i32_125 = arith.constant 15 : i32
    %c0_i32_126 = arith.constant 0 : i32
    %235 = tpu.memref_slice %arg3[%138, %c0_i32_126] : memref<64x64xf32, #tpu.memory_space<any>> -> memref<1x64xf32, #tpu.memory_space<any>>
    %236 = tpu.memref_squeeze %235 : memref<1x64xf32, #tpu.memory_space<any>> -> memref<64xf32, #tpu.memory_space<any>>
    %c0_i32_127 = arith.constant 0 : i32
    %237 = tpu.memref_slice %arg5[%c15_i32_124, %c0_i32_127] : memref<16x64xf32, #tpu.memory_space<vmem>> -> memref<1x64xf32, #tpu.memory_space<vmem>>
    %238 = tpu.memref_squeeze %237 : memref<1x64xf32, #tpu.memory_space<vmem>> -> memref<64xf32, #tpu.memory_space<vmem>>
    %239 = tpu.memref_slice %arg6[%c15_i32_125] : memref<16x!tpu.dma_semaphore, #tpu.memory_space<semaphore_mem>> -> memref<1x!tpu.dma_semaphore, #tpu.memory_space<semaphore_mem>>
    %240 = tpu.memref_squeeze %239 : memref<1x!tpu.dma_semaphore, #tpu.memory_space<semaphore_mem>> -> memref<!tpu.dma_semaphore, #tpu.memory_space<semaphore_mem>>
    tpu.wait_dma2 semaphore(%240 : memref<!tpu.dma_semaphore, #tpu.memory_space<semaphore_mem>>) src(%236 : memref<64xf32, #tpu.memory_space<any>>) dst(%238 : memref<64xf32, #tpu.memory_space<vmem>>)
    %c0 = arith.constant 0 : index
    %c0_128 = arith.constant 0 : index
    %241 = vector.load %arg5[%c0, %c0_128] : memref<16x64xf32, #tpu.memory_space<vmem>>, vector<16x64xf32>
    %c0_129 = arith.constant 0 : index
    %c0_130 = arith.constant 0 : index
    %242 = vector.load %arg2[%c0_129, %c0_130] : memref<16x64xf32, #tpu.memory_space<vmem>>, vector<16x64xf32>
    %243 = arith.addf %241, %242 : vector<16x64xf32>
    %c0_131 = arith.constant 0 : index
    %c0_132 = arith.constant 0 : index
    %244 = vector.load %arg4[%c0_131, %c0_132] : memref<16x64xf32, #tpu.memory_space<vmem>>, vector<16x64xf32>
    tpu.vector_store %arg4[%c0_131, %c0_132], %243 {strides = array<i32>} : memref<16x64xf32, #tpu.memory_space<vmem>>, vector<16x64xf32>,
    return
  }
  func.func @transform_0(%arg0: i32, %arg1: memref<16xi32, #tpu.memory_space<smem>>) -> (i32, i32) {
    %c0_i32 = arith.constant 0 : i32
    %c0_i32_0 = arith.constant 0 : i32
    return %arg0, %c0_i32 : i32, i32
  }
  func.func @transform_2(%arg0: i32, %arg1: memref<16xi32, #tpu.memory_space<smem>>) -> (i32, i32) {
    %c0_i32 = arith.constant 0 : i32
    %c0_i32_0 = arith.constant 0 : i32
    return %arg0, %c0_i32 : i32, i32
  }
}

module attributes {stable_mosaic.version = 11 : i64} {
  func.func @clip_layers_kernel(%arg0: i32, %arg1: i32, %arg2: memref<2x8x64xf32, #tpu.memory_space<vmem>>, %arg3: memref<1x1x64xf32, #tpu.memory_space<vmem>>, %arg4: memref<1x1x64xf32, #tpu.memory_space<vmem>>, %arg5: memref<1x64x192xbf16, #tpu.memory_space<vmem>>, %arg6: memref<1x1x192xf32, #tpu.memory_space<vmem>>, %arg7: memref<1x64x64xbf16, #tpu.memory_space<vmem>>, %arg8: memref<1x1x64xf32, #tpu.memory_space<vmem>>, %arg9: memref<1x1x64xf32, #tpu.memory_space<vmem>>, %arg10: memref<1x1x64xf32, #tpu.memory_space<vmem>>, %arg11: memref<1x64x256xbf16, #tpu.memory_space<vmem>>, %arg12: memref<1x1x256xf32, #tpu.memory_space<vmem>>, %arg13: memref<1x256x64xbf16, #tpu.memory_space<vmem>>, %arg14: memref<1x1x64xf32, #tpu.memory_space<vmem>>, %arg15: memref<1x64xf32, #tpu.memory_space<vmem>>, %arg16: memref<1x64xf32, #tpu.memory_space<vmem>>, %arg17: memref<2x8x64xf32, #tpu.memory_space<vmem>>, %arg18: memref<4x2x8x16xbf16, #tpu.memory_space<vmem>>, %arg19: memref<4x2x8x16xbf16, #tpu.memory_space<vmem>>, %arg20: memref<4x2x8x16xbf16, #tpu.memory_space<vmem>>, %arg21: memref<2x8x64xbf16, #tpu.memory_space<vmem>>) attributes {dimension_semantics = [#tpu.dimension_semantics<parallel>, #tpu.dimension_semantics<arbitrary>], iteration_bounds = array<i64: 1, 12>, scalar_prefetch = 0 : i64, scratch_operands = 4 : i64, tpu.core_type = #tpu.core_type<tc>, window_params = [{transform_indices = @transform_0, window_bounds = array<i64: 2, 8, 64>}, {transform_indices = @transform_1, window_bounds = array<i64: 1, 1, 64>}, {transform_indices = @transform_2, window_bounds = array<i64: 1, 1, 64>}, {transform_indices = @transform_3, window_bounds = array<i64: 1, 64, 192>}, {transform_indices = @transform_4, window_bounds = array<i64: 1, 1, 192>}, {transform_indices = @transform_5, window_bounds = array<i64: 1, 64, 64>}, {transform_indices = @transform_6, window_bounds = array<i64: 1, 1, 64>}, {transform_indices = @transform_7, window_bounds = array<i64: 1, 1, 64>}, {transform_indices = @transform_8, window_bounds = array<i64: 1, 1, 64>}, {transform_indices = @transform_9, window_bounds = array<i64: 1, 64, 256>}, {transform_indices = @transform_10, window_bounds = array<i64: 1, 1, 256>}, {transform_indices = @transform_11, window_bounds = array<i64: 1, 256, 64>}, {transform_indices = @transform_12, window_bounds = array<i64: 1, 1, 64>}, {pipeline_mode = #tpu.pipeline_mode<synchronous>, transform_indices = @transform_13, window_bounds = array<i64: 1, 64>}, {pipeline_mode = #tpu.pipeline_mode<synchronous>, transform_indices = @transform_14, window_bounds = array<i64: 1, 64>}, {transform_indices = @transform_15, window_bounds = array<i64: 2, 8, 64>}]} {
    %c0_i32 = arith.constant 0 : i32
    %0 = arith.cmpi eq, %arg1, %c0_i32 : i32
    %1 = arith.extui %0 : i1 to i32
    %c0_i32_0 = arith.constant 0 : i32
    %2 = arith.cmpi ne, %1, %c0_i32_0 : i32
    scf.if %2 {
      %c0_131 = arith.constant 0 : index
      %c0_132 = arith.constant 0 : index
      %c0_133 = arith.constant 0 : index
      %220 = vector.load %arg2[%c0_131, %c0_132, %c0_133] : memref<2x8x64xf32, #tpu.memory_space<vmem>>, vector<2x8x64xf32>
      %c0_134 = arith.constant 0 : index
      %c0_135 = arith.constant 0 : index
      %c0_136 = arith.constant 0 : index
      %221 = vector.load %arg17[%c0_134, %c0_135, %c0_136] : memref<2x8x64xf32, #tpu.memory_space<vmem>>, vector<2x8x64xf32>
      tpu.vector_store %arg17[%c0_134, %c0_135, %c0_136], %220 {strides = array<i32>} : memref<2x8x64xf32, #tpu.memory_space<vmem>>, vector<2x8x64xf32>,
    } else {
    }
    %c0 = arith.constant 0 : index
    %c0_1 = arith.constant 0 : index
    %c0_2 = arith.constant 0 : index
    %3 = vector.load %arg17[%c0, %c0_1, %c0_2] : memref<2x8x64xf32, #tpu.memory_space<vmem>>, vector<2x8x64xf32>
    %4 = vector.shape_cast %3 : vector<2x8x64xf32> to vector<16x64xf32>
    %c0_3 = arith.constant 0 : index
    %c0_4 = arith.constant 0 : index
    %c0_5 = arith.constant 0 : index
    %5 = vector.load %arg3[%c0_3, %c0_4, %c0_5] : memref<1x1x64xf32, #tpu.memory_space<vmem>>, vector<1x1x64xf32>
    %6 = vector.shape_cast %5 : vector<1x1x64xf32> to vector<1x64xf32>
    %c0_6 = arith.constant 0 : index
    %c0_7 = arith.constant 0 : index
    %c0_8 = arith.constant 0 : index
    %7 = vector.load %arg4[%c0_6, %c0_7, %c0_8] : memref<1x1x64xf32, #tpu.memory_space<vmem>>, vector<1x1x64xf32>
    %8 = vector.shape_cast %7 : vector<1x1x64xf32> to vector<1x64xf32>
    %cst = arith.constant dense<0.000000e+00> : vector<16xf32>
    %9 = vector.multi_reduction <add>, %4, %cst [1] : vector<16x64xf32> to vector<16xf32>
    %10 = vector.shape_cast %9 : vector<16xf32> to vector<16x1xf32>
    %cst_9 = arith.constant 6.400000e+01 : f32
    %11 = vector.broadcast %cst_9 : f32 to vector<16x1xf32>
    %12 = arith.divf %10, %11 : vector<16x1xf32>
    %13 = vector.broadcast %12 : vector<16x1xf32> to vector<16x64xf32>
    %14 = arith.subf %4, %13 : vector<16x64xf32>
    %15 = vector.broadcast %12 : vector<16x1xf32> to vector<16x64xf32>
    %16 = arith.subf %4, %15 : vector<16x64xf32>
    %17 = arith.mulf %14, %16 : vector<16x64xf32>
    %cst_10 = arith.constant dense<0.000000e+00> : vector<16xf32>
    %18 = vector.multi_reduction <add>, %17, %cst_10 [1] : vector<16x64xf32> to vector<16xf32>
    %19 = vector.shape_cast %18 : vector<16xf32> to vector<16x1xf32>
    %cst_11 = arith.constant 6.400000e+01 : f32
    %20 = vector.broadcast %cst_11 : f32 to vector<16x1xf32>
    %21 = arith.divf %19, %20 : vector<16x1xf32>
    %22 = vector.broadcast %12 : vector<16x1xf32> to vector<16x64xf32>
    %23 = arith.subf %4, %22 : vector<16x64xf32>
    %cst_12 = arith.constant 9.99999974E-6 : f32
    %24 = vector.broadcast %cst_12 : f32 to vector<16x1xf32>
    %25 = arith.addf %21, %24 : vector<16x1xf32>
    %26 = math.rsqrt %25 : vector<16x1xf32>
    %27 = vector.broadcast %26 : vector<16x1xf32> to vector<16x64xf32>
    %28 = arith.mulf %23, %27 : vector<16x64xf32>
    %29 = vector.broadcast %6 : vector<1x64xf32> to vector<16x64xf32>
    %30 = arith.mulf %28, %29 : vector<16x64xf32>
    %31 = vector.broadcast %8 : vector<1x64xf32> to vector<16x64xf32>
    %32 = arith.addf %30, %31 : vector<16x64xf32>
    %33 = arith.truncf %32 : vector<16x64xf32> to vector<16x64xbf16>
    %c0_13 = arith.constant 0 : index
    %c0_14 = arith.constant 0 : index
    %c0_15 = arith.constant 0 : index
    %34 = vector.load %arg5[%c0_13, %c0_14, %c0_15] : memref<1x64x192xbf16, #tpu.memory_space<vmem>>, vector<1x64x192xbf16>
    %35 = vector.shape_cast %34 : vector<1x64x192xbf16> to vector<64x192xbf16>
    %cst_16 = arith.constant dense<0.000000e+00> : vector<16x192xf32>
    %36 = tpu.matmul %33, %35, %cst_16 {dimension_numbers = #tpu.dot_dimension_numbers<[1], [0], [0], [1], [0, 0, 1, 1], [], []>} : vector<16x64xbf16>, vector<64x192xbf16>, vector<16x192xf32> -> vector<16x192xf32>
    %c0_17 = arith.constant 0 : index
    %c0_18 = arith.constant 0 : index
    %c0_19 = arith.constant 0 : index
    %37 = vector.load %arg6[%c0_17, %c0_18, %c0_19] : memref<1x1x192xf32, #tpu.memory_space<vmem>>, vector<1x1x192xf32>
    %38 = vector.shape_cast %37 : vector<1x1x192xf32> to vector<1x192xf32>
    %39 = vector.broadcast %38 : vector<1x192xf32> to vector<16x192xf32>
    %40 = arith.addf %36, %39 : vector<16x192xf32>
    %41 = vector.shape_cast %40 : vector<16x192xf32> to vector<2x8x192xf32>
    %42 = vector.extract_strided_slice %41 {offsets = [0, 0, 0], sizes = [2, 8, 16], strides = [1, 1, 1]} : vector<2x8x192xf32> to vector<2x8x16xf32>
    %43 = arith.truncf %42 : vector<2x8x16xf32> to vector<2x8x16xbf16>
    %c0_20 = arith.constant 0 : index
    %c0_21 = arith.constant 0 : index
    %c0_22 = arith.constant 0 : index
    %c0_23 = arith.constant 0 : index
    %44 = vector.load %arg18[%c0_20, %c0_21, %c0_22, %c0_23] : memref<4x2x8x16xbf16, #tpu.memory_space<vmem>>, vector<1x2x8x16xbf16>
    %45 = vector.shape_cast %44 : vector<1x2x8x16xbf16> to vector<2x8x16xbf16>
    %46 = vector.shape_cast %43 : vector<2x8x16xbf16> to vector<1x2x8x16xbf16>
    tpu.vector_store %arg18[%c0_20, %c0_21, %c0_22, %c0_23], %46 {strides = array<i32>} : memref<4x2x8x16xbf16, #tpu.memory_space<vmem>>, vector<1x2x8x16xbf16>,
    %47 = vector.extract_strided_slice %41 {offsets = [0, 0, 64], sizes = [2, 8, 16], strides = [1, 1, 1]} : vector<2x8x192xf32> to vector<2x8x16xf32>
    %48 = arith.truncf %47 : vector<2x8x16xf32> to vector<2x8x16xbf16>
    %c0_24 = arith.constant 0 : index
    %c0_25 = arith.constant 0 : index
    %c0_26 = arith.constant 0 : index
    %c0_27 = arith.constant 0 : index
    %49 = vector.load %arg19[%c0_24, %c0_25, %c0_26, %c0_27] : memref<4x2x8x16xbf16, #tpu.memory_space<vmem>>, vector<1x2x8x16xbf16>
    %50 = vector.shape_cast %49 : vector<1x2x8x16xbf16> to vector<2x8x16xbf16>
    %51 = vector.shape_cast %48 : vector<2x8x16xbf16> to vector<1x2x8x16xbf16>
    tpu.vector_store %arg19[%c0_24, %c0_25, %c0_26, %c0_27], %51 {strides = array<i32>} : memref<4x2x8x16xbf16, #tpu.memory_space<vmem>>, vector<1x2x8x16xbf16>,
    %52 = vector.extract_strided_slice %41 {offsets = [0, 0, 128], sizes = [2, 8, 16], strides = [1, 1, 1]} : vector<2x8x192xf32> to vector<2x8x16xf32>
    %53 = arith.truncf %52 : vector<2x8x16xf32> to vector<2x8x16xbf16>
    %c0_28 = arith.constant 0 : index
    %c0_29 = arith.constant 0 : index
    %c0_30 = arith.constant 0 : index
    %c0_31 = arith.constant 0 : index
    %54 = vector.load %arg20[%c0_28, %c0_29, %c0_30, %c0_31] : memref<4x2x8x16xbf16, #tpu.memory_space<vmem>>, vector<1x2x8x16xbf16>
    %55 = vector.shape_cast %54 : vector<1x2x8x16xbf16> to vector<2x8x16xbf16>
    %56 = vector.shape_cast %53 : vector<2x8x16xbf16> to vector<1x2x8x16xbf16>
    tpu.vector_store %arg20[%c0_28, %c0_29, %c0_30, %c0_31], %56 {strides = array<i32>} : memref<4x2x8x16xbf16, #tpu.memory_space<vmem>>, vector<1x2x8x16xbf16>,
    %57 = vector.extract_strided_slice %41 {offsets = [0, 0, 16], sizes = [2, 8, 16], strides = [1, 1, 1]} : vector<2x8x192xf32> to vector<2x8x16xf32>
    %58 = arith.truncf %57 : vector<2x8x16xf32> to vector<2x8x16xbf16>
    %c1 = arith.constant 1 : index
    %c0_32 = arith.constant 0 : index
    %c0_33 = arith.constant 0 : index
    %c0_34 = arith.constant 0 : index
    %59 = vector.load %arg18[%c1, %c0_32, %c0_33, %c0_34] : memref<4x2x8x16xbf16, #tpu.memory_space<vmem>>, vector<1x2x8x16xbf16>
    %60 = vector.shape_cast %59 : vector<1x2x8x16xbf16> to vector<2x8x16xbf16>
    %61 = vector.shape_cast %58 : vector<2x8x16xbf16> to vector<1x2x8x16xbf16>
    tpu.vector_store %arg18[%c1, %c0_32, %c0_33, %c0_34], %61 {strides = array<i32>} : memref<4x2x8x16xbf16, #tpu.memory_space<vmem>>, vector<1x2x8x16xbf16>,
    %62 = vector.extract_strided_slice %41 {offsets = [0, 0, 80], sizes = [2, 8, 16], strides = [1, 1, 1]} : vector<2x8x192xf32> to vector<2x8x16xf32>
    %63 = arith.truncf %62 : vector<2x8x16xf32> to vector<2x8x16xbf16>
    %c1_35 = arith.constant 1 : index
    %c0_36 = arith.constant 0 : index
    %c0_37 = arith.constant 0 : index
    %c0_38 = arith.constant 0 : index
    %64 = vector.load %arg19[%c1_35, %c0_36, %c0_37, %c0_38] : memref<4x2x8x16xbf16, #tpu.memory_space<vmem>>, vector<1x2x8x16xbf16>
    %65 = vector.shape_cast %64 : vector<1x2x8x16xbf16> to vector<2x8x16xbf16>
    %66 = vector.shape_cast %63 : vector<2x8x16xbf16> to vector<1x2x8x16xbf16>
    tpu.vector_store %arg19[%c1_35, %c0_36, %c0_37, %c0_38], %66 {strides = array<i32>} : memref<4x2x8x16xbf16, #tpu.memory_space<vmem>>, vector<1x2x8x16xbf16>,
    %67 = vector.extract_strided_slice %41 {offsets = [0, 0, 144], sizes = [2, 8, 16], strides = [1, 1, 1]} : vector<2x8x192xf32> to vector<2x8x16xf32>
    %68 = arith.truncf %67 : vector<2x8x16xf32> to vector<2x8x16xbf16>
    %c1_39 = arith.constant 1 : index
    %c0_40 = arith.constant 0 : index
    %c0_41 = arith.constant 0 : index
    %c0_42 = arith.constant 0 : index
    %69 = vector.load %arg20[%c1_39, %c0_40, %c0_41, %c0_42] : memref<4x2x8x16xbf16, #tpu.memory_space<vmem>>, vector<1x2x8x16xbf16>
    %70 = vector.shape_cast %69 : vector<1x2x8x16xbf16> to vector<2x8x16xbf16>
    %71 = vector.shape_cast %68 : vector<2x8x16xbf16> to vector<1x2x8x16xbf16>
    tpu.vector_store %arg20[%c1_39, %c0_40, %c0_41, %c0_42], %71 {strides = array<i32>} : memref<4x2x8x16xbf16, #tpu.memory_space<vmem>>, vector<1x2x8x16xbf16>,
    %72 = vector.extract_strided_slice %41 {offsets = [0, 0, 32], sizes = [2, 8, 16], strides = [1, 1, 1]} : vector<2x8x192xf32> to vector<2x8x16xf32>
    %73 = arith.truncf %72 : vector<2x8x16xf32> to vector<2x8x16xbf16>
    %c2 = arith.constant 2 : index
    %c0_43 = arith.constant 0 : index
    %c0_44 = arith.constant 0 : index
    %c0_45 = arith.constant 0 : index
    %74 = vector.load %arg18[%c2, %c0_43, %c0_44, %c0_45] : memref<4x2x8x16xbf16, #tpu.memory_space<vmem>>, vector<1x2x8x16xbf16>
    %75 = vector.shape_cast %74 : vector<1x2x8x16xbf16> to vector<2x8x16xbf16>
    %76 = vector.shape_cast %73 : vector<2x8x16xbf16> to vector<1x2x8x16xbf16>
    tpu.vector_store %arg18[%c2, %c0_43, %c0_44, %c0_45], %76 {strides = array<i32>} : memref<4x2x8x16xbf16, #tpu.memory_space<vmem>>, vector<1x2x8x16xbf16>,
    %77 = vector.extract_strided_slice %41 {offsets = [0, 0, 96], sizes = [2, 8, 16], strides = [1, 1, 1]} : vector<2x8x192xf32> to vector<2x8x16xf32>
    %78 = arith.truncf %77 : vector<2x8x16xf32> to vector<2x8x16xbf16>
    %c2_46 = arith.constant 2 : index
    %c0_47 = arith.constant 0 : index
    %c0_48 = arith.constant 0 : index
    %c0_49 = arith.constant 0 : index
    %79 = vector.load %arg19[%c2_46, %c0_47, %c0_48, %c0_49] : memref<4x2x8x16xbf16, #tpu.memory_space<vmem>>, vector<1x2x8x16xbf16>
    %80 = vector.shape_cast %79 : vector<1x2x8x16xbf16> to vector<2x8x16xbf16>
    %81 = vector.shape_cast %78 : vector<2x8x16xbf16> to vector<1x2x8x16xbf16>
    tpu.vector_store %arg19[%c2_46, %c0_47, %c0_48, %c0_49], %81 {strides = array<i32>} : memref<4x2x8x16xbf16, #tpu.memory_space<vmem>>, vector<1x2x8x16xbf16>,
    %82 = vector.extract_strided_slice %41 {offsets = [0, 0, 160], sizes = [2, 8, 16], strides = [1, 1, 1]} : vector<2x8x192xf32> to vector<2x8x16xf32>
    %83 = arith.truncf %82 : vector<2x8x16xf32> to vector<2x8x16xbf16>
    %c2_50 = arith.constant 2 : index
    %c0_51 = arith.constant 0 : index
    %c0_52 = arith.constant 0 : index
    %c0_53 = arith.constant 0 : index
    %84 = vector.load %arg20[%c2_50, %c0_51, %c0_52, %c0_53] : memref<4x2x8x16xbf16, #tpu.memory_space<vmem>>, vector<1x2x8x16xbf16>
    %85 = vector.shape_cast %84 : vector<1x2x8x16xbf16> to vector<2x8x16xbf16>
    %86 = vector.shape_cast %83 : vector<2x8x16xbf16> to vector<1x2x8x16xbf16>
    tpu.vector_store %arg20[%c2_50, %c0_51, %c0_52, %c0_53], %86 {strides = array<i32>} : memref<4x2x8x16xbf16, #tpu.memory_space<vmem>>, vector<1x2x8x16xbf16>,
    %87 = vector.extract_strided_slice %41 {offsets = [0, 0, 48], sizes = [2, 8, 16], strides = [1, 1, 1]} : vector<2x8x192xf32> to vector<2x8x16xf32>
    %88 = arith.truncf %87 : vector<2x8x16xf32> to vector<2x8x16xbf16>
    %c3 = arith.constant 3 : index
    %c0_54 = arith.constant 0 : index
    %c0_55 = arith.constant 0 : index
    %c0_56 = arith.constant 0 : index
    %89 = vector.load %arg18[%c3, %c0_54, %c0_55, %c0_56] : memref<4x2x8x16xbf16, #tpu.memory_space<vmem>>, vector<1x2x8x16xbf16>
    %90 = vector.shape_cast %89 : vector<1x2x8x16xbf16> to vector<2x8x16xbf16>
    %91 = vector.shape_cast %88 : vector<2x8x16xbf16> to vector<1x2x8x16xbf16>
    tpu.vector_store %arg18[%c3, %c0_54, %c0_55, %c0_56], %91 {strides = array<i32>} : memref<4x2x8x16xbf16, #tpu.memory_space<vmem>>, vector<1x2x8x16xbf16>,
    %92 = vector.extract_strided_slice %41 {offsets = [0, 0, 112], sizes = [2, 8, 16], strides = [1, 1, 1]} : vector<2x8x192xf32> to vector<2x8x16xf32>
    %93 = arith.truncf %92 : vector<2x8x16xf32> to vector<2x8x16xbf16>
    %c3_57 = arith.constant 3 : index
    %c0_58 = arith.constant 0 : index
    %c0_59 = arith.constant 0 : index
    %c0_60 = arith.constant 0 : index
    %94 = vector.load %arg19[%c3_57, %c0_58, %c0_59, %c0_60] : memref<4x2x8x16xbf16, #tpu.memory_space<vmem>>, vector<1x2x8x16xbf16>
    %95 = vector.shape_cast %94 : vector<1x2x8x16xbf16> to vector<2x8x16xbf16>
    %96 = vector.shape_cast %93 : vector<2x8x16xbf16> to vector<1x2x8x16xbf16>
    tpu.vector_store %arg19[%c3_57, %c0_58, %c0_59, %c0_60], %96 {strides = array<i32>} : memref<4x2x8x16xbf16, #tpu.memory_space<vmem>>, vector<1x2x8x16xbf16>,
    %97 = vector.extract_strided_slice %41 {offsets = [0, 0, 176], sizes = [2, 8, 16], strides = [1, 1, 1]} : vector<2x8x192xf32> to vector<2x8x16xf32>
    %98 = arith.truncf %97 : vector<2x8x16xf32> to vector<2x8x16xbf16>
    %c3_61 = arith.constant 3 : index
    %c0_62 = arith.constant 0 : index
    %c0_63 = arith.constant 0 : index
    %c0_64 = arith.constant 0 : index
    %99 = vector.load %arg20[%c3_61, %c0_62, %c0_63, %c0_64] : memref<4x2x8x16xbf16, #tpu.memory_space<vmem>>, vector<1x2x8x16xbf16>
    %100 = vector.shape_cast %99 : vector<1x2x8x16xbf16> to vector<2x8x16xbf16>
    %101 = vector.shape_cast %98 : vector<2x8x16xbf16> to vector<1x2x8x16xbf16>
    tpu.vector_store %arg20[%c3_61, %c0_62, %c0_63, %c0_64], %101 {strides = array<i32>} : memref<4x2x8x16xbf16, #tpu.memory_space<vmem>>, vector<1x2x8x16xbf16>,
    %c0_65 = arith.constant 0 : index
    %c0_66 = arith.constant 0 : index
    %c0_67 = arith.constant 0 : index
    %c0_68 = arith.constant 0 : index
    %102 = vector.load %arg18[%c0_65, %c0_66, %c0_67, %c0_68] : memref<4x2x8x16xbf16, #tpu.memory_space<vmem>>, vector<4x2x8x16xbf16>
    %103 = vector.shape_cast %102 : vector<4x2x8x16xbf16> to vector<8x8x16xbf16>
    %c0_69 = arith.constant 0 : index
    %c0_70 = arith.constant 0 : index
    %c0_71 = arith.constant 0 : index
    %c0_72 = arith.constant 0 : index
    %104 = vector.load %arg19[%c0_69, %c0_70, %c0_71, %c0_72] : memref<4x2x8x16xbf16, #tpu.memory_space<vmem>>, vector<4x2x8x16xbf16>
    %105 = vector.shape_cast %104 : vector<4x2x8x16xbf16> to vector<8x8x16xbf16>
    %c0_73 = arith.constant 0 : index
    %c0_74 = arith.constant 0 : index
    %c0_75 = arith.constant 0 : index
    %c0_76 = arith.constant 0 : index
    %106 = vector.load %arg20[%c0_73, %c0_74, %c0_75, %c0_76] : memref<4x2x8x16xbf16, #tpu.memory_space<vmem>>, vector<4x2x8x16xbf16>
    %107 = vector.shape_cast %106 : vector<4x2x8x16xbf16> to vector<8x8x16xbf16>
    "tpu.trace_start"() <{level = 10 : i32, message = "nqd,nkd->nqk"}> : () -> ()
    %cst_77 = arith.constant dense<0.000000e+00> : vector<8x8x8xf32>
    %108 = tpu.matmul %103, %105, %cst_77 {dimension_numbers = #tpu.dot_dimension_numbers<[2], [2], [1], [1], [0, 0, 0, 1, 1, 1], [0], [0]>} : vector<8x8x16xbf16>, vector<8x8x16xbf16>, vector<8x8x8xf32> -> vector<8x8x8xf32>
    "tpu.trace_stop"() : () -> ()
    %cst_78 = arith.constant 2.500000e-01 : f32
    %109 = vector.broadcast %cst_78 : f32 to vector<8x8x8xf32>
    %110 = arith.mulf %108, %109 : vector<8x8x8xf32>
    %111 = tpu.iota {dimensions = array<i32: 1>} : vector<8x8xi32>
    %112 = tpu.iota {dimensions = array<i32: 0>} : vector<8x8xi32>
    %113 = arith.cmpi sgt, %111, %112 : vector<8x8xi32>
    %c8_i32 = arith.constant 8 : i32
    %114 = vector.broadcast %c8_i32 : i32 to vector<8x8xi32>
    %115 = arith.cmpi sge, %111, %114 : vector<8x8xi32>
    %116 = arith.ori %113, %115 : vector<8x8xi1>
    %117 = vector.shape_cast %116 : vector<8x8xi1> to vector<1x8x8xi1>
    %cst_79 = arith.constant -1.000000e+30 : f32
    %118 = vector.shape_cast %117 : vector<1x8x8xi1> to vector<1x8x8xi1>
    %119 = vector.broadcast %118 : vector<1x8x8xi1> to vector<8x8x8xi1>
    %120 = vector.broadcast %cst_79 : f32 to vector<8x8x8xf32>
    %121 = arith.select %119, %120, %110 : vector<8x8x8xi1>, vector<8x8x8xf32>
    %cst_80 = arith.constant dense<0xFF800000> : vector<8x8xf32>
    %122 = vector.multi_reduction <maximumf>, %121, %cst_80 [2] : vector<8x8x8xf32> to vector<8x8xf32>
    %123 = vector.shape_cast %122 : vector<8x8xf32> to vector<8x8x1xf32>
    %124 = vector.broadcast %123 : vector<8x8x1xf32> to vector<8x8x8xf32>
    %125 = arith.subf %121, %124 : vector<8x8x8xf32>
    %126 = math.exp %125 : vector<8x8x8xf32>
    %cst_81 = arith.constant dense<0.000000e+00> : vector<8x8xf32>
    %127 = vector.multi_reduction <add>, %126, %cst_81 [2] : vector<8x8x8xf32> to vector<8x8xf32>
    %128 = vector.shape_cast %127 : vector<8x8xf32> to vector<8x8x1xf32>
    %129 = tpu.reciprocal %128 {approx = true} : vector<8x8x1xf32> -> vector<8x8x1xf32>
    %130 = vector.broadcast %129 : vector<8x8x1xf32> to vector<8x8x8xf32>
    %131 = arith.mulf %126, %130 : vector<8x8x8xf32>
    %132 = arith.truncf %131 : vector<8x8x8xf32> to vector<8x8x8xbf16>
    "tpu.trace_start"() <{level = 10 : i32, message = "nqk,nkd->nqd"}> : () -> ()
    %cst_82 = arith.constant dense<0.000000e+00> : vector<8x8x16xf32>
    %133 = tpu.matmul %132, %107, %cst_82 {dimension_numbers = #tpu.dot_dimension_numbers<[2], [1], [1], [2], [0, 0, 0, 1, 1, 2], [0], [0]>} : vector<8x8x8xbf16>, vector<8x8x16xbf16>, vector<8x8x16xf32> -> vector<8x8x16xf32>
    "tpu.trace_stop"() : () -> ()
    %134 = vector.shape_cast %133 : vector<8x8x16xf32> to vector<4x2x8x16xf32>
    %135 = vector.extract_strided_slice %134 {offsets = [0, 0, 0, 0], sizes = [1, 2, 8, 16], strides = [1, 1, 1, 1]} : vector<4x2x8x16xf32> to vector<1x2x8x16xf32>
    %136 = vector.shape_cast %135 : vector<1x2x8x16xf32> to vector<2x8x16xf32>
    %137 = arith.truncf %136 : vector<2x8x16xf32> to vector<2x8x16xbf16>
    %c0_83 = arith.constant 0 : index
    %c0_84 = arith.constant 0 : index
    %c0_85 = arith.constant 0 : index
    %138 = vector.load %arg21[%c0_83, %c0_84, %c0_85] : memref<2x8x64xbf16, #tpu.memory_space<vmem>>, vector<2x8x16xbf16>
    tpu.vector_store %arg21[%c0_83, %c0_84, %c0_85], %137 {strides = array<i32>} : memref<2x8x64xbf16, #tpu.memory_space<vmem>>, vector<2x8x16xbf16>,
    %139 = vector.extract_strided_slice %134 {offsets = [1, 0, 0, 0], sizes = [1, 2, 8, 16], strides = [1, 1, 1, 1]} : vector<4x2x8x16xf32> to vector<1x2x8x16xf32>
    %140 = vector.shape_cast %139 : vector<1x2x8x16xf32> to vector<2x8x16xf32>
    %141 = arith.truncf %140 : vector<2x8x16xf32> to vector<2x8x16xbf16>
    %c0_86 = arith.constant 0 : index
    %c0_87 = arith.constant 0 : index
    %c16 = arith.constant 16 : index
    %142 = vector.load %arg21[%c0_86, %c0_87, %c16] : memref<2x8x64xbf16, #tpu.memory_space<vmem>>, vector<2x8x16xbf16>
    tpu.vector_store %arg21[%c0_86, %c0_87, %c16], %141 {strides = array<i32>} : memref<2x8x64xbf16, #tpu.memory_space<vmem>>, vector<2x8x16xbf16>,
    %143 = vector.extract_strided_slice %134 {offsets = [2, 0, 0, 0], sizes = [1, 2, 8, 16], strides = [1, 1, 1, 1]} : vector<4x2x8x16xf32> to vector<1x2x8x16xf32>
    %144 = vector.shape_cast %143 : vector<1x2x8x16xf32> to vector<2x8x16xf32>
    %145 = arith.truncf %144 : vector<2x8x16xf32> to vector<2x8x16xbf16>
    %c0_88 = arith.constant 0 : index
    %c0_89 = arith.constant 0 : index
    %c32 = arith.constant 32 : index
    %146 = vector.load %arg21[%c0_88, %c0_89, %c32] : memref<2x8x64xbf16, #tpu.memory_space<vmem>>, vector<2x8x16xbf16>
    tpu.vector_store %arg21[%c0_88, %c0_89, %c32], %145 {strides = array<i32>} : memref<2x8x64xbf16, #tpu.memory_space<vmem>>, vector<2x8x16xbf16>,
    %147 = vector.extract_strided_slice %134 {offsets = [3, 0, 0, 0], sizes = [1, 2, 8, 16], strides = [1, 1, 1, 1]} : vector<4x2x8x16xf32> to vector<1x2x8x16xf32>
    %148 = vector.shape_cast %147 : vector<1x2x8x16xf32> to vector<2x8x16xf32>
    %149 = arith.truncf %148 : vector<2x8x16xf32> to vector<2x8x16xbf16>
    %c0_90 = arith.constant 0 : index
    %c0_91 = arith.constant 0 : index
    %c48 = arith.constant 48 : index
    %150 = vector.load %arg21[%c0_90, %c0_91, %c48] : memref<2x8x64xbf16, #tpu.memory_space<vmem>>, vector<2x8x16xbf16>
    tpu.vector_store %arg21[%c0_90, %c0_91, %c48], %149 {strides = array<i32>} : memref<2x8x64xbf16, #tpu.memory_space<vmem>>, vector<2x8x16xbf16>,
    %c0_92 = arith.constant 0 : index
    %c0_93 = arith.constant 0 : index
    %c0_94 = arith.constant 0 : index
    %151 = vector.load %arg21[%c0_92, %c0_93, %c0_94] : memref<2x8x64xbf16, #tpu.memory_space<vmem>>, vector<2x8x64xbf16>
    %152 = vector.shape_cast %151 : vector<2x8x64xbf16> to vector<16x64xbf16>
    %c0_95 = arith.constant 0 : index
    %c0_96 = arith.constant 0 : index
    %c0_97 = arith.constant 0 : index
    %153 = vector.load %arg7[%c0_95, %c0_96, %c0_97] : memref<1x64x64xbf16, #tpu.memory_space<vmem>>, vector<1x64x64xbf16>
    %154 = vector.shape_cast %153 : vector<1x64x64xbf16> to vector<64x64xbf16>
    %cst_98 = arith.constant dense<0.000000e+00> : vector<16x64xf32>
    %155 = tpu.matmul %152, %154, %cst_98 {dimension_numbers = #tpu.dot_dimension_numbers<[1], [0], [0], [1], [0, 0, 1, 1], [], []>} : vector<16x64xbf16>, vector<64x64xbf16>, vector<16x64xf32> -> vector<16x64xf32>
    %c0_99 = arith.constant 0 : index
    %c0_100 = arith.constant 0 : index
    %c0_101 = arith.constant 0 : index
    %156 = vector.load %arg8[%c0_99, %c0_100, %c0_101] : memref<1x1x64xf32, #tpu.memory_space<vmem>>, vector<1x1x64xf32>
    %157 = vector.shape_cast %156 : vector<1x1x64xf32> to vector<1x64xf32>
    %158 = vector.broadcast %157 : vector<1x64xf32> to vector<16x64xf32>
    %159 = arith.addf %155, %158 : vector<16x64xf32>
    %160 = arith.addf %159, %4 : vector<16x64xf32>
    %c0_102 = arith.constant 0 : index
    %c0_103 = arith.constant 0 : index
    %c0_104 = arith.constant 0 : index
    %161 = vector.load %arg9[%c0_102, %c0_103, %c0_104] : memref<1x1x64xf32, #tpu.memory_space<vmem>>, vector<1x1x64xf32>
    %162 = vector.shape_cast %161 : vector<1x1x64xf32> to vector<1x64xf32>
    %c0_105 = arith.constant 0 : index
    %c0_106 = arith.constant 0 : index
    %c0_107 = arith.constant 0 : index
    %163 = vector.load %arg10[%c0_105, %c0_106, %c0_107] : memref<1x1x64xf32, #tpu.memory_space<vmem>>, vector<1x1x64xf32>
    %164 = vector.shape_cast %163 : vector<1x1x64xf32> to vector<1x64xf32>
    %cst_108 = arith.constant dense<0.000000e+00> : vector<16xf32>
    %165 = vector.multi_reduction <add>, %160, %cst_108 [1] : vector<16x64xf32> to vector<16xf32>
    %166 = vector.shape_cast %165 : vector<16xf32> to vector<16x1xf32>
    %cst_109 = arith.constant 6.400000e+01 : f32
    %167 = vector.broadcast %cst_109 : f32 to vector<16x1xf32>
    %168 = arith.divf %166, %167 : vector<16x1xf32>
    %169 = vector.broadcast %168 : vector<16x1xf32> to vector<16x64xf32>
    %170 = arith.subf %160, %169 : vector<16x64xf32>
    %171 = vector.broadcast %168 : vector<16x1xf32> to vector<16x64xf32>
    %172 = arith.subf %160, %171 : vector<16x64xf32>
    %173 = arith.mulf %170, %172 : vector<16x64xf32>
    %cst_110 = arith.constant dense<0.000000e+00> : vector<16xf32>
    %174 = vector.multi_reduction <add>, %173, %cst_110 [1] : vector<16x64xf32> to vector<16xf32>
    %175 = vector.shape_cast %174 : vector<16xf32> to vector<16x1xf32>
    %cst_111 = arith.constant 6.400000e+01 : f32
    %176 = vector.broadcast %cst_111 : f32 to vector<16x1xf32>
    %177 = arith.divf %175, %176 : vector<16x1xf32>
    %178 = vector.broadcast %168 : vector<16x1xf32> to vector<16x64xf32>
    %179 = arith.subf %160, %178 : vector<16x64xf32>
    %cst_112 = arith.constant 9.99999974E-6 : f32
    %180 = vector.broadcast %cst_112 : f32 to vector<16x1xf32>
    %181 = arith.addf %177, %180 : vector<16x1xf32>
    %182 = math.rsqrt %181 : vector<16x1xf32>
    %183 = vector.broadcast %182 : vector<16x1xf32> to vector<16x64xf32>
    %184 = arith.mulf %179, %183 : vector<16x64xf32>
    %185 = vector.broadcast %162 : vector<1x64xf32> to vector<16x64xf32>
    %186 = arith.mulf %184, %185 : vector<16x64xf32>
    %187 = vector.broadcast %164 : vector<1x64xf32> to vector<16x64xf32>
    %188 = arith.addf %186, %187 : vector<16x64xf32>
    %189 = arith.truncf %188 : vector<16x64xf32> to vector<16x64xbf16>
    %c0_113 = arith.constant 0 : index
    %c0_114 = arith.constant 0 : index
    %c0_115 = arith.constant 0 : index
    %190 = vector.load %arg11[%c0_113, %c0_114, %c0_115] : memref<1x64x256xbf16, #tpu.memory_space<vmem>>, vector<1x64x256xbf16>
    %191 = vector.shape_cast %190 : vector<1x64x256xbf16> to vector<64x256xbf16>
    %cst_116 = arith.constant dense<0.000000e+00> : vector<16x256xf32>
    %192 = tpu.matmul %189, %191, %cst_116 {dimension_numbers = #tpu.dot_dimension_numbers<[1], [0], [0], [1], [0, 0, 1, 1], [], []>} : vector<16x64xbf16>, vector<64x256xbf16>, vector<16x256xf32> -> vector<16x256xf32>
    %c0_117 = arith.constant 0 : index
    %c0_118 = arith.constant 0 : index
    %c0_119 = arith.constant 0 : index
    %193 = vector.load %arg12[%c0_117, %c0_118, %c0_119] : memref<1x1x256xf32, #tpu.memory_space<vmem>>, vector<1x1x256xf32>
    %194 = vector.shape_cast %193 : vector<1x1x256xf32> to vector<1x256xf32>
    %195 = vector.broadcast %194 : vector<1x256xf32> to vector<16x256xf32>
    %196 = arith.addf %192, %195 : vector<16x256xf32>
    %cst_120 = arith.constant 1.702000e+00 : f32
    %197 = vector.broadcast %cst_120 : f32 to vector<16x256xf32>
    %198 = arith.mulf %197, %196 : vector<16x256xf32>
    %199 = arith.negf %198 : vector<16x256xf32>
    %200 = math.exp %199 : vector<16x256xf32>
    %cst_121 = arith.constant 1.000000e+00 : f32
    %201 = vector.broadcast %cst_121 : f32 to vector<16x256xf32>
    %202 = arith.addf %201, %200 : vector<16x256xf32>
    %203 = arith.divf %201, %202 : vector<16x256xf32>
    %204 = arith.mulf %196, %203 : vector<16x256xf32>
    %205 = arith.truncf %204 : vector<16x256xf32> to vector<16x256xbf16>
    %c0_122 = arith.constant 0 : index
    %c0_123 = arith.constant 0 : index
    %c0_124 = arith.constant 0 : index
    %206 = vector.load %arg13[%c0_122, %c0_123, %c0_124] : memref<1x256x64xbf16, #tpu.memory_space<vmem>>, vector<1x256x64xbf16>
    %207 = vector.shape_cast %206 : vector<1x256x64xbf16> to vector<256x64xbf16>
    %cst_125 = arith.constant dense<0.000000e+00> : vector<16x64xf32>
    %208 = tpu.matmul %205, %207, %cst_125 {dimension_numbers = #tpu.dot_dimension_numbers<[1], [0], [0], [1], [0, 0, 1, 1], [], []>} : vector<16x256xbf16>, vector<256x64xbf16>, vector<16x64xf32> -> vector<16x64xf32>
    %c0_126 = arith.constant 0 : index
    %c0_127 = arith.constant 0 : index
    %c0_128 = arith.constant 0 : index
    %209 = vector.load %arg14[%c0_126, %c0_127, %c0_128] : memref<1x1x64xf32, #tpu.memory_space<vmem>>, vector<1x1x64xf32>
    %210 = vector.shape_cast %209 : vector<1x1x64xf32> to vector<1x64xf32>
    %211 = vector.broadcast %210 : vector<1x64xf32> to vector<16x64xf32>
    %212 = arith.addf %208, %211 : vector<16x64xf32>
    %213 = arith.addf %212, %160 : vector<16x64xf32>
    %c11_i32 = arith.constant 11 : i32
    %214 = arith.cmpi eq, %arg1, %c11_i32 : i32
    %true = arith.constant true
    %215 = arith.xori %214, %true : i1
    %216 = arith.extui %215 : i1 to i32
    %c0_i32_129 = arith.constant 0 : i32
    %217 = arith.cmpi ne, %216, %c0_i32_129 : i32
    scf.if %217 {
      %220 = vector.shape_cast %213 : vector<16x64xf32> to vector<2x8x64xf32>
      %c0_131 = arith.constant 0 : index
      %c0_132 = arith.constant 0 : index
      %c0_133 = arith.constant 0 : index
      %221 = vector.load %arg17[%c0_131, %c0_132, %c0_133] : memref<2x8x64xf32, #tpu.memory_space<vmem>>, vector<2x8x64xf32>
      tpu.vector_store %arg17[%c0_131, %c0_132, %c0_133], %220 {strides = array<i32>} : memref<2x8x64xf32, #tpu.memory_space<vmem>>, vector<2x8x64xf32>,
    } else {
    }
    %218 = arith.extui %214 : i1 to i32
    %c0_i32_130 = arith.constant 0 : i32
    %219 = arith.cmpi ne, %218, %c0_i32_130 : i32
    scf.if %219 {
      %c0_131 = arith.constant 0 : index
      %c0_132 = arith.constant 0 : index
      %220 = vector.load %arg15[%c0_131, %c0_132] : memref<1x64xf32, #tpu.memory_space<vmem>>, vector<1x64xf32>
      %c0_133 = arith.constant 0 : index
      %c0_134 = arith.constant 0 : index
      %221 = vector.load %arg16[%c0_133, %c0_134] : memref<1x64xf32, #tpu.memory_space<vmem>>, vector<1x64xf32>
      %cst_135 = arith.constant dense<0.000000e+00> : vector<16xf32>
      %222 = vector.multi_reduction <add>, %213, %cst_135 [1] : vector<16x64xf32> to vector<16xf32>
      %223 = vector.shape_cast %222 : vector<16xf32> to vector<16x1xf32>
      %cst_136 = arith.constant 6.400000e+01 : f32
      %224 = vector.broadcast %cst_136 : f32 to vector<16x1xf32>
      %225 = arith.divf %223, %224 : vector<16x1xf32>
      %226 = vector.broadcast %225 : vector<16x1xf32> to vector<16x64xf32>
      %227 = arith.subf %213, %226 : vector<16x64xf32>
      %228 = vector.broadcast %225 : vector<16x1xf32> to vector<16x64xf32>
      %229 = arith.subf %213, %228 : vector<16x64xf32>
      %230 = arith.mulf %227, %229 : vector<16x64xf32>
      %cst_137 = arith.constant dense<0.000000e+00> : vector<16xf32>
      %231 = vector.multi_reduction <add>, %230, %cst_137 [1] : vector<16x64xf32> to vector<16xf32>
      %232 = vector.shape_cast %231 : vector<16xf32> to vector<16x1xf32>
      %cst_138 = arith.constant 6.400000e+01 : f32
      %233 = vector.broadcast %cst_138 : f32 to vector<16x1xf32>
      %234 = arith.divf %232, %233 : vector<16x1xf32>
      %235 = vector.broadcast %225 : vector<16x1xf32> to vector<16x64xf32>
      %236 = arith.subf %213, %235 : vector<16x64xf32>
      %cst_139 = arith.constant 9.99999974E-6 : f32
      %237 = vector.broadcast %cst_139 : f32 to vector<16x1xf32>
      %238 = arith.addf %234, %237 : vector<16x1xf32>
      %239 = math.rsqrt %238 : vector<16x1xf32>
      %240 = vector.broadcast %239 : vector<16x1xf32> to vector<16x64xf32>
      %241 = arith.mulf %236, %240 : vector<16x64xf32>
      %242 = vector.broadcast %220 : vector<1x64xf32> to vector<16x64xf32>
      %243 = arith.mulf %241, %242 : vector<16x64xf32>
      %244 = vector.broadcast %221 : vector<1x64xf32> to vector<16x64xf32>
      %245 = arith.addf %243, %244 : vector<16x64xf32>
      %246 = vector.shape_cast %245 : vector<16x64xf32> to vector<2x8x64xf32>
      %c0_140 = arith.constant 0 : index
      %c0_141 = arith.constant 0 : index
      %c0_142 = arith.constant 0 : index
      %247 = vector.load %arg17[%c0_140, %c0_141, %c0_142] : memref<2x8x64xf32, #tpu.memory_space<vmem>>, vector<2x8x64xf32>
      tpu.vector_store %arg17[%c0_140, %c0_141, %c0_142], %246 {strides = array<i32>} : memref<2x8x64xf32, #tpu.memory_space<vmem>>, vector<2x8x64xf32>,
    } else {
    }
    return
  }
  func.func @transform_0(%arg0: i32, %arg1: i32) -> (i32, i32, i32) {
    %c0_i32 = arith.constant 0 : i32
    %c0_i32_0 = arith.constant 0 : i32
    %c0_i32_1 = arith.constant 0 : i32
    return %arg0, %c0_i32, %c0_i32_0 : i32, i32, i32
  }
  func.func @transform_1(%arg0: i32, %arg1: i32) -> (i32, i32, i32) {
    %c0_i32 = arith.constant 0 : i32
    %c0_i32_0 = arith.constant 0 : i32
    %c0_i32_1 = arith.constant 0 : i32
    return %arg1, %c0_i32, %c0_i32_0 : i32, i32, i32
  }
  func.func @transform_2(%arg0: i32, %arg1: i32) -> (i32, i32, i32) {
    %c0_i32 = arith.constant 0 : i32
    %c0_i32_0 = arith.constant 0 : i32
    %c0_i32_1 = arith.constant 0 : i32
    return %arg1, %c0_i32, %c0_i32_0 : i32, i32, i32
  }
  func.func @transform_3(%arg0: i32, %arg1: i32) -> (i32, i32, i32) {
    %c0_i32 = arith.constant 0 : i32
    %c0_i32_0 = arith.constant 0 : i32
    %c0_i32_1 = arith.constant 0 : i32
    return %arg1, %c0_i32, %c0_i32_0 : i32, i32, i32
  }
  func.func @transform_4(%arg0: i32, %arg1: i32) -> (i32, i32, i32) {
    %c0_i32 = arith.constant 0 : i32
    %c0_i32_0 = arith.constant 0 : i32
    %c0_i32_1 = arith.constant 0 : i32
    return %arg1, %c0_i32, %c0_i32_0 : i32, i32, i32
  }
  func.func @transform_5(%arg0: i32, %arg1: i32) -> (i32, i32, i32) {
    %c0_i32 = arith.constant 0 : i32
    %c0_i32_0 = arith.constant 0 : i32
    %c0_i32_1 = arith.constant 0 : i32
    return %arg1, %c0_i32, %c0_i32_0 : i32, i32, i32
  }
  func.func @transform_6(%arg0: i32, %arg1: i32) -> (i32, i32, i32) {
    %c0_i32 = arith.constant 0 : i32
    %c0_i32_0 = arith.constant 0 : i32
    %c0_i32_1 = arith.constant 0 : i32
    return %arg1, %c0_i32, %c0_i32_0 : i32, i32, i32
  }
  func.func @transform_7(%arg0: i32, %arg1: i32) -> (i32, i32, i32) {
    %c0_i32 = arith.constant 0 : i32
    %c0_i32_0 = arith.constant 0 : i32
    %c0_i32_1 = arith.constant 0 : i32
    return %arg1, %c0_i32, %c0_i32_0 : i32, i32, i32
  }
  func.func @transform_8(%arg0: i32, %arg1: i32) -> (i32, i32, i32) {
    %c0_i32 = arith.constant 0 : i32
    %c0_i32_0 = arith.constant 0 : i32
    %c0_i32_1 = arith.constant 0 : i32
    return %arg1, %c0_i32, %c0_i32_0 : i32, i32, i32
  }
  func.func @transform_9(%arg0: i32, %arg1: i32) -> (i32, i32, i32) {
    %c0_i32 = arith.constant 0 : i32
    %c0_i32_0 = arith.constant 0 : i32
    %c0_i32_1 = arith.constant 0 : i32
    return %arg1, %c0_i32, %c0_i32_0 : i32, i32, i32
  }
  func.func @transform_10(%arg0: i32, %arg1: i32) -> (i32, i32, i32) {
    %c0_i32 = arith.constant 0 : i32
    %c0_i32_0 = arith.constant 0 : i32
    %c0_i32_1 = arith.constant 0 : i32
    return %arg1, %c0_i32, %c0_i32_0 : i32, i32, i32
  }
  func.func @transform_11(%arg0: i32, %arg1: i32) -> (i32, i32, i32) {
    %c0_i32 = arith.constant 0 : i32
    %c0_i32_0 = arith.constant 0 : i32
    %c0_i32_1 = arith.constant 0 : i32
    return %arg1, %c0_i32, %c0_i32_0 : i32, i32, i32
  }
  func.func @transform_12(%arg0: i32, %arg1: i32) -> (i32, i32, i32) {
    %c0_i32 = arith.constant 0 : i32
    %c0_i32_0 = arith.constant 0 : i32
    %c0_i32_1 = arith.constant 0 : i32
    return %arg1, %c0_i32, %c0_i32_0 : i32, i32, i32
  }
  func.func @transform_13(%arg0: i32, %arg1: i32) -> (i32, i32) {
    %c0_i32 = arith.constant 0 : i32
    %c0_i32_0 = arith.constant 0 : i32
    %c0_i32_1 = arith.constant 0 : i32
    return %c0_i32, %c0_i32_0 : i32, i32
  }
  func.func @transform_14(%arg0: i32, %arg1: i32) -> (i32, i32) {
    %c0_i32 = arith.constant 0 : i32
    %c0_i32_0 = arith.constant 0 : i32
    %c0_i32_1 = arith.constant 0 : i32
    return %c0_i32, %c0_i32_0 : i32, i32
  }
  func.func @transform_15(%arg0: i32, %arg1: i32) -> (i32, i32, i32) {
    %c0_i32 = arith.constant 0 : i32
    %c0_i32_0 = arith.constant 0 : i32
    %c0_i32_1 = arith.constant 0 : i32
    return %arg0, %c0_i32, %c0_i32_0 : i32, i32, i32
  }
}

</mosaic_0001>

<llo_original>
// kernel: clip_forward.2
$region0: #{clip_forward.2}
  #allocation0 [shape = 'u32[]', space=smem, size = 0x4, offset = 0x4, fixed_abs, tag = 'smem constant byte address 0x4 - core index']
  #allocation1 [shape = 'u32[144,128]{1,0:T(1,128)}', space=vmem, size = 0x12000, scoped, tag = 'internal scratch']
  #allocation2 [shape = 'f32[16,64]{1,0:T(8,128)}', space=vmem, size = 0x2000, scoped, tag = 'scratch operand']
  #allocation3 [shape = 's32[16]{0}', space=sflag, size = 0x40, scoped, tag = 'scratch operand']
  #allocation4 [shape = 's32[1]{0}', space=sflag, size = 0x4, scoped, tag = 'scoped memory for clip_forward.2']
  #allocation5 [shape = 'u8[512]{0}', space=smem, size = 0x200, scoped, tag = 'prefetched SMEM operand 0']
  #allocation6 [shape = 's32[]', space=sflag, size = 0x4, offset = 0, fixed_abs, tag = 'sflag constant byte address 0x0 - dummy sync flag']
  #allocation7 [shape = 's32[]', space=sflag, size = 0x4, offset = 0, fixed_abs, tag = 'sflag constant byte address 0x0 - dummy sync flag']
  #allocation8 [shape = 's32[]', space=sflag, size = 0x4, offset = 0, fixed_abs, tag = 'sflag constant byte address 0x0 - dummy sync flag']
  #allocation9 [shape = 's32[]', space=sflag, size = 0x4, offset = 0, fixed_abs, tag = 'sflag constant byte address 0x0 - dummy sync flag']
  #allocation10 [shape = 's32[]', space=sflag, size = 0x4, offset = 0, fixed_abs, tag = 'sflag constant byte address 0x0 - dummy sync flag']
  #allocation11 [shape = 's32[]', space=sflag, size = 0x4, offset = 0, fixed_abs, tag = 'sflag constant byte address 0x0 - dummy sync flag']
  #allocation12 [shape = 's32[]', space=sflag, size = 0x4, offset = 0, fixed_abs, tag = 'sflag constant byte address 0x0 - dummy sync flag']
  #allocation13 [shape = 's32[]', space=sflag, size = 0x4, offset = 0, fixed_abs, tag = 'sflag constant byte address 0x0 - dummy sync flag']
  #allocation14 [shape = 's32[]', space=sflag, size = 0x4, offset = 0, fixed_abs, tag = 'sflag constant byte address 0x0 - dummy sync flag']
  #allocation15 [shape = 's32[]', space=sflag, size = 0x4, offset = 0, fixed_abs, tag = 'sflag constant byte address 0x0 - dummy sync flag']
  #allocation16 [shape = 's32[]', space=sflag, size = 0x4, offset = 0, fixed_abs, tag = 'sflag constant byte address 0x0 - dummy sync flag']
  #allocation17 [shape = 's32[]', space=sflag, size = 0x4, offset = 0, fixed_abs, tag = 'sflag constant byte address 0x0 - dummy sync flag']
  #allocation18 [shape = 's32[]', space=sflag, size = 0x4, offset = 0, fixed_abs, tag = 'sflag constant byte address 0x0 - dummy sync flag']
  #allocation19 [shape = 's32[]', space=sflag, size = 0x4, offset = 0, fixed_abs, tag = 'sflag constant byte address 0x0 - dummy sync flag']
  #allocation20 [shape = 's32[]', space=sflag, size = 0x4, offset = 0, fixed_abs, tag = 'sflag constant byte address 0x0 - dummy sync flag']
  #allocation21 [shape = 's32[]', space=sflag, size = 0x4, offset = 0, fixed_abs, tag = 'sflag constant byte address 0x0 - dummy sync flag']
  %s0 = inlined_call_operand.vmem [shape: s32[16], index: 0, kind: input, shape index: {}]
  %s1 = inlined_call_operand.vmem [shape: f32[16,64], index: 1, kind: input, shape index: {}]
  %s2 = inlined_call_operand.vmem [shape: f32[64,64], index: 2, kind: input, shape index: {}]
  %s3 = inlined_call_operand.vmem [shape: f32[16,64], index: 3, kind: output, shape index: {}]
  %s4 = sld [smem:[#allocation0]]
  $region494: #{clip_forward.2} parent=0
    _
  %s6 = ssub.s32 1, %s4
  %s7 = scalar_select 0, %s6, %s4
  %s8 = sshll.u32 %s0, 4
  %s9 = int_to_ptr.vmem [resolvable:$true] %s8
  %11 = dma.vmem_to_smem %s9, 16, [#allocation5], [#allocation4]
  %12 = dma.done [#allocation4], 16
  %13 = sfence
  // Predicated region
  $region2: #{clip_forward.2} parent=0 // pred_check
    _
  $region3: #{clip_forward.2} parent=0 // pred_check_branch
    %15 = sbr.rel (0) target = $region5
  $region4: #{clip_forward.2} parent=0 // pred_region
    _
  $region5: #{clip_forward.2} parent=0 // pred_fallthru
    _
  %s16 = smul.u32 0, 16
  %s17 = sld [smem:[#allocation5 + %s16]]
  %s18 = scalar_lea.vmem %s2, %s17
  %p20 = scmp.lt.u32.totalorder 1, 8
  %p21 = pneg %p20
  // Predicated region
  $region6: #{clip_forward.2} parent=0 // pred_check
    _
  $region7: #{clip_forward.2} parent=0 // pred_check_branch
    %23 = sbr.rel (%p20) target = $region9
  $region8: #{clip_forward.2} parent=0 // pred_region
    %s38 = sand.u32 1, 7
    %p39 = scmp.eq.s32.totalorder %s38, 0
    %p40 = pneg %p39
    // Predicated region
    $region21: #{clip_forward.2} parent=8 // pred_check
      _
    $region22: #{clip_forward.2} parent=8 // pred_check_branch
      %42 = sbr.rel (%p39) target = $region24
    $region23: #{clip_forward.2} parent=8 // pred_region
      %s43 = sand.u32 1, 7
      %s44 = ssub.s32 1, %s43
      %s45 = scalar_lea.vmem %s18, %s44
      %s46 = ssub.s32 1, %s43
      %s47 = scalar_lea.vmem [#allocation2], %s46
      %s48 = sshllo.u32 0, %s43
      loop: start=0, step=1, limit=1
      $region25: #{clip_forward.2} parent=23 // loop_pre_header
        _
      $region26: #{clip_forward.2} parent=23 // loop_header
        %s50 = sphi 0, %s54
        %p51 = scmp.ge.s32.totalorder %s50, 1
        %s55 = sphi %s45, %s45
        %s56 = sphi %s47, %s47
      $region27: #{clip_forward.2} parent=23 // loop_header_branch
        %53 = sbr.rel (%p51) target = $region31
      $region28: #{clip_forward.2} parent=23 // loop_body
        %v57 = vld [vmem:[%s55] sm:%s48]
        %58 = vst [vmem:[%s56] sm:%s48] %v57
      $region29: #{clip_forward.2} parent=23 // loop_footer
        %s54 = sadd.s32 1, %s50
      $region30: #{clip_forward.2} parent=23 // loop_footer_branch
        %49 = sbr.rel target = $region26
      $region31: #{clip_forward.2} parent=23 // loop_exit
        _
    $region24: #{clip_forward.2} parent=8 // pred_fallthru
      _
  $region9: #{clip_forward.2} parent=0 // pred_fallthru
    _
  // Predicated region
  $region10: #{clip_forward.2} parent=0 // pred_check
    %p24 = pneg %p20
  $region11: #{clip_forward.2} parent=0 // pred_check_branch
    %26 = sbr.rel (%p24) target = $region13
  $region12: #{clip_forward.2} parent=0 // pred_region
    %s27 = sshllo.u32 0, 1
    loop: start=0, step=1, limit=1
    $region14: #{clip_forward.2} parent=12 // loop_pre_header
      _
    $region15: #{clip_forward.2} parent=12 // loop_header
      %s29 = sphi 0, %s33
      %p30 = scmp.ge.s32.totalorder %s29, 1
      %s34 = sphi %s18, %s18
      %s35 = sphi [#allocation2], [#allocation2]
    $region16: #{clip_forward.2} parent=12 // loop_header_branch
      %32 = sbr.rel (%p30) target = $region20
    $region17: #{clip_forward.2} parent=12 // loop_body
      %v36 = vld [vmem:[%s34] sm:%s27]
      %37 = vst [vmem:[%s35] sm:%s27] %v36
    $region18: #{clip_forward.2} parent=12 // loop_footer
      %s33 = sadd.s32 1, %s29
    $region19: #{clip_forward.2} parent=12 // loop_footer_branch
      %28 = sbr.rel target = $region15
    $region20: #{clip_forward.2} parent=12 // loop_exit
      _
  $region13: #{clip_forward.2} parent=0 // pred_fallthru
    _
  // Predicated region
  $region32: #{clip_forward.2} parent=0 // pred_check
    _
  $region33: #{clip_forward.2} parent=0 // pred_check_branch
    %61 = sbr.rel (0) target = $region35
  $region34: #{clip_forward.2} parent=0 // pred_region
    %62 = vsyncadd [#allocation3], 16
  $region35: #{clip_forward.2} parent=0 // pred_fallthru
    _
  %s63 = sadd.s32 %s16, 1
  %s64 = sld [smem:[#allocation5 + %s63]]
  %s65 = scalar_lea.vmem %s2, %s64
  %s66 = scalar_lea.vmem [#allocation2], 1
  %s67 = scalar_lea.sflag [#allocation3], 1
  %p69 = scmp.lt.u32.totalorder 1, 8
  %p70 = pneg %p69
  // Predicated region
  $region36: #{clip_forward.2} parent=0 // pred_check
    _
  $region37: #{clip_forward.2} parent=0 // pred_check_branch
    %72 = sbr.rel (%p69) target = $region39
  $region38: #{clip_forward.2} parent=0 // pred_region
    %s87 = sand.u32 1, 7
    %p88 = scmp.eq.s32.totalorder %s87, 0
    %p89 = pneg %p88
    // Predicated region
    $region51: #{clip_forward.2} parent=38 // pred_check
      _
    $region52: #{clip_forward.2} parent=38 // pred_check_branch
      %91 = sbr.rel (%p88) target = $region54
    $region53: #{clip_forward.2} parent=38 // pred_region
      %s92 = sand.u32 1, 7
      %s93 = ssub.s32 1, %s92
      %s94 = scalar_lea.vmem %s65, %s93
      %s95 = ssub.s32 1, %s92
      %s96 = scalar_lea.vmem %s66, %s95 [#allocation2]
      %s97 = sshllo.u32 0, %s92
      loop: start=0, step=1, limit=1
      $region55: #{clip_forward.2} parent=53 // loop_pre_header
        _
      $region56: #{clip_forward.2} parent=53 // loop_header
        %s99 = sphi 0, %s103
        %p100 = scmp.ge.s32.totalorder %s99, 1
        %s104 = sphi %s94, %s94
        %s105 = sphi %s96, %s96
      $region57: #{clip_forward.2} parent=53 // loop_header_branch
        %102 = sbr.rel (%p100) target = $region61
      $region58: #{clip_forward.2} parent=53 // loop_body
        %v106 = vld [vmem:[%s104] sm:%s97]
        %107 = vst [vmem:[%s105] sm:%s97] %v106
      $region59: #{clip_forward.2} parent=53 // loop_footer
        %s103 = sadd.s32 1, %s99
      $region60: #{clip_forward.2} parent=53 // loop_footer_branch
        %98 = sbr.rel target = $region56
      $region61: #{clip_forward.2} parent=53 // loop_exit
        _
    $region54: #{clip_forward.2} parent=38 // pred_fallthru
      _
  $region39: #{clip_forward.2} parent=0 // pred_fallthru
    _
  // Predicated region
  $region40: #{clip_forward.2} parent=0 // pred_check
    %p73 = pneg %p69
  $region41: #{clip_forward.2} parent=0 // pred_check_branch
    %75 = sbr.rel (%p73) target = $region43
  $region42: #{clip_forward.2} parent=0 // pred_region
    %s76 = sshllo.u32 0, 1
    loop: start=0, step=1, limit=1
    $region44: #{clip_forward.2} parent=42 // loop_pre_header
      _
    $region45: #{clip_forward.2} parent=42 // loop_header
      %s78 = sphi 0, %s82
      %p79 = scmp.ge.s32.totalorder %s78, 1
      %s83 = sphi %s65, %s65
      %s84 = sphi %s66, %s66
    $region46: #{clip_forward.2} parent=42 // loop_header_branch
      %81 = sbr.rel (%p79) target = $region50
    $region47: #{clip_forward.2} parent=42 // loop_body
      %v85 = vld [vmem:[%s83] sm:%s76]
      %86 = vst [vmem:[%s84] sm:%s76] %v85
    $region48: #{clip_forward.2} parent=42 // loop_footer
      %s82 = sadd.s32 1, %s78
    $region49: #{clip_forward.2} parent=42 // loop_footer_branch
      %77 = sbr.rel target = $region45
    $region50: #{clip_forward.2} parent=42 // loop_exit
      _
  $region43: #{clip_forward.2} parent=0 // pred_fallthru
    _
  // Predicated region
  $region62: #{clip_forward.2} parent=0 // pred_check
    _
  $region63: #{clip_forward.2} parent=0 // pred_check_branch
    %110 = sbr.rel (0) target = $region65
  $region64: #{clip_forward.2} parent=0 // pred_region
    %111 = vsyncadd %s67, 16
  $region65: #{clip_forward.2} parent=0 // pred_fallthru
    _
  %s112 = sadd.s32 %s16, 2
  %s113 = sld [smem:[#allocation5 + %s112]]
  %s114 = scalar_lea.vmem %s2, %s113
  %s115 = scalar_lea.vmem [#allocation2], 2
  %s116 = scalar_lea.sflag [#allocation3], 2
  %p118 = scmp.lt.u32.totalorder 1, 8
  %p119 = pneg %p118
  // Predicated region
  $region66: #{clip_forward.2} parent=0 // pred_check
    _
  $region67: #{clip_forward.2} parent=0 // pred_check_branch
    %121 = sbr.rel (%p118) target = $region69
  $region68: #{clip_forward.2} parent=0 // pred_region
    %s136 = sand.u32 1, 7
    %p137 = scmp.eq.s32.totalorder %s136, 0
    %p138 = pneg %p137
    // Predicated region
    $region81: #{clip_forward.2} parent=68 // pred_check
      _
    $region82: #{clip_forward.2} parent=68 // pred_check_branch
      %140 = sbr.rel (%p137) target = $region84
    $region83: #{clip_forward.2} parent=68 // pred_region
      %s141 = sand.u32 1, 7
      %s142 = ssub.s32 1, %s141
      %s143 = scalar_lea.vmem %s114, %s142
      %s144 = ssub.s32 1, %s141
      %s145 = scalar_lea.vmem %s115, %s144 [#allocation2]
      %s146 = sshllo.u32 0, %s141
      loop: start=0, step=1, limit=1
      $region85: #{clip_forward.2} parent=83 // loop_pre_header
        _
      $region86: #{clip_forward.2} parent=83 // loop_header
        %s148 = sphi 0, %s152
        %p149 = scmp.ge.s32.totalorder %s148, 1
        %s153 = sphi %s143, %s143
        %s154 = sphi %s145, %s145
      $region87: #{clip_forward.2} parent=83 // loop_header_branch
        %151 = sbr.rel (%p149) target = $region91
      $region88: #{clip_forward.2} parent=83 // loop_body
        %v155 = vld [vmem:[%s153] sm:%s146]
        %156 = vst [vmem:[%s154] sm:%s146] %v155
      $region89: #{clip_forward.2} parent=83 // loop_footer
        %s152 = sadd.s32 1, %s148
      $region90: #{clip_forward.2} parent=83 // loop_footer_branch
        %147 = sbr.rel target = $region86
      $region91: #{clip_forward.2} parent=83 // loop_exit
        _
    $region84: #{clip_forward.2} parent=68 // pred_fallthru
      _
  $region69: #{clip_forward.2} parent=0 // pred_fallthru
    _
  // Predicated region
  $region70: #{clip_forward.2} parent=0 // pred_check
    %p122 = pneg %p118
  $region71: #{clip_forward.2} parent=0 // pred_check_branch
    %124 = sbr.rel (%p122) target = $region73
  $region72: #{clip_forward.2} parent=0 // pred_region
    %s125 = sshllo.u32 0, 1
    loop: start=0, step=1, limit=1
    $region74: #{clip_forward.2} parent=72 // loop_pre_header
      _
    $region75: #{clip_forward.2} parent=72 // loop_header
      %s127 = sphi 0, %s131
      %p128 = scmp.ge.s32.totalorder %s127, 1
      %s132 = sphi %s114, %s114
      %s133 = sphi %s115, %s115
    $region76: #{clip_forward.2} parent=72 // loop_header_branch
      %130 = sbr.rel (%p128) target = $region80
    $region77: #{clip_forward.2} parent=72 // loop_body
      %v134 = vld [vmem:[%s132] sm:%s125]
      %135 = vst [vmem:[%s133] sm:%s125] %v134
    $region78: #{clip_forward.2} parent=72 // loop_footer
      %s131 = sadd.s32 1, %s127
    $region79: #{clip_forward.2} parent=72 // loop_footer_branch
      %126 = sbr.rel target = $region75
    $region80: #{clip_forward.2} parent=72 // loop_exit
      _
  $region73: #{clip_forward.2} parent=0 // pred_fallthru
    _
  // Predicated region
  $region92: #{clip_forward.2} parent=0 // pred_check
    _
  $region93: #{clip_forward.2} parent=0 // pred_check_branch
    %159 = sbr.rel (0) target = $region95
  $region94: #{clip_forward.2} parent=0 // pred_region
    %160 = vsyncadd %s116, 16
  $region95: #{clip_forward.2} parent=0 // pred_fallthru
    _
  %s161 = sadd.s32 %s16, 3
  %s162 = sld [smem:[#allocation5 + %s161]]
  %s163 = scalar_lea.vmem %s2, %s162
  %s164 = scalar_lea.vmem [#allocation2], 3
  %s165 = scalar_lea.sflag [#allocation3], 3
  %p167 = scmp.lt.u32.totalorder 1, 8
  %p168 = pneg %p167
  // Predicated region
  $region96: #{clip_forward.2} parent=0 // pred_check
    _
  $region97: #{clip_forward.2} parent=0 // pred_check_branch
    %170 = sbr.rel (%p167) target = $region99
  $region98: #{clip_forward.2} parent=0 // pred_region
    %s185 = sand.u32 1, 7
    %p186 = scmp.eq.s32.totalorder %s185, 0
    %p187 = pneg %p186
    // Predicated region
    $region111: #{clip_forward.2} parent=98 // pred_check
      _
    $region112: #{clip_forward.2} parent=98 // pred_check_branch
      %189 = sbr.rel (%p186) target = $region114
    $region113: #{clip_forward.2} parent=98 // pred_region
      %s190 = sand.u32 1, 7
      %s191 = ssub.s32 1, %s190
      %s192 = scalar_lea.vmem %s163, %s191
      %s193 = ssub.s32 1, %s190
      %s194 = scalar_lea.vmem %s164, %s193 [#allocation2]
      %s195 = sshllo.u32 0, %s190
      loop: start=0, step=1, limit=1
      $region115: #{clip_forward.2} parent=113 // loop_pre_header
        _
      $region116: #{clip_forward.2} parent=113 // loop_header
        %s197 = sphi 0, %s201
        %p198 = scmp.ge.s32.totalorder %s197, 1
        %s202 = sphi %s192, %s192
        %s203 = sphi %s194, %s194
      $region117: #{clip_forward.2} parent=113 // loop_header_branch
        %200 = sbr.rel (%p198) target = $region121
      $region118: #{clip_forward.2} parent=113 // loop_body
        %v204 = vld [vmem:[%s202] sm:%s195]
        %205 = vst [vmem:[%s203] sm:%s195] %v204
      $region119: #{clip_forward.2} parent=113 // loop_footer
        %s201 = sadd.s32 1, %s197
      $region120: #{clip_forward.2} parent=113 // loop_footer_branch
        %196 = sbr.rel target = $region116
      $region121: #{clip_forward.2} parent=113 // loop_exit
        _
    $region114: #{clip_forward.2} parent=98 // pred_fallthru
      _
  $region99: #{clip_forward.2} parent=0 // pred_fallthru
    _
  // Predicated region
  $region100: #{clip_forward.2} parent=0 // pred_check
    %p171 = pneg %p167
  $region101: #{clip_forward.2} parent=0 // pred_check_branch
    %173 = sbr.rel (%p171) target = $region103
  $region102: #{clip_forward.2} parent=0 // pred_region
    %s174 = sshllo.u32 0, 1
    loop: start=0, step=1, limit=1
    $region104: #{clip_forward.2} parent=102 // loop_pre_header
      _
    $region105: #{clip_forward.2} parent=102 // loop_header
      %s176 = sphi 0, %s180
      %p177 = scmp.ge.s32.totalorder %s176, 1
      %s181 = sphi %s163, %s163
      %s182 = sphi %s164, %s164
    $region106: #{clip_forward.2} parent=102 // loop_header_branch
      %179 = sbr.rel (%p177) target = $region110
    $region107: #{clip_forward.2} parent=102 // loop_body
      %v183 = vld [vmem:[%s181] sm:%s174]
      %184 = vst [vmem:[%s182] sm:%s174] %v183
    $region108: #{clip_forward.2} parent=102 // loop_footer
      %s180 = sadd.s32 1, %s176
    $region109: #{clip_forward.2} parent=102 // loop_footer_branch
      %175 = sbr.rel target = $region105
    $region110: #{clip_forward.2} parent=102 // loop_exit
      _
  $region103: #{clip_forward.2} parent=0 // pred_fallthru
    _
  // Predicated region
  $region122: #{clip_forward.2} parent=0 // pred_check
    _
  $region123: #{clip_forward.2} parent=0 // pred_check_branch
    %208 = sbr.rel (0) target = $region125
  $region124: #{clip_forward.2} parent=0 // pred_region
    %209 = vsyncadd %s165, 16
  $region125: #{clip_forward.2} parent=0 // pred_fallthru
    _
  %s210 = sadd.s32 %s16, 4
  %s211 = sld [smem:[#allocation5 + %s210]]
  %s212 = scalar_lea.vmem %s2, %s211
  %s213 = scalar_lea.vmem [#allocation2], 4
  %s214 = scalar_lea.sflag [#allocation3], 4
  %p216 = scmp.lt.u32.totalorder 1, 8
  %p217 = pneg %p216
  // Predicated region
  $region126: #{clip_forward.2} parent=0 // pred_check
    _
  $region127: #{clip_forward.2} parent=0 // pred_check_branch
    %219 = sbr.rel (%p216) target = $region129
  $region128: #{clip_forward.2} parent=0 // pred_region
    %s234 = sand.u32 1, 7
    %p235 = scmp.eq.s32.totalorder %s234, 0
    %p236 = pneg %p235
    // Predicated region
    $region141: #{clip_forward.2} parent=128 // pred_check
      _
    $region142: #{clip_forward.2} parent=128 // pred_check_branch
      %238 = sbr.rel (%p235) target = $region144
    $region143: #{clip_forward.2} parent=128 // pred_region
      %s239 = sand.u32 1, 7
      %s240 = ssub.s32 1, %s239
      %s241 = scalar_lea.vmem %s212, %s240
      %s242 = ssub.s32 1, %s239
      %s243 = scalar_lea.vmem %s213, %s242 [#allocation2]
      %s244 = sshllo.u32 0, %s239
      loop: start=0, step=1, limit=1
      $region145: #{clip_forward.2} parent=143 // loop_pre_header
        _
      $region146: #{clip_forward.2} parent=143 // loop_header
        %s246 = sphi 0, %s250
        %p247 = scmp.ge.s32.totalorder %s246, 1
        %s251 = sphi %s241, %s241
        %s252 = sphi %s243, %s243
      $region147: #{clip_forward.2} parent=143 // loop_header_branch
        %249 = sbr.rel (%p247) target = $region151
      $region148: #{clip_forward.2} parent=143 // loop_body
        %v253 = vld [vmem:[%s251] sm:%s244]
        %254 = vst [vmem:[%s252] sm:%s244] %v253
      $region149: #{clip_forward.2} parent=143 // loop_footer
        %s250 = sadd.s32 1, %s246
      $region150: #{clip_forward.2} parent=143 // loop_footer_branch
        %245 = sbr.rel target = $region146
      $region151: #{clip_forward.2} parent=143 // loop_exit
        _
    $region144: #{clip_forward.2} parent=128 // pred_fallthru
      _
  $region129: #{clip_forward.2} parent=0 // pred_fallthru
    _
  // Predicated region
  $region130: #{clip_forward.2} parent=0 // pred_check
    %p220 = pneg %p216
  $region131: #{clip_forward.2} parent=0 // pred_check_branch
    %222 = sbr.rel (%p220) target = $region133
  $region132: #{clip_forward.2} parent=0 // pred_region
    %s223 = sshllo.u32 0, 1
    loop: start=0, step=1, limit=1
    $region134: #{clip_forward.2} parent=132 // loop_pre_header
      _
    $region135: #{clip_forward.2} parent=132 // loop_header
      %s225 = sphi 0, %s229
      %p226 = scmp.ge.s32.totalorder %s225, 1
      %s230 = sphi %s212, %s212
      %s231 = sphi %s213, %s213
    $region136: #{clip_forward.2} parent=132 // loop_header_branch
      %228 = sbr.rel (%p226) target = $region140
    $region137: #{clip_forward.2} parent=132 // loop_body
      %v232 = vld [vmem:[%s230] sm:%s223]
      %233 = vst [vmem:[%s231] sm:%s223] %v232
    $region138: #{clip_forward.2} parent=132 // loop_footer
      %s229 = sadd.s32 1, %s225
    $region139: #{clip_forward.2} parent=132 // loop_footer_branch
      %224 = sbr.rel target = $region135
    $region140: #{clip_forward.2} parent=132 // loop_exit
      _
  $region133: #{clip_forward.2} parent=0 // pred_fallthru
    _
  // Predicated region
  $region152: #{clip_forward.2} parent=0 // pred_check
    _
  $region153: #{clip_forward.2} parent=0 // pred_check_branch
    %257 = sbr.rel (0) target = $region155
  $region154: #{clip_forward.2} parent=0 // pred_region
    %258 = vsyncadd %s214, 16
  $region155: #{clip_forward.2} parent=0 // pred_fallthru
    _
  %s259 = sadd.s32 %s16, 5
  %s260 = sld [smem:[#allocation5 + %s259]]
  %s261 = scalar_lea.vmem %s2, %s260
  %s262 = scalar_lea.vmem [#allocation2], 5
  %s263 = scalar_lea.sflag [#allocation3], 5
  %p265 = scmp.lt.u32.totalorder 1, 8
  %p266 = pneg %p265
  // Predicated region
  $region156: #{clip_forward.2} parent=0 // pred_check
    _
  $region157: #{clip_forward.2} parent=0 // pred_check_branch
    %268 = sbr.rel (%p265) target = $region159
  $region158: #{clip_forward.2} parent=0 // pred_region
    %s283 = sand.u32 1, 7
    %p284 = scmp.eq.s32.totalorder %s283, 0
    %p285 = pneg %p284
    // Predicated region
    $region171: #{clip_forward.2} parent=158 // pred_check
      _
    $region172: #{clip_forward.2} parent=158 // pred_check_branch
      %287 = sbr.rel (%p284) target = $region174
    $region173: #{clip_forward.2} parent=158 // pred_region
      %s288 = sand.u32 1, 7
      %s289 = ssub.s32 1, %s288
      %s290 = scalar_lea.vmem %s261, %s289
      %s291 = ssub.s32 1, %s288
      %s292 = scalar_lea.vmem %s262, %s291 [#allocation2]
      %s293 = sshllo.u32 0, %s288
      loop: start=0, step=1, limit=1
      $region175: #{clip_forward.2} parent=173 // loop_pre_header
        _
      $region176: #{clip_forward.2} parent=173 // loop_header
        %s295 = sphi 0, %s299
        %p296 = scmp.ge.s32.totalorder %s295, 1
        %s300 = sphi %s290, %s290
        %s301 = sphi %s292, %s292
      $region177: #{clip_forward.2} parent=173 // loop_header_branch
        %298 = sbr.rel (%p296) target = $region181
      $region178: #{clip_forward.2} parent=173 // loop_body
        %v302 = vld [vmem:[%s300] sm:%s293]
        %303 = vst [vmem:[%s301] sm:%s293] %v302
      $region179: #{clip_forward.2} parent=173 // loop_footer
        %s299 = sadd.s32 1, %s295
      $region180: #{clip_forward.2} parent=173 // loop_footer_branch
        %294 = sbr.rel target = $region176
      $region181: #{clip_forward.2} parent=173 // loop_exit
        _
    $region174: #{clip_forward.2} parent=158 // pred_fallthru
      _
  $region159: #{clip_forward.2} parent=0 // pred_fallthru
    _
  // Predicated region
  $region160: #{clip_forward.2} parent=0 // pred_check
    %p269 = pneg %p265
  $region161: #{clip_forward.2} parent=0 // pred_check_branch
    %271 = sbr.rel (%p269) target = $region163
  $region162: #{clip_forward.2} parent=0 // pred_region
    %s272 = sshllo.u32 0, 1
    loop: start=0, step=1, limit=1
    $region164: #{clip_forward.2} parent=162 // loop_pre_header
      _
    $region165: #{clip_forward.2} parent=162 // loop_header
      %s274 = sphi 0, %s278
      %p275 = scmp.ge.s32.totalorder %s274, 1
      %s279 = sphi %s261, %s261
      %s280 = sphi %s262, %s262
    $region166: #{clip_forward.2} parent=162 // loop_header_branch
      %277 = sbr.rel (%p275) target = $region170
    $region167: #{clip_forward.2} parent=162 // loop_body
      %v281 = vld [vmem:[%s279] sm:%s272]
      %282 = vst [vmem:[%s280] sm:%s272] %v281
    $region168: #{clip_forward.2} parent=162 // loop_footer
      %s278 = sadd.s32 1, %s274
    $region169: #{clip_forward.2} parent=162 // loop_footer_branch
      %273 = sbr.rel target = $region165
    $region170: #{clip_forward.2} parent=162 // loop_exit
      _
  $region163: #{clip_forward.2} parent=0 // pred_fallthru
    _
  // Predicated region
  $region182: #{clip_forward.2} parent=0 // pred_check
    _
  $region183: #{clip_forward.2} parent=0 // pred_check_branch
    %306 = sbr.rel (0) target = $region185
  $region184: #{clip_forward.2} parent=0 // pred_region
    %307 = vsyncadd %s263, 16
  $region185: #{clip_forward.2} parent=0 // pred_fallthru
    _
  %s308 = sadd.s32 %s16, 6
  %s309 = sld [smem:[#allocation5 + %s308]]
  %s310 = scalar_lea.vmem %s2, %s309
  %s311 = scalar_lea.vmem [#allocation2], 6
  %s312 = scalar_lea.sflag [#allocation3], 6
  %p314 = scmp.lt.u32.totalorder 1, 8
  %p315 = pneg %p314
  // Predicated region
  $region186: #{clip_forward.2} parent=0 // pred_check
    _
  $region187: #{clip_forward.2} parent=0 // pred_check_branch
    %317 = sbr.rel (%p314) target = $region189
  $region188: #{clip_forward.2} parent=0 // pred_region
    %s332 = sand.u32 1, 7
    %p333 = scmp.eq.s32.totalorder %s332, 0
    %p334 = pneg %p333
    // Predicated region
    $region201: #{clip_forward.2} parent=188 // pred_check
      _
    $region202: #{clip_forward.2} parent=188 // pred_check_branch
      %336 = sbr.rel (%p333) target = $region204
    $region203: #{clip_forward.2} parent=188 // pred_region
      %s337 = sand.u32 1, 7
      %s338 = ssub.s32 1, %s337
      %s339 = scalar_lea.vmem %s310, %s338
      %s340 = ssub.s32 1, %s337
      %s341 = scalar_lea.vmem %s311, %s340 [#allocation2]
      %s342 = sshllo.u32 0, %s337
      loop: start=0, step=1, limit=1
      $region205: #{clip_forward.2} parent=203 // loop_pre_header
        _
      $region206: #{clip_forward.2} parent=203 // loop_header
        %s344 = sphi 0, %s348
        %p345 = scmp.ge.s32.totalorder %s344, 1
        %s349 = sphi %s339, %s339
        %s350 = sphi %s341, %s341
      $region207: #{clip_forward.2} parent=203 // loop_header_branch
        %347 = sbr.rel (%p345) target = $region211
      $region208: #{clip_forward.2} parent=203 // loop_body
        %v351 = vld [vmem:[%s349] sm:%s342]
        %352 = vst [vmem:[%s350] sm:%s342] %v351
      $region209: #{clip_forward.2} parent=203 // loop_footer
        %s348 = sadd.s32 1, %s344
      $region210: #{clip_forward.2} parent=203 // loop_footer_branch
        %343 = sbr.rel target = $region206
      $region211: #{clip_forward.2} parent=203 // loop_exit
        _
    $region204: #{clip_forward.2} parent=188 // pred_fallthru
      _
  $region189: #{clip_forward.2} parent=0 // pred_fallthru
    _
  // Predicated region
  $region190: #{clip_forward.2} parent=0 // pred_check
    %p318 = pneg %p314
  $region191: #{clip_forward.2} parent=0 // pred_check_branch
    %320 = sbr.rel (%p318) target = $region193
  $region192: #{clip_forward.2} parent=0 // pred_region
    %s321 = sshllo.u32 0, 1
    loop: start=0, step=1, limit=1
    $region194: #{clip_forward.2} parent=192 // loop_pre_header
      _
    $region195: #{clip_forward.2} parent=192 // loop_header
      %s323 = sphi 0, %s327
      %p324 = scmp.ge.s32.totalorder %s323, 1
      %s328 = sphi %s310, %s310
      %s329 = sphi %s311, %s311
    $region196: #{clip_forward.2} parent=192 // loop_header_branch
      %326 = sbr.rel (%p324) target = $region200
    $region197: #{clip_forward.2} parent=192 // loop_body
      %v330 = vld [vmem:[%s328] sm:%s321]
      %331 = vst [vmem:[%s329] sm:%s321] %v330
    $region198: #{clip_forward.2} parent=192 // loop_footer
      %s327 = sadd.s32 1, %s323
    $region199: #{clip_forward.2} parent=192 // loop_footer_branch
      %322 = sbr.rel target = $region195
    $region200: #{clip_forward.2} parent=192 // loop_exit
      _
  $region193: #{clip_forward.2} parent=0 // pred_fallthru
    _
  // Predicated region
  $region212: #{clip_forward.2} parent=0 // pred_check
    _
  $region213: #{clip_forward.2} parent=0 // pred_check_branch
    %355 = sbr.rel (0) target = $region215
  $region214: #{clip_forward.2} parent=0 // pred_region
    %356 = vsyncadd %s312, 16
  $region215: #{clip_forward.2} parent=0 // pred_fallthru
    _
  %s357 = sadd.s32 %s16, 7
  %s358 = sld [smem:[#allocation5 + %s357]]
  %s359 = scalar_lea.vmem %s2, %s358
  %s360 = scalar_lea.vmem [#allocation2], 7
  %s361 = scalar_lea.sflag [#allocation3], 7
  %p363 = scmp.lt.u32.totalorder 1, 8
  %p364 = pneg %p363
  // Predicated region
  $region216: #{clip_forward.2} parent=0 // pred_check
    _
  $region217: #{clip_forward.2} parent=0 // pred_check_branch
    %366 = sbr.rel (%p363) target = $region219
  $region218: #{clip_forward.2} parent=0 // pred_region
    %s381 = sand.u32 1, 7
    %p382 = scmp.eq.s32.totalorder %s381, 0
    %p383 = pneg %p382
    // Predicated region
    $region231: #{clip_forward.2} parent=218 // pred_check
      _
    $region232: #{clip_forward.2} parent=218 // pred_check_branch
      %385 = sbr.rel (%p382) target = $region234
    $region233: #{clip_forward.2} parent=218 // pred_region
      %s386 = sand.u32 1, 7
      %s387 = ssub.s32 1, %s386
      %s388 = scalar_lea.vmem %s359, %s387
      %s389 = ssub.s32 1, %s386
      %s390 = scalar_lea.vmem %s360, %s389 [#allocation2]
      %s391 = sshllo.u32 0, %s386
      loop: start=0, step=1, limit=1
      $region235: #{clip_forward.2} parent=233 // loop_pre_header
        _
      $region236: #{clip_forward.2} parent=233 // loop_header
        %s393 = sphi 0, %s397
        %p394 = scmp.ge.s32.totalorder %s393, 1
        %s398 = sphi %s388, %s388
        %s399 = sphi %s390, %s390
      $region237: #{clip_forward.2} parent=233 // loop_header_branch
        %396 = sbr.rel (%p394) target = $region241
      $region238: #{clip_forward.2} parent=233 // loop_body
        %v400 = vld [vmem:[%s398] sm:%s391]
        %401 = vst [vmem:[%s399] sm:%s391] %v400
      $region239: #{clip_forward.2} parent=233 // loop_footer
        %s397 = sadd.s32 1, %s393
      $region240: #{clip_forward.2} parent=233 // loop_footer_branch
        %392 = sbr.rel target = $region236
      $region241: #{clip_forward.2} parent=233 // loop_exit
        _
    $region234: #{clip_forward.2} parent=218 // pred_fallthru
      _
  $region219: #{clip_forward.2} parent=0 // pred_fallthru
    _
  // Predicated region
  $region220: #{clip_forward.2} parent=0 // pred_check
    %p367 = pneg %p363
  $region221: #{clip_forward.2} parent=0 // pred_check_branch
    %369 = sbr.rel (%p367) target = $region223
  $region222: #{clip_forward.2} parent=0 // pred_region
    %s370 = sshllo.u32 0, 1
    loop: start=0, step=1, limit=1
    $region224: #{clip_forward.2} parent=222 // loop_pre_header
      _
    $region225: #{clip_forward.2} parent=222 // loop_header
      %s372 = sphi 0, %s376
      %p373 = scmp.ge.s32.totalorder %s372, 1
      %s377 = sphi %s359, %s359
      %s378 = sphi %s360, %s360
    $region226: #{clip_forward.2} parent=222 // loop_header_branch
      %375 = sbr.rel (%p373) target = $region230
    $region227: #{clip_forward.2} parent=222 // loop_body
      %v379 = vld [vmem:[%s377] sm:%s370]
      %380 = vst [vmem:[%s378] sm:%s370] %v379
    $region228: #{clip_forward.2} parent=222 // loop_footer
      %s376 = sadd.s32 1, %s372
    $region229: #{clip_forward.2} parent=222 // loop_footer_branch
      %371 = sbr.rel target = $region225
    $region230: #{clip_forward.2} parent=222 // loop_exit
      _
  $region223: #{clip_forward.2} parent=0 // pred_fallthru
    _
  // Predicated region
  $region242: #{clip_forward.2} parent=0 // pred_check
    _
  $region243: #{clip_forward.2} parent=0 // pred_check_branch
    %404 = sbr.rel (0) target = $region245
  $region244: #{clip_forward.2} parent=0 // pred_region
    %405 = vsyncadd %s361, 16
  $region245: #{clip_forward.2} parent=0 // pred_fallthru
    _
  %s406 = sadd.s32 %s16, 8
  %s407 = sld [smem:[#allocation5 + %s406]]
  %s408 = scalar_lea.vmem %s2, %s407
  %s409 = scalar_lea.vmem [#allocation2], 8
  %s410 = scalar_lea.sflag [#allocation3], 8
  %p412 = scmp.lt.u32.totalorder 1, 8
  %p413 = pneg %p412
  // Predicated region
  $region246: #{clip_forward.2} parent=0 // pred_check
    _
  $region247: #{clip_forward.2} parent=0 // pred_check_branch
    %415 = sbr.rel (%p412) target = $region249
  $region248: #{clip_forward.2} parent=0 // pred_region
    %s430 = sand.u32 1, 7
    %p431 = scmp.eq.s32.totalorder %s430, 0
    %p432 = pneg %p431
    // Predicated region
    $region261: #{clip_forward.2} parent=248 // pred_check
      _
    $region262: #{clip_forward.2} parent=248 // pred_check_branch
      %434 = sbr.rel (%p431) target = $region264
    $region263: #{clip_forward.2} parent=248 // pred_region
      %s435 = sand.u32 1, 7
      %s436 = ssub.s32 1, %s435
      %s437 = scalar_lea.vmem %s408, %s436
      %s438 = ssub.s32 1, %s435
      %s439 = scalar_lea.vmem %s409, %s438 [#allocation2]
      %s440 = sshllo.u32 0, %s435
      loop: start=0, step=1, limit=1
      $region265: #{clip_forward.2} parent=263 // loop_pre_header
        _
      $region266: #{clip_forward.2} parent=263 // loop_header
        %s442 = sphi 0, %s446
        %p443 = scmp.ge.s32.totalorder %s442, 1
        %s447 = sphi %s437, %s437
        %s448 = sphi %s439, %s439
      $region267: #{clip_forward.2} parent=263 // loop_header_branch
        %445 = sbr.rel (%p443) target = $region271
      $region268: #{clip_forward.2} parent=263 // loop_body
        %v449 = vld [vmem:[%s447] sm:%s440]
        %450 = vst [vmem:[%s448] sm:%s440] %v449
      $region269: #{clip_forward.2} parent=263 // loop_footer
        %s446 = sadd.s32 1, %s442
      $region270: #{clip_forward.2} parent=263 // loop_footer_branch
        %441 = sbr.rel target = $region266
      $region271: #{clip_forward.2} parent=263 // loop_exit
        _
    $region264: #{clip_forward.2} parent=248 // pred_fallthru
      _
  $region249: #{clip_forward.2} parent=0 // pred_fallthru
    _
  // Predicated region
  $region250: #{clip_forward.2} parent=0 // pred_check
    %p416 = pneg %p412
  $region251: #{clip_forward.2} parent=0 // pred_check_branch
    %418 = sbr.rel (%p416) target = $region253
  $region252: #{clip_forward.2} parent=0 // pred_region
    %s419 = sshllo.u32 0, 1
    loop: start=0, step=1, limit=1
    $region254: #{clip_forward.2} parent=252 // loop_pre_header
      _
    $region255: #{clip_forward.2} parent=252 // loop_header
      %s421 = sphi 0, %s425
      %p422 = scmp.ge.s32.totalorder %s421, 1
      %s426 = sphi %s408, %s408
      %s427 = sphi %s409, %s409
    $region256: #{clip_forward.2} parent=252 // loop_header_branch
      %424 = sbr.rel (%p422) target = $region260
    $region257: #{clip_forward.2} parent=252 // loop_body
      %v428 = vld [vmem:[%s426] sm:%s419]
      %429 = vst [vmem:[%s427] sm:%s419] %v428
    $region258: #{clip_forward.2} parent=252 // loop_footer
      %s425 = sadd.s32 1, %s421
    $region259: #{clip_forward.2} parent=252 // loop_footer_branch
      %420 = sbr.rel target = $region255
    $region260: #{clip_forward.2} parent=252 // loop_exit
      _
  $region253: #{clip_forward.2} parent=0 // pred_fallthru
    _
  // Predicated region
  $region272: #{clip_forward.2} parent=0 // pred_check
    _
  $region273: #{clip_forward.2} parent=0 // pred_check_branch
    %453 = sbr.rel (0) target = $region275
  $region274: #{clip_forward.2} parent=0 // pred_region
    %454 = vsyncadd %s410, 16
  $region275: #{clip_forward.2} parent=0 // pred_fallthru
    _
  %s455 = sadd.s32 %s16, 9
  %s456 = sld [smem:[#allocation5 + %s455]]
  %s457 = scalar_lea.vmem %s2, %s456
  %s458 = scalar_lea.vmem [#allocation2], 9
  %s459 = scalar_lea.sflag [#allocation3], 9
  %p461 = scmp.lt.u32.totalorder 1, 8
  %p462 = pneg %p461
  // Predicated region
  $region276: #{clip_forward.2} parent=0 // pred_check
    _
  $region277: #{clip_forward.2} parent=0 // pred_check_branch
    %464 = sbr.rel (%p461) target = $region279
  $region278: #{clip_forward.2} parent=0 // pred_region
    %s479 = sand.u32 1, 7
    %p480 = scmp.eq.s32.totalorder %s479, 0
    %p481 = pneg %p480
    // Predicated region
    $region291: #{clip_forward.2} parent=278 // pred_check
      _
    $region292: #{clip_forward.2} parent=278 // pred_check_branch
      %483 = sbr.rel (%p480) target = $region294
    $region293: #{clip_forward.2} parent=278 // pred_region
      %s484 = sand.u32 1, 7
      %s485 = ssub.s32 1, %s484
      %s486 = scalar_lea.vmem %s457, %s485
      %s487 = ssub.s32 1, %s484
      %s488 = scalar_lea.vmem %s458, %s487 [#allocation2]
      %s489 = sshllo.u32 0, %s484
      loop: start=0, step=1, limit=1
      $region295: #{clip_forward.2} parent=293 // loop_pre_header
        _
      $region296: #{clip_forward.2} parent=293 // loop_header
        %s491 = sphi 0, %s495
        %p492 = scmp.ge.s32.totalorder %s491, 1
        %s496 = sphi %s486, %s486
        %s497 = sphi %s488, %s488
      $region297: #{clip_forward.2} parent=293 // loop_header_branch
        %494 = sbr.rel (%p492) target = $region301
      $region298: #{clip_forward.2} parent=293 // loop_body
        %v498 = vld [vmem:[%s496] sm:%s489]
        %499 = vst [vmem:[%s497] sm:%s489] %v498
      $region299: #{clip_forward.2} parent=293 // loop_footer
        %s495 = sadd.s32 1, %s491
      $region300: #{clip_forward.2} parent=293 // loop_footer_branch
        %490 = sbr.rel target = $region296
      $region301: #{clip_forward.2} parent=293 // loop_exit
        _
    $region294: #{clip_forward.2} parent=278 // pred_fallthru
      _
  $region279: #{clip_forward.2} parent=0 // pred_fallthru
    _
  // Predicated region
  $region280: #{clip_forward.2} parent=0 // pred_check
    %p465 = pneg %p461
  $region281: #{clip_forward.2} parent=0 // pred_check_branch
    %467 = sbr.rel (%p465) target = $region283
  $region282: #{clip_forward.2} parent=0 // pred_region
    %s468 = sshllo.u32 0, 1
    loop: start=0, step=1, limit=1
    $region284: #{clip_forward.2} parent=282 // loop_pre_header
      _
    $region285: #{clip_forward.2} parent=282 // loop_header
      %s470 = sphi 0, %s474
      %p471 = scmp.ge.s32.totalorder %s470, 1
      %s475 = sphi %s457, %s457
      %s476 = sphi %s458, %s458
    $region286: #{clip_forward.2} parent=282 // loop_header_branch
      %473 = sbr.rel (%p471) target = $region290
    $region287: #{clip_forward.2} parent=282 // loop_body
      %v477 = vld [vmem:[%s475] sm:%s468]
      %478 = vst [vmem:[%s476] sm:%s468] %v477
    $region288: #{clip_forward.2} parent=282 // loop_footer
      %s474 = sadd.s32 1, %s470
    $region289: #{clip_forward.2} parent=282 // loop_footer_branch
      %469 = sbr.rel target = $region285
    $region290: #{clip_forward.2} parent=282 // loop_exit
      _
  $region283: #{clip_forward.2} parent=0 // pred_fallthru
    _
  // Predicated region
  $region302: #{clip_forward.2} parent=0 // pred_check
    _
  $region303: #{clip_forward.2} parent=0 // pred_check_branch
    %502 = sbr.rel (0) target = $region305
  $region304: #{clip_forward.2} parent=0 // pred_region
    %503 = vsyncadd %s459, 16
  $region305: #{clip_forward.2} parent=0 // pred_fallthru
    _
  %s504 = sadd.s32 %s16, 10
  %s505 = sld [smem:[#allocation5 + %s504]]
  %s506 = scalar_lea.vmem %s2, %s505
  %s507 = scalar_lea.vmem [#allocation2], 10
  %s508 = scalar_lea.sflag [#allocation3], 10
  %p510 = scmp.lt.u32.totalorder 1, 8
  %p511 = pneg %p510
  // Predicated region
  $region306: #{clip_forward.2} parent=0 // pred_check
    _
  $region307: #{clip_forward.2} parent=0 // pred_check_branch
    %513 = sbr.rel (%p510) target = $region309
  $region308: #{clip_forward.2} parent=0 // pred_region
    %s528 = sand.u32 1, 7
    %p529 = scmp.eq.s32.totalorder %s528, 0
    %p530 = pneg %p529
    // Predicated region
    $region321: #{clip_forward.2} parent=308 // pred_check
      _
    $region322: #{clip_forward.2} parent=308 // pred_check_branch
      %532 = sbr.rel (%p529) target = $region324
    $region323: #{clip_forward.2} parent=308 // pred_region
      %s533 = sand.u32 1, 7
      %s534 = ssub.s32 1, %s533
      %s535 = scalar_lea.vmem %s506, %s534
      %s536 = ssub.s32 1, %s533
      %s537 = scalar_lea.vmem %s507, %s536 [#allocation2]
      %s538 = sshllo.u32 0, %s533
      loop: start=0, step=1, limit=1
      $region325: #{clip_forward.2} parent=323 // loop_pre_header
        _
      $region326: #{clip_forward.2} parent=323 // loop_header
        %s540 = sphi 0, %s544
        %p541 = scmp.ge.s32.totalorder %s540, 1
        %s545 = sphi %s535, %s535
        %s546 = sphi %s537, %s537
      $region327: #{clip_forward.2} parent=323 // loop_header_branch
        %543 = sbr.rel (%p541) target = $region331
      $region328: #{clip_forward.2} parent=323 // loop_body
        %v547 = vld [vmem:[%s545] sm:%s538]
        %548 = vst [vmem:[%s546] sm:%s538] %v547
      $region329: #{clip_forward.2} parent=323 // loop_footer
        %s544 = sadd.s32 1, %s540
      $region330: #{clip_forward.2} parent=323 // loop_footer_branch
        %539 = sbr.rel target = $region326
      $region331: #{clip_forward.2} parent=323 // loop_exit
        _
    $region324: #{clip_forward.2} parent=308 // pred_fallthru
      _
  $region309: #{clip_forward.2} parent=0 // pred_fallthru
    _
  // Predicated region
  $region310: #{clip_forward.2} parent=0 // pred_check
    %p514 = pneg %p510
  $region311: #{clip_forward.2} parent=0 // pred_check_branch
    %516 = sbr.rel (%p514) target = $region313
  $region312: #{clip_forward.2} parent=0 // pred_region
    %s517 = sshllo.u32 0, 1
    loop: start=0, step=1, limit=1
    $region314: #{clip_forward.2} parent=312 // loop_pre_header
      _
    $region315: #{clip_forward.2} parent=312 // loop_header
      %s519 = sphi 0, %s523
      %p520 = scmp.ge.s32.totalorder %s519, 1
      %s524 = sphi %s506, %s506
      %s525 = sphi %s507, %s507
    $region316: #{clip_forward.2} parent=312 // loop_header_branch
      %522 = sbr.rel (%p520) target = $region320
    $region317: #{clip_forward.2} parent=312 // loop_body
      %v526 = vld [vmem:[%s524] sm:%s517]
      %527 = vst [vmem:[%s525] sm:%s517] %v526
    $region318: #{clip_forward.2} parent=312 // loop_footer
      %s523 = sadd.s32 1, %s519
    $region319: #{clip_forward.2} parent=312 // loop_footer_branch
      %518 = sbr.rel target = $region315
    $region320: #{clip_forward.2} parent=312 // loop_exit
      _
  $region313: #{clip_forward.2} parent=0 // pred_fallthru
    _
  // Predicated region
  $region332: #{clip_forward.2} parent=0 // pred_check
    _
  $region333: #{clip_forward.2} parent=0 // pred_check_branch
    %551 = sbr.rel (0) target = $region335
  $region334: #{clip_forward.2} parent=0 // pred_region
    %552 = vsyncadd %s508, 16
  $region335: #{clip_forward.2} parent=0 // pred_fallthru
    _
  %s553 = sadd.s32 %s16, 11
  %s554 = sld [smem:[#allocation5 + %s553]]
  %s555 = scalar_lea.vmem %s2, %s554
  %s556 = scalar_lea.vmem [#allocation2], 11
  %s557 = scalar_lea.sflag [#allocation3], 11
  %p559 = scmp.lt.u32.totalorder 1, 8
  %p560 = pneg %p559
  // Predicated region
  $region336: #{clip_forward.2} parent=0 // pred_check
    _
  $region337: #{clip_forward.2} parent=0 // pred_check_branch
    %562 = sbr.rel (%p559) target = $region339
  $region338: #{clip_forward.2} parent=0 // pred_region
    %s577 = sand.u32 1, 7
    %p578 = scmp.eq.s32.totalorder %s577, 0
    %p579 = pneg %p578
    // Predicated region
    $region351: #{clip_forward.2} parent=338 // pred_check
      _
    $region352: #{clip_forward.2} parent=338 // pred_check_branch
      %581 = sbr.rel (%p578) target = $region354
    $region353: #{clip_forward.2} parent=338 // pred_region
      %s582 = sand.u32 1, 7
      %s583 = ssub.s32 1, %s582
      %s584 = scalar_lea.vmem %s555, %s583
      %s585 = ssub.s32 1, %s582
      %s586 = scalar_lea.vmem %s556, %s585 [#allocation2]
      %s587 = sshllo.u32 0, %s582
      loop: start=0, step=1, limit=1
      $region355: #{clip_forward.2} parent=353 // loop_pre_header
        _
      $region356: #{clip_forward.2} parent=353 // loop_header
        %s589 = sphi 0, %s593
        %p590 = scmp.ge.s32.totalorder %s589, 1
        %s594 = sphi %s584, %s584
        %s595 = sphi %s586, %s586
      $region357: #{clip_forward.2} parent=353 // loop_header_branch
        %592 = sbr.rel (%p590) target = $region361
      $region358: #{clip_forward.2} parent=353 // loop_body
        %v596 = vld [vmem:[%s594] sm:%s587]
        %597 = vst [vmem:[%s595] sm:%s587] %v596
      $region359: #{clip_forward.2} parent=353 // loop_footer
        %s593 = sadd.s32 1, %s589
      $region360: #{clip_forward.2} parent=353 // loop_footer_branch
        %588 = sbr.rel target = $region356
      $region361: #{clip_forward.2} parent=353 // loop_exit
        _
    $region354: #{clip_forward.2} parent=338 // pred_fallthru
      _
  $region339: #{clip_forward.2} parent=0 // pred_fallthru
    _
  // Predicated region
  $region340: #{clip_forward.2} parent=0 // pred_check
    %p563 = pneg %p559
  $region341: #{clip_forward.2} parent=0 // pred_check_branch
    %565 = sbr.rel (%p563) target = $region343
  $region342: #{clip_forward.2} parent=0 // pred_region
    %s566 = sshllo.u32 0, 1
    loop: start=0, step=1, limit=1
    $region344: #{clip_forward.2} parent=342 // loop_pre_header
      _
    $region345: #{clip_forward.2} parent=342 // loop_header
      %s568 = sphi 0, %s572
      %p569 = scmp.ge.s32.totalorder %s568, 1
      %s573 = sphi %s555, %s555
      %s574 = sphi %s556, %s556
    $region346: #{clip_forward.2} parent=342 // loop_header_branch
      %571 = sbr.rel (%p569) target = $region350
    $region347: #{clip_forward.2} parent=342 // loop_body
      %v575 = vld [vmem:[%s573] sm:%s566]
      %576 = vst [vmem:[%s574] sm:%s566] %v575
    $region348: #{clip_forward.2} parent=342 // loop_footer
      %s572 = sadd.s32 1, %s568
    $region349: #{clip_forward.2} parent=342 // loop_footer_branch
      %567 = sbr.rel target = $region345
    $region350: #{clip_forward.2} parent=342 // loop_exit
      _
  $region343: #{clip_forward.2} parent=0 // pred_fallthru
    _
  // Predicated region
  $region362: #{clip_forward.2} parent=0 // pred_check
    _
  $region363: #{clip_forward.2} parent=0 // pred_check_branch
    %600 = sbr.rel (0) target = $region365
  $region364: #{clip_forward.2} parent=0 // pred_region
    %601 = vsyncadd %s557, 16
  $region365: #{clip_forward.2} parent=0 // pred_fallthru
    _
  %s602 = sadd.s32 %s16, 12
  %s603 = sld [smem:[#allocation5 + %s602]]
  %s604 = scalar_lea.vmem %s2, %s603
  %s605 = scalar_lea.vmem [#allocation2], 12
  %s606 = scalar_lea.sflag [#allocation3], 12
  %p608 = scmp.lt.u32.totalorder 1, 8
  %p609 = pneg %p608
  // Predicated region
  $region366: #{clip_forward.2} parent=0 // pred_check
    _
  $region367: #{clip_forward.2} parent=0 // pred_check_branch
    %611 = sbr.rel (%p608) target = $region369
  $region368: #{clip_forward.2} parent=0 // pred_region
    %s626 = sand.u32 1, 7
    %p627 = scmp.eq.s32.totalorder %s626, 0
    %p628 = pneg %p627
    // Predicated region
    $region381: #{clip_forward.2} parent=368 // pred_check
      _
    $region382: #{clip_forward.2} parent=368 // pred_check_branch
      %630 = sbr.rel (%p627) target = $region384
    $region383: #{clip_forward.2} parent=368 // pred_region
      %s631 = sand.u32 1, 7
      %s632 = ssub.s32 1, %s631
      %s633 = scalar_lea.vmem %s604, %s632
      %s634 = ssub.s32 1, %s631
      %s635 = scalar_lea.vmem %s605, %s634 [#allocation2]
      %s636 = sshllo.u32 0, %s631
      loop: start=0, step=1, limit=1
      $region385: #{clip_forward.2} parent=383 // loop_pre_header
        _
      $region386: #{clip_forward.2} parent=383 // loop_header
        %s638 = sphi 0, %s642
        %p639 = scmp.ge.s32.totalorder %s638, 1
        %s643 = sphi %s633, %s633
        %s644 = sphi %s635, %s635
      $region387: #{clip_forward.2} parent=383 // loop_header_branch
        %641 = sbr.rel (%p639) target = $region391
      $region388: #{clip_forward.2} parent=383 // loop_body
        %v645 = vld [vmem:[%s643] sm:%s636]
        %646 = vst [vmem:[%s644] sm:%s636] %v645
      $region389: #{clip_forward.2} parent=383 // loop_footer
        %s642 = sadd.s32 1, %s638
      $region390: #{clip_forward.2} parent=383 // loop_footer_branch
        %637 = sbr.rel target = $region386
      $region391: #{clip_forward.2} parent=383 // loop_exit
        _
    $region384: #{clip_forward.2} parent=368 // pred_fallthru
      _
  $region369: #{clip_forward.2} parent=0 // pred_fallthru
    _
  // Predicated region
  $region370: #{clip_forward.2} parent=0 // pred_check
    %p612 = pneg %p608
  $region371: #{clip_forward.2} parent=0 // pred_check_branch
    %614 = sbr.rel (%p612) target = $region373
  $region372: #{clip_forward.2} parent=0 // pred_region
    %s615 = sshllo.u32 0, 1
    loop: start=0, step=1, limit=1
    $region374: #{clip_forward.2} parent=372 // loop_pre_header
      _
    $region375: #{clip_forward.2} parent=372 // loop_header
      %s617 = sphi 0, %s621
      %p618 = scmp.ge.s32.totalorder %s617, 1
      %s622 = sphi %s604, %s604
      %s623 = sphi %s605, %s605
    $region376: #{clip_forward.2} parent=372 // loop_header_branch
      %620 = sbr.rel (%p618) target = $region380
    $region377: #{clip_forward.2} parent=372 // loop_body
      %v624 = vld [vmem:[%s622] sm:%s615]
      %625 = vst [vmem:[%s623] sm:%s615] %v624
    $region378: #{clip_forward.2} parent=372 // loop_footer
      %s621 = sadd.s32 1, %s617
    $region379: #{clip_forward.2} parent=372 // loop_footer_branch
      %616 = sbr.rel target = $region375
    $region380: #{clip_forward.2} parent=372 // loop_exit
      _
  $region373: #{clip_forward.2} parent=0 // pred_fallthru
    _
  // Predicated region
  $region392: #{clip_forward.2} parent=0 // pred_check
    _
  $region393: #{clip_forward.2} parent=0 // pred_check_branch
    %649 = sbr.rel (0) target = $region395
  $region394: #{clip_forward.2} parent=0 // pred_region
    %650 = vsyncadd %s606, 16
  $region395: #{clip_forward.2} parent=0 // pred_fallthru
    _
  %s651 = sadd.s32 %s16, 13
  %s652 = sld [smem:[#allocation5 + %s651]]
  %s653 = scalar_lea.vmem %s2, %s652
  %s654 = scalar_lea.vmem [#allocation2], 13
  %s655 = scalar_lea.sflag [#allocation3], 13
  %p657 = scmp.lt.u32.totalorder 1, 8
  %p658 = pneg %p657
  // Predicated region
  $region396: #{clip_forward.2} parent=0 // pred_check
    _
  $region397: #{clip_forward.2} parent=0 // pred_check_branch
    %660 = sbr.rel (%p657) target = $region399
  $region398: #{clip_forward.2} parent=0 // pred_region
    %s675 = sand.u32 1, 7
    %p676 = scmp.eq.s32.totalorder %s675, 0
    %p677 = pneg %p676
    // Predicated region
    $region411: #{clip_forward.2} parent=398 // pred_check
      _
    $region412: #{clip_forward.2} parent=398 // pred_check_branch
      %679 = sbr.rel (%p676) target = $region414
    $region413: #{clip_forward.2} parent=398 // pred_region
      %s680 = sand.u32 1, 7
      %s681 = ssub.s32 1, %s680
      %s682 = scalar_lea.vmem %s653, %s681
      %s683 = ssub.s32 1, %s680
      %s684 = scalar_lea.vmem %s654, %s683 [#allocation2]
      %s685 = sshllo.u32 0, %s680
      loop: start=0, step=1, limit=1
      $region415: #{clip_forward.2} parent=413 // loop_pre_header
        _
      $region416: #{clip_forward.2} parent=413 // loop_header
        %s687 = sphi 0, %s691
        %p688 = scmp.ge.s32.totalorder %s687, 1
        %s692 = sphi %s682, %s682
        %s693 = sphi %s684, %s684
      $region417: #{clip_forward.2} parent=413 // loop_header_branch
        %690 = sbr.rel (%p688) target = $region421
      $region418: #{clip_forward.2} parent=413 // loop_body
        %v694 = vld [vmem:[%s692] sm:%s685]
        %695 = vst [vmem:[%s693] sm:%s685] %v694
      $region419: #{clip_forward.2} parent=413 // loop_footer
        %s691 = sadd.s32 1, %s687
      $region420: #{clip_forward.2} parent=413 // loop_footer_branch
        %686 = sbr.rel target = $region416
      $region421: #{clip_forward.2} parent=413 // loop_exit
        _
    $region414: #{clip_forward.2} parent=398 // pred_fallthru
      _
  $region399: #{clip_forward.2} parent=0 // pred_fallthru
    _
  // Predicated region
  $region400: #{clip_forward.2} parent=0 // pred_check
    %p661 = pneg %p657
  $region401: #{clip_forward.2} parent=0 // pred_check_branch
    %663 = sbr.rel (%p661) target = $region403
  $region402: #{clip_forward.2} parent=0 // pred_region
    %s664 = sshllo.u32 0, 1
    loop: start=0, step=1, limit=1
    $region404: #{clip_forward.2} parent=402 // loop_pre_header
      _
    $region405: #{clip_forward.2} parent=402 // loop_header
      %s666 = sphi 0, %s670
      %p667 = scmp.ge.s32.totalorder %s666, 1
      %s671 = sphi %s653, %s653
      %s672 = sphi %s654, %s654
    $region406: #{clip_forward.2} parent=402 // loop_header_branch
      %669 = sbr.rel (%p667) target = $region410
    $region407: #{clip_forward.2} parent=402 // loop_body
      %v673 = vld [vmem:[%s671] sm:%s664]
      %674 = vst [vmem:[%s672] sm:%s664] %v673
    $region408: #{clip_forward.2} parent=402 // loop_footer
      %s670 = sadd.s32 1, %s666
    $region409: #{clip_forward.2} parent=402 // loop_footer_branch
      %665 = sbr.rel target = $region405
    $region410: #{clip_forward.2} parent=402 // loop_exit
      _
  $region403: #{clip_forward.2} parent=0 // pred_fallthru
    _
  // Predicated region
  $region422: #{clip_forward.2} parent=0 // pred_check
    _
  $region423: #{clip_forward.2} parent=0 // pred_check_branch
    %698 = sbr.rel (0) target = $region425
  $region424: #{clip_forward.2} parent=0 // pred_region
    %699 = vsyncadd %s655, 16
  $region425: #{clip_forward.2} parent=0 // pred_fallthru
    _
  %s700 = sadd.s32 %s16, 14
  %s701 = sld [smem:[#allocation5 + %s700]]
  %s702 = scalar_lea.vmem %s2, %s701
  %s703 = scalar_lea.vmem [#allocation2], 14
  %s704 = scalar_lea.sflag [#allocation3], 14
  %p706 = scmp.lt.u32.totalorder 1, 8
  %p707 = pneg %p706
  // Predicated region
  $region426: #{clip_forward.2} parent=0 // pred_check
    _
  $region427: #{clip_forward.2} parent=0 // pred_check_branch
    %709 = sbr.rel (%p706) target = $region429
  $region428: #{clip_forward.2} parent=0 // pred_region
    %s724 = sand.u32 1, 7
    %p725 = scmp.eq.s32.totalorder %s724, 0
    %p726 = pneg %p725
    // Predicated region
    $region441: #{clip_forward.2} parent=428 // pred_check
      _
    $region442: #{clip_forward.2} parent=428 // pred_check_branch
      %728 = sbr.rel (%p725) target = $region444
    $region443: #{clip_forward.2} parent=428 // pred_region
      %s729 = sand.u32 1, 7
      %s730 = ssub.s32 1, %s729
      %s731 = scalar_lea.vmem %s702, %s730
      %s732 = ssub.s32 1, %s729
      %s733 = scalar_lea.vmem %s703, %s732 [#allocation2]
      %s734 = sshllo.u32 0, %s729
      loop: start=0, step=1, limit=1
      $region445: #{clip_forward.2} parent=443 // loop_pre_header
        _
      $region446: #{clip_forward.2} parent=443 // loop_header
        %s736 = sphi 0, %s740
        %p737 = scmp.ge.s32.totalorder %s736, 1
        %s741 = sphi %s731, %s731
        %s742 = sphi %s733, %s733
      $region447: #{clip_forward.2} parent=443 // loop_header_branch
        %739 = sbr.rel (%p737) target = $region451
      $region448: #{clip_forward.2} parent=443 // loop_body
        %v743 = vld [vmem:[%s741] sm:%s734]
        %744 = vst [vmem:[%s742] sm:%s734] %v743
      $region449: #{clip_forward.2} parent=443 // loop_footer
        %s740 = sadd.s32 1, %s736
      $region450: #{clip_forward.2} parent=443 // loop_footer_branch
        %735 = sbr.rel target = $region446
      $region451: #{clip_forward.2} parent=443 // loop_exit
        _
    $region444: #{clip_forward.2} parent=428 // pred_fallthru
      _
  $region429: #{clip_forward.2} parent=0 // pred_fallthru
    _
  // Predicated region
  $region430: #{clip_forward.2} parent=0 // pred_check
    %p710 = pneg %p706
  $region431: #{clip_forward.2} parent=0 // pred_check_branch
    %712 = sbr.rel (%p710) target = $region433
  $region432: #{clip_forward.2} parent=0 // pred_region
    %s713 = sshllo.u32 0, 1
    loop: start=0, step=1, limit=1
    $region434: #{clip_forward.2} parent=432 // loop_pre_header
      _
    $region435: #{clip_forward.2} parent=432 // loop_header
      %s715 = sphi 0, %s719
      %p716 = scmp.ge.s32.totalorder %s715, 1
      %s720 = sphi %s702, %s702
      %s721 = sphi %s703, %s703
    $region436: #{clip_forward.2} parent=432 // loop_header_branch
      %718 = sbr.rel (%p716) target = $region440
    $region437: #{clip_forward.2} parent=432 // loop_body
      %v722 = vld [vmem:[%s720] sm:%s713]
      %723 = vst [vmem:[%s721] sm:%s713] %v722
    $region438: #{clip_forward.2} parent=432 // loop_footer
      %s719 = sadd.s32 1, %s715
    $region439: #{clip_forward.2} parent=432 // loop_footer_branch
      %714 = sbr.rel target = $region435
    $region440: #{clip_forward.2} parent=432 // loop_exit
      _
  $region433: #{clip_forward.2} parent=0 // pred_fallthru
    _
  // Predicated region
  $region452: #{clip_forward.2} parent=0 // pred_check
    _
  $region453: #{clip_forward.2} parent=0 // pred_check_branch
    %747 = sbr.rel (0) target = $region455
  $region454: #{clip_forward.2} parent=0 // pred_region
    %748 = vsyncadd %s704, 16
  $region455: #{clip_forward.2} parent=0 // pred_fallthru
    _
  %s749 = sadd.s32 %s16, 15
  %s750 = sld [smem:[#allocation5 + %s749]]
  %s751 = scalar_lea.vmem %s2, %s750
  %s752 = scalar_lea.vmem [#allocation2], 15
  %s753 = scalar_lea.sflag [#allocation3], 15
  %p755 = scmp.lt.u32.totalorder 1, 8
  %p756 = pneg %p755
  // Predicated region
  $region456: #{clip_forward.2} parent=0 // pred_check
    _
  $region457: #{clip_forward.2} parent=0 // pred_check_branch
    %758 = sbr.rel (%p755) target = $region459
  $region458: #{clip_forward.2} parent=0 // pred_region
    %s773 = sand.u32 1, 7
    %p774 = scmp.eq.s32.totalorder %s773, 0
    %p775 = pneg %p774
    // Predicated region
    $region471: #{clip_forward.2} parent=458 // pred_check
      _
    $region472: #{clip_forward.2} parent=458 // pred_check_branch
      %777 = sbr.rel (%p774) target = $region474
    $region473: #{clip_forward.2} parent=458 // pred_region
      %s778 = sand.u32 1, 7
      %s779 = ssub.s32 1, %s778
      %s780 = scalar_lea.vmem %s751, %s779
      %s781 = ssub.s32 1, %s778
      %s782 = scalar_lea.vmem %s752, %s781 [#allocation2]
      %s783 = sshllo.u32 0, %s778
      loop: start=0, step=1, limit=1
      $region475: #{clip_forward.2} parent=473 // loop_pre_header
        _
      $region476: #{clip_forward.2} parent=473 // loop_header
        %s785 = sphi 0, %s789
        %p786 = scmp.ge.s32.totalorder %s785, 1
        %s790 = sphi %s780, %s780
        %s791 = sphi %s782, %s782
      $region477: #{clip_forward.2} parent=473 // loop_header_branch
        %788 = sbr.rel (%p786) target = $region481
      $region478: #{clip_forward.2} parent=473 // loop_body
        %v792 = vld [vmem:[%s790] sm:%s783]
        %793 = vst [vmem:[%s791] sm:%s783] %v792
      $region479: #{clip_forward.2} parent=473 // loop_footer
        %s789 = sadd.s32 1, %s785
      $region480: #{clip_forward.2} parent=473 // loop_footer_branch
        %784 = sbr.rel target = $region476
      $region481: #{clip_forward.2} parent=473 // loop_exit
        _
    $region474: #{clip_forward.2} parent=458 // pred_fallthru
      _
  $region459: #{clip_forward.2} parent=0 // pred_fallthru
    _
  // Predicated region
  $region460: #{clip_forward.2} parent=0 // pred_check
    %p759 = pneg %p755
  $region461: #{clip_forward.2} parent=0 // pred_check_branch
    %761 = sbr.rel (%p759) target = $region463
  $region462: #{clip_forward.2} parent=0 // pred_region
    %s762 = sshllo.u32 0, 1
    loop: start=0, step=1, limit=1
    $region464: #{clip_forward.2} parent=462 // loop_pre_header
      _
    $region465: #{clip_forward.2} parent=462 // loop_header
      %s764 = sphi 0, %s768
      %p765 = scmp.ge.s32.totalorder %s764, 1
      %s769 = sphi %s751, %s751
      %s770 = sphi %s752, %s752
    $region466: #{clip_forward.2} parent=462 // loop_header_branch
      %767 = sbr.rel (%p765) target = $region470
    $region467: #{clip_forward.2} parent=462 // loop_body
      %v771 = vld [vmem:[%s769] sm:%s762]
      %772 = vst [vmem:[%s770] sm:%s762] %v771
    $region468: #{clip_forward.2} parent=462 // loop_footer
      %s768 = sadd.s32 1, %s764
    $region469: #{clip_forward.2} parent=462 // loop_footer_branch
      %763 = sbr.rel target = $region465
    $region470: #{clip_forward.2} parent=462 // loop_exit
      _
  $region463: #{clip_forward.2} parent=0 // pred_fallthru
    _
  // Predicated region
  $region482: #{clip_forward.2} parent=0 // pred_check
    _
  $region483: #{clip_forward.2} parent=0 // pred_check_branch
    %796 = sbr.rel (0) target = $region485
  $region484: #{clip_forward.2} parent=0 // pred_region
    %797 = vsyncadd %s753, 16
  $region485: #{clip_forward.2} parent=0 // pred_fallthru
    _
  %799 = dma.done [#allocation3], 16
  %801 = dma.done %s67, 16
  %803 = dma.done %s116, 16
  %805 = dma.done %s165, 16
  %807 = dma.done %s214, 16
  %809 = dma.done %s263, 16
  %811 = dma.done %s312, 16
  %813 = dma.done %s361, 16
  %815 = dma.done %s410, 16
  %817 = dma.done %s459, 16
  %819 = dma.done %s508, 16
  %821 = dma.done %s557, 16
  %823 = dma.done %s606, 16
  %825 = dma.done %s655, 16
  %827 = dma.done %s704, 16
  %829 = dma.done %s753, 16
  %v830 = vld [vmem:[#allocation2] sm:$0xff]
  %v831 = vld [vmem:[#allocation2 + $0x8] sm:$0xff]
  %v832 = vld [vmem:[%s1] sm:$0xff]
  %v833 = vld [vmem:[%s1 + $0x8] sm:$0xff]
  %v834 = vadd.f32 %v830, %v832
  %v835 = vadd.f32 %v831, %v833
  %vm836 = vcmask 523264
  %837 = vst.msk [vmem:[%s3] sm:$0xff] %vm836, %v834
  %838 = vst.msk [vmem:[%s3 + $0x8] sm:$0xff] %vm836, %v835
  // Predicated region
  $region486: #{clip_forward.2} parent=0 // pred_check
    _
  $region487: #{clip_forward.2} parent=0 // pred_check_branch
    %840 = sbr.rel (0) target = $region489
  $region488: #{clip_forward.2} parent=0 // pred_region
    _
  $region489: #{clip_forward.2} parent=0 // pred_fallthru
    _
  // Predicated region
  $region490: #{clip_forward.2} parent=0 // pred_check
    _
  $region491: #{clip_forward.2} parent=0 // pred_check_branch
    %842 = sbr.rel (0) target = $region493
  $region492: #{clip_forward.2} parent=0 // pred_region
    _
  $region493: #{clip_forward.2} parent=0 // pred_fallthru
    _
  %843 = vsyncmov [#allocation3]
  %s844 = vpop.sfrf %843
  %p845 = scmp.eq.s32.totalorder %s844, 0
  %p846 = pneg %p845
  %848 = shalt.err (%p846)
  %s849 = scalar_lea.sflag [#allocation3], 1
  %850 = vsyncmov %s849
  %s851 = vpop.sfrf %850
  %p852 = scmp.eq.s32.totalorder %s851, 0
  %p853 = pneg %p852
  %855 = shalt.err (%p853)
  %s856 = scalar_lea.sflag [#allocation3], 2
  %857 = vsyncmov %s856
  %s858 = vpop.sfrf %857
  %p859 = scmp.eq.s32.totalorder %s858, 0
  %p860 = pneg %p859
  %862 = shalt.err (%p860)
  %s863 = scalar_lea.sflag [#allocation3], 3
  %864 = vsyncmov %s863
  %s865 = vpop.sfrf %864
  %p866 = scmp.eq.s32.totalorder %s865, 0
  %p867 = pneg %p866
  %869 = shalt.err (%p867)
  %s870 = scalar_lea.sflag [#allocation3], 4
  %871 = vsyncmov %s870
  %s872 = vpop.sfrf %871
  %p873 = scmp.eq.s32.totalorder %s872, 0
  %p874 = pneg %p873
  %876 = shalt.err (%p874)
  %s877 = scalar_lea.sflag [#allocation3], 5
  %878 = vsyncmov %s877
  %s879 = vpop.sfrf %878
  %p880 = scmp.eq.s32.totalorder %s879, 0
  %p881 = pneg %p880
  %883 = shalt.err (%p881)
  %s884 = scalar_lea.sflag [#allocation3], 6
  %885 = vsyncmov %s884
  %s886 = vpop.sfrf %885
  %p887 = scmp.eq.s32.totalorder %s886, 0
  %p888 = pneg %p887
  %890 = shalt.err (%p888)
  %s891 = scalar_lea.sflag [#allocation3], 7
  %892 = vsyncmov %s891
  %s893 = vpop.sfrf %892
  %p894 = scmp.eq.s32.totalorder %s893, 0
  %p895 = pneg %p894
  %897 = shalt.err (%p895)
  %s898 = scalar_lea.sflag [#allocation3], 8
  %899 = vsyncmov %s898
  %s900 = vpop.sfrf %899
  %p901 = scmp.eq.s32.totalorder %s900, 0
  %p902 = pneg %p901
  %904 = shalt.err (%p902)
  %s905 = scalar_lea.sflag [#allocation3], 9
  %906 = vsyncmov %s905
  %s907 = vpop.sfrf %906
  %p908 = scmp.eq.s32.totalorder %s907, 0
  %p909 = pneg %p908
  %911 = shalt.err (%p909)
  %s912 = scalar_lea.sflag [#allocation3], 10
  %913 = vsyncmov %s912
  %s914 = vpop.sfrf %913
  %p915 = scmp.eq.s32.totalorder %s914, 0
  %p916 = pneg %p915
  %918 = shalt.err (%p916)
  %s919 = scalar_lea.sflag [#allocation3], 11
  %920 = vsyncmov %s919
  %s921 = vpop.sfrf %920
  %p922 = scmp.eq.s32.totalorder %s921, 0
  %p923 = pneg %p922
  %925 = shalt.err (%p923)
  %s926 = scalar_lea.sflag [#allocation3], 12
  %927 = vsyncmov %s926
  %s928 = vpop.sfrf %927
  %p929 = scmp.eq.s32.totalorder %s928, 0
  %p930 = pneg %p929
  %932 = shalt.err (%p930)
  %s933 = scalar_lea.sflag [#allocation3], 13
  %934 = vsyncmov %s933
  %s935 = vpop.sfrf %934
  %p936 = scmp.eq.s32.totalorder %s935, 0
  %p937 = pneg %p936
  %939 = shalt.err (%p937)
  %s940 = scalar_lea.sflag [#allocation3], 14
  %941 = vsyncmov %s940
  %s942 = vpop.sfrf %941
  %p943 = scmp.eq.s32.totalorder %s942, 0
  %p944 = pneg %p943
  %946 = shalt.err (%p944)
  %s947 = scalar_lea.sflag [#allocation3], 15
  %948 = vsyncmov %s947
  %s949 = vpop.sfrf %948
  %p950 = scmp.eq.s32.totalorder %s949, 0
  %p951 = pneg %p950
  %953 = shalt.err (%p951)

// kernel: clip_forward.3
$region0: #{clip_forward.3}
  #allocation0 [shape = 'u32[]', space=smem, size = 0x4, offset = 0x4, fixed_abs, tag = 'smem constant byte address 0x4 - core index']
  #allocation1 [shape = 'u32[144,128]{1,0:T(1,128)}', space=vmem, size = 0x12000, scoped, tag = 'internal scratch']
  #allocation2 [shape = 'bf16[4,2,8,16]{3,2,1,0:T(8,128)(2,1)}', space=vmem, size = 0x4000, scoped, tag = 'scratch operand']
  #allocation3 [shape = 'bf16[4,2,8,16]{3,2,1,0:T(8,128)(2,1)}', space=vmem, size = 0x4000, scoped, tag = 'scratch operand']
  #allocation4 [shape = 'bf16[4,2,8,16]{3,2,1,0:T(8,128)(2,1)}', space=vmem, size = 0x4000, scoped, tag = 'scratch operand']
  #allocation5 [shape = 'bf16[2,8,64]{2,1,0:T(8,128)(2,1)}', space=vmem, size = 0x1000, scoped, tag = 'scratch operand']
  %s0 = inlined_call_operand.vmem [shape: f32[2,8,64], index: 0, kind: input, shape index: {}]
  %s1 = inlined_call_operand.vmem [shape: f32[12,1,64], index: 1, kind: input, shape index: {}]
  %s2 = inlined_call_operand.vmem [shape: f32[12,1,64], index: 2, kind: input, shape index: {}]
  %s3 = inlined_call_operand.vmem [shape: bf16[12,64,192], index: 3, kind: input, shape index: {}]
  %s4 = inlined_call_operand.vmem [shape: f32[12,1,192], index: 4, kind: input, shape index: {}]
  %s5 = inlined_call_operand.vmem [shape: bf16[12,64,64], index: 5, kind: input, shape index: {}]
  %s6 = inlined_call_operand.vmem [shape: f32[12,1,64], index: 6, kind: input, shape index: {}]
  %s7 = inlined_call_operand.vmem [shape: f32[12,1,64], index: 7, kind: input, shape index: {}]
  %s8 = inlined_call_operand.vmem [shape: f32[12,1,64], index: 8, kind: input, shape index: {}]
  %s9 = inlined_call_operand.vmem [shape: bf16[12,64,256], index: 9, kind: input, shape index: {}]
  %s10 = inlined_call_operand.vmem [shape: f32[12,1,256], index: 10, kind: input, shape index: {}]
  %s11 = inlined_call_operand.vmem [shape: bf16[12,256,64], index: 11, kind: input, shape index: {}]
  %s12 = inlined_call_operand.vmem [shape: f32[12,1,64], index: 12, kind: input, shape index: {}]
  %s13 = inlined_call_operand.vmem [shape: f32[1,64], index: 13, kind: input, shape index: {}]
  %s14 = inlined_call_operand.vmem [shape: f32[1,64], index: 14, kind: input, shape index: {}]
  %s15 = inlined_call_operand.hbm [shape: f32[2,8,64], index: 15, kind: output, shape index: {}]
  %s16 = sld [smem:[#allocation0]]
  $region105: #{clip_forward.3} parent=0
    _
  %s18 = ssub.s32 1, %s16
  %s19 = scalar_select 0, %s18, %s16
  $region1: #{clip_forward.3} parent=0
    #allocation6 [shape = 'u8[8192]{0}', space=vmem, size = 0x2000, scoped, tag = 'output window, operand 0, single buffered']
    #allocation7 [shape = 's32[2]{0}', space=sflag, size = 0x8, scoped, tag = 'scoped memory for clip_forward.3']
    %20 = vsyncpa [#allocation7], 0
    loop: start=0, step=1, limit=14
    $region2: #{clip_forward.3} parent=1 // loop_pre_header
      _
    $region3: #{clip_forward.3} parent=1 // loop_header
      %s22 = sphi 0, %s26
      %p23 = scmp.ge.s32.totalorder %s22, 14
      %s29 = sphi 0, %s41
      %s30 = sphi 0, %s37
      %s31 = sphi 0, %s29
      %s32 = sphi 0, %s30
      %s33 = sphi 0, %s31
      %s34 = sphi 0, %s32
      %s44 = sphi 0, %s46
      %s47 = sphi 0, %s44
      %s48 = sphi 0, %s47
      %s64 = sphi 0, %s48
      %s70 = sphi 0, %s72
      %s73 = sphi 0, %s70
      %s74 = sphi 0, %s73
      %s90 = sphi 0, %s74
      %s96 = sphi 0, %s98
      %s99 = sphi 0, %s96
      %s100 = sphi 0, %s99
      %s116 = sphi 0, %s100
      %s122 = sphi 0, %s124
      %s125 = sphi 0, %s122
      %s126 = sphi 0, %s125
      %s142 = sphi 0, %s126
      %s148 = sphi 0, %s150
      %s151 = sphi 0, %s148
      %s152 = sphi 0, %s151
      %s168 = sphi 0, %s152
      %s174 = sphi 0, %s176
      %s177 = sphi 0, %s174
      %s178 = sphi 0, %s177
      %s194 = sphi 0, %s178
      %s200 = sphi 0, %s202
      %s203 = sphi 0, %s200
      %s204 = sphi 0, %s203
      %s220 = sphi 0, %s204
      %s226 = sphi 0, %s228
      %s229 = sphi 0, %s226
      %s230 = sphi 0, %s229
      %s246 = sphi 0, %s230
      %s252 = sphi 0, %s254
      %s255 = sphi 0, %s252
      %s256 = sphi 0, %s255
      %s272 = sphi 0, %s256
      %s278 = sphi 0, %s280
      %s281 = sphi 0, %s278
      %s282 = sphi 0, %s281
      %s298 = sphi 0, %s282
      %s304 = sphi 0, %s306
      %s307 = sphi 0, %s304
      %s308 = sphi 0, %s307
      %s324 = sphi 0, %s308
      %s330 = sphi 0, %s332
      %s333 = sphi 0, %s330
      %s334 = sphi 0, %s333
      %s350 = sphi 0, %s334
      %s356 = sphi 0, %s358
      %s359 = sphi 0, %s356
      %s360 = sphi 0, %s359
      %s376 = sphi 0, %s360
      %s380 = sphi 0, %s380
      %s382 = sphi 0, %s380
      %s383 = sphi 0, %s382
      %s397 = sphi 0, %s383
      %s401 = sphi 0, %s401
      %s403 = sphi 0, %s401
      %s404 = sphi 0, %s403
      %s418 = sphi 0, %s404
      %s424 = sphi 0, %s426
      %s427 = sphi 0, %s424
      %s428 = sphi 0, %s427
      %s444 = sphi 0, %s428
    $region4: #{clip_forward.3} parent=1 // loop_header_branch
      %25 = sbr.rel (%p23) target = $region8
    $region5: #{clip_forward.3} parent=1 // loop_body
      %s27 = ssub.s32 %s22, 1
      %s28 = ssub.s32 %s22, 2
      %s35 = sadd.s32 1, %s30
      %p36 = scmp.ge.s32.totalorder %s35, 12
      %s37 = scalar_select %p36, 0, %s35
      %s38 = sadd.s32 1, %s29
      %s39 = scalar_select %p36, %s38, %s29
      %p40 = scmp.ge.s32.totalorder %s39, 1
      %s41 = scalar_select %p40, 0, %s39
      %s42 = ssub.s32 %s29, %s41
      %p43 = scmp.eq.s32.totalorder %s42, 0
      %s45 = sadd.s32 %s44, 1
      %s46 = scalar_select %p43, %s44, %s45
      %p49 = pneg %p43
      %p50 = scmp.eq.s32.totalorder %s22, 11
      %p51 = por %p49, %p50
      %p52 = scmp.ne.s32.totalorder %s44, %s47
      %p53 = scmp.eq.s32.totalorder %s22, 0
      %p54 = por %p52, %p53
      %p55 = scmp.ne.s32.totalorder %s44, %s47
      %p56 = scmp.eq.s32.totalorder %s27, 11
      %p57 = por %p55, %p56
      %p58 = scmp.ne.s32.totalorder %s47, %s48
      %p59 = scmp.eq.s32.totalorder %s27, 0
      %p60 = por %p58, %p59
      %p61 = scmp.ne.s32.totalorder %s47, %s48
      %p62 = scmp.eq.s32.totalorder %s28, 11
      %p63 = por %p61, %p62
      %p65 = scmp.ne.s32.totalorder %s48, %s64
      %p66 = scmp.eq.s32.totalorder %s28, 0
      %p67 = por %p65, %p66
      %s68 = ssub.s32 %s30, %s37
      %p69 = scmp.eq.s32.totalorder %s68, 0
      %s71 = sadd.s32 %s70, 1
      %s72 = scalar_select %p69, %s70, %s71
      %p75 = pneg %p69
      %p76 = scmp.eq.s32.totalorder %s22, 11
      %p77 = por %p75, %p76
      %p78 = scmp.ne.s32.totalorder %s70, %s73
      %p79 = scmp.eq.s32.totalorder %s22, 0
      %p80 = por %p78, %p79
      %p81 = scmp.ne.s32.totalorder %s70, %s73
      %p82 = scmp.eq.s32.totalorder %s27, 11
      %p83 = por %p81, %p82
      %p84 = scmp.ne.s32.totalorder %s73, %s74
      %p85 = scmp.eq.s32.totalorder %s27, 0
      %p86 = por %p84, %p85
      %p87 = scmp.ne.s32.totalorder %s73, %s74
      %p88 = scmp.eq.s32.totalorder %s28, 11
      %p89 = por %p87, %p88
      %p91 = scmp.ne.s32.totalorder %s74, %s90
      %p92 = scmp.eq.s32.totalorder %s28, 0
      %p93 = por %p91, %p92
      %s94 = ssub.s32 %s30, %s37
      %p95 = scmp.eq.s32.totalorder %s94, 0
      %s97 = sadd.s32 %s96, 1
      %s98 = scalar_select %p95, %s96, %s97
      %p101 = pneg %p95
      %p102 = scmp.eq.s32.totalorder %s22, 11
      %p103 = por %p101, %p102
      %p104 = scmp.ne.s32.totalorder %s96, %s99
      %p105 = scmp.eq.s32.totalorder %s22, 0
      %p106 = por %p104, %p105
      %p107 = scmp.ne.s32.totalorder %s96, %s99
      %p108 = scmp.eq.s32.totalorder %s27, 11
      %p109 = por %p107, %p108
      %p110 = scmp.ne.s32.totalorder %s99, %s100
      %p111 = scmp.eq.s32.totalorder %s27, 0
      %p112 = por %p110, %p111
      %p113 = scmp.ne.s32.totalorder %s99, %s100
      %p114 = scmp.eq.s32.totalorder %s28, 11
      %p115 = por %p113, %p114
      %p117 = scmp.ne.s32.totalorder %s100, %s116
      %p118 = scmp.eq.s32.totalorder %s28, 0
      %p119 = por %p117, %p118
      %s120 = ssub.s32 %s30, %s37
      %p121 = scmp.eq.s32.totalorder %s120, 0
      %s123 = sadd.s32 %s122, 1
      %s124 = scalar_select %p121, %s122, %s123
      %p127 = pneg %p121
      %p128 = scmp.eq.s32.totalorder %s22, 11
      %p129 = por %p127, %p128
      %p130 = scmp.ne.s32.totalorder %s122, %s125
      %p131 = scmp.eq.s32.totalorder %s22, 0
      %p132 = por %p130, %p131
      %p133 = scmp.ne.s32.totalorder %s122, %s125
      %p134 = scmp.eq.s32.totalorder %s27, 11
      %p135 = por %p133, %p134
      %p136 = scmp.ne.s32.totalorder %s125, %s126
      %p137 = scmp.eq.s32.totalorder %s27, 0
      %p138 = por %p136, %p137
      %p139 = scmp.ne.s32.totalorder %s125, %s126
      %p140 = scmp.eq.s32.totalorder %s28, 11
      %p141 = por %p139, %p140
      %p143 = scmp.ne.s32.totalorder %s126, %s142
      %p144 = scmp.eq.s32.totalorder %s28, 0
      %p145 = por %p143, %p144
      %s146 = ssub.s32 %s30, %s37
      %p147 = scmp.eq.s32.totalorder %s146, 0
      %s149 = sadd.s32 %s148, 1
      %s150 = scalar_select %p147, %s148, %s149
      %p153 = pneg %p147
      %p154 = scmp.eq.s32.totalorder %s22, 11
      %p155 = por %p153, %p154
      %p156 = scmp.ne.s32.totalorder %s148, %s151
      %p157 = scmp.eq.s32.totalorder %s22, 0
      %p158 = por %p156, %p157
      %p159 = scmp.ne.s32.totalorder %s148, %s151
      %p160 = scmp.eq.s32.totalorder %s27, 11
      %p161 = por %p159, %p160
      %p162 = scmp.ne.s32.totalorder %s151, %s152
      %p163 = scmp.eq.s32.totalorder %s27, 0
      %p164 = por %p162, %p163
      %p165 = scmp.ne.s32.totalorder %s151, %s152
      %p166 = scmp.eq.s32.totalorder %s28, 11
      %p167 = por %p165, %p166
      %p169 = scmp.ne.s32.totalorder %s152, %s168
      %p170 = scmp.eq.s32.totalorder %s28, 0
      %p171 = por %p169, %p170
      %s172 = ssub.s32 %s30, %s37
      %p173 = scmp.eq.s32.totalorder %s172, 0
      %s175 = sadd.s32 %s174, 1
      %s176 = scalar_select %p173, %s174, %s175
      %p179 = pneg %p173
      %p180 = scmp.eq.s32.totalorder %s22, 11
      %p181 = por %p179, %p180
      %p182 = scmp.ne.s32.totalorder %s174, %s177
      %p183 = scmp.eq.s32.totalorder %s22, 0
      %p184 = por %p182, %p183
      %p185 = scmp.ne.s32.totalorder %s174, %s177
      %p186 = scmp.eq.s32.totalorder %s27, 11
      %p187 = por %p185, %p186
      %p188 = scmp.ne.s32.totalorder %s177, %s178
      %p189 = scmp.eq.s32.totalorder %s27, 0
      %p190 = por %p188, %p189
      %p191 = scmp.ne.s32.totalorder %s177, %s178
      %p192 = scmp.eq.s32.totalorder %s28, 11
      %p193 = por %p191, %p192
      %p195 = scmp.ne.s32.totalorder %s178, %s194
      %p196 = scmp.eq.s32.totalorder %s28, 0
      %p197 = por %p195, %p196
      %s198 = ssub.s32 %s30, %s37
      %p199 = scmp.eq.s32.totalorder %s198, 0
      %s201 = sadd.s32 %s200, 1
      %s202 = scalar_select %p199, %s200, %s201
      %p205 = pneg %p199
      %p206 = scmp.eq.s32.totalorder %s22, 11
      %p207 = por %p205, %p206
      %p208 = scmp.ne.s32.totalorder %s200, %s203
      %p209 = scmp.eq.s32.totalorder %s22, 0
      %p210 = por %p208, %p209
      %p211 = scmp.ne.s32.totalorder %s200, %s203
      %p212 = scmp.eq.s32.totalorder %s27, 11
      %p213 = por %p211, %p212
      %p214 = scmp.ne.s32.totalorder %s203, %s204
      %p215 = scmp.eq.s32.totalorder %s27, 0
      %p216 = por %p214, %p215
      %p217 = scmp.ne.s32.totalorder %s203, %s204
      %p218 = scmp.eq.s32.totalorder %s28, 11
      %p219 = por %p217, %p218
      %p221 = scmp.ne.s32.totalorder %s204, %s220
      %p222 = scmp.eq.s32.totalorder %s28, 0
      %p223 = por %p221, %p222
      %s224 = ssub.s32 %s30, %s37
      %p225 = scmp.eq.s32.totalorder %s224, 0
      %s227 = sadd.s32 %s226, 1
      %s228 = scalar_select %p225, %s226, %s227
      %p231 = pneg %p225
      %p232 = scmp.eq.s32.totalorder %s22, 11
      %p233 = por %p231, %p232
      %p234 = scmp.ne.s32.totalorder %s226, %s229
      %p235 = scmp.eq.s32.totalorder %s22, 0
      %p236 = por %p234, %p235
      %p237 = scmp.ne.s32.totalorder %s226, %s229
      %p238 = scmp.eq.s32.totalorder %s27, 11
      %p239 = por %p237, %p238
      %p240 = scmp.ne.s32.totalorder %s229, %s230
      %p241 = scmp.eq.s32.totalorder %s27, 0
      %p242 = por %p240, %p241
      %p243 = scmp.ne.s32.totalorder %s229, %s230
      %p244 = scmp.eq.s32.totalorder %s28, 11
      %p245 = por %p243, %p244
      %p247 = scmp.ne.s32.totalorder %s230, %s246
      %p248 = scmp.eq.s32.totalorder %s28, 0
      %p249 = por %p247, %p248
      %s250 = ssub.s32 %s30, %s37
      %p251 = scmp.eq.s32.totalorder %s250, 0
      %s253 = sadd.s32 %s252, 1
      %s254 = scalar_select %p251, %s252, %s253
      %p257 = pneg %p251
      %p258 = scmp.eq.s32.totalorder %s22, 11
      %p259 = por %p257, %p258
      %p260 = scmp.ne.s32.totalorder %s252, %s255
      %p261 = scmp.eq.s32.totalorder %s22, 0
      %p262 = por %p260, %p261
      %p263 = scmp.ne.s32.totalorder %s252, %s255
      %p264 = scmp.eq.s32.totalorder %s27, 11
      %p265 = por %p263, %p264
      %p266 = scmp.ne.s32.totalorder %s255, %s256
      %p267 = scmp.eq.s32.totalorder %s27, 0
      %p268 = por %p266, %p267
      %p269 = scmp.ne.s32.totalorder %s255, %s256
      %p270 = scmp.eq.s32.totalorder %s28, 11
      %p271 = por %p269, %p270
      %p273 = scmp.ne.s32.totalorder %s256, %s272
      %p274 = scmp.eq.s32.totalorder %s28, 0
      %p275 = por %p273, %p274
      %s276 = ssub.s32 %s30, %s37
      %p277 = scmp.eq.s32.totalorder %s276, 0
      %s279 = sadd.s32 %s278, 1
      %s280 = scalar_select %p277, %s278, %s279
      %p283 = pneg %p277
      %p284 = scmp.eq.s32.totalorder %s22, 11
      %p285 = por %p283, %p284
      %p286 = scmp.ne.s32.totalorder %s278, %s281
      %p287 = scmp.eq.s32.totalorder %s22, 0
      %p288 = por %p286, %p287
      %p289 = scmp.ne.s32.totalorder %s278, %s281
      %p290 = scmp.eq.s32.totalorder %s27, 11
      %p291 = por %p289, %p290
      %p292 = scmp.ne.s32.totalorder %s281, %s282
      %p293 = scmp.eq.s32.totalorder %s27, 0
      %p294 = por %p292, %p293
      %p295 = scmp.ne.s32.totalorder %s281, %s282
      %p296 = scmp.eq.s32.totalorder %s28, 11
      %p297 = por %p295, %p296
      %p299 = scmp.ne.s32.totalorder %s282, %s298
      %p300 = scmp.eq.s32.totalorder %s28, 0
      %p301 = por %p299, %p300
      %s302 = ssub.s32 %s30, %s37
      %p303 = scmp.eq.s32.totalorder %s302, 0
      %s305 = sadd.s32 %s304, 1
      %s306 = scalar_select %p303, %s304, %s305
      %p309 = pneg %p303
      %p310 = scmp.eq.s32.totalorder %s22, 11
      %p311 = por %p309, %p310
      %p312 = scmp.ne.s32.totalorder %s304, %s307
      %p313 = scmp.eq.s32.totalorder %s22, 0
      %p314 = por %p312, %p313
      %p315 = scmp.ne.s32.totalorder %s304, %s307
      %p316 = scmp.eq.s32.totalorder %s27, 11
      %p317 = por %p315, %p316
      %p318 = scmp.ne.s32.totalorder %s307, %s308
      %p319 = scmp.eq.s32.totalorder %s27, 0
      %p320 = por %p318, %p319
      %p321 = scmp.ne.s32.totalorder %s307, %s308
      %p322 = scmp.eq.s32.totalorder %s28, 11
      %p323 = por %p321, %p322
      %p325 = scmp.ne.s32.totalorder %s308, %s324
      %p326 = scmp.eq.s32.totalorder %s28, 0
      %p327 = por %p325, %p326
      %s328 = ssub.s32 %s30, %s37
      %p329 = scmp.eq.s32.totalorder %s328, 0
      %s331 = sadd.s32 %s330, 1
      %s332 = scalar_select %p329, %s330, %s331
      %p335 = pneg %p329
      %p336 = scmp.eq.s32.totalorder %s22, 11
      %p337 = por %p335, %p336
      %p338 = scmp.ne.s32.totalorder %s330, %s333
      %p339 = scmp.eq.s32.totalorder %s22, 0
      %p340 = por %p338, %p339
      %p341 = scmp.ne.s32.totalorder %s330, %s333
      %p342 = scmp.eq.s32.totalorder %s27, 11
      %p343 = por %p341, %p342
      %p344 = scmp.ne.s32.totalorder %s333, %s334
      %p345 = scmp.eq.s32.totalorder %s27, 0
      %p346 = por %p344, %p345
      %p347 = scmp.ne.s32.totalorder %s333, %s334
      %p348 = scmp.eq.s32.totalorder %s28, 11
      %p349 = por %p347, %p348
      %p351 = scmp.ne.s32.totalorder %s334, %s350
      %p352 = scmp.eq.s32.totalorder %s28, 0
      %p353 = por %p351, %p352
      %s354 = ssub.s32 %s30, %s37
      %p355 = scmp.eq.s32.totalorder %s354, 0
      %s357 = sadd.s32 %s356, 1
      %s358 = scalar_select %p355, %s356, %s357
      %p361 = pneg %p355
      %p362 = scmp.eq.s32.totalorder %s22, 11
      %p363 = por %p361, %p362
      %p364 = scmp.ne.s32.totalorder %s356, %s359
      %p365 = scmp.eq.s32.totalorder %s22, 0
      %p366 = por %p364, %p365
      %p367 = scmp.ne.s32.totalorder %s356, %s359
      %p368 = scmp.eq.s32.totalorder %s27, 11
      %p369 = por %p367, %p368
      %p370 = scmp.ne.s32.totalorder %s359, %s360
      %p371 = scmp.eq.s32.totalorder %s27, 0
      %p372 = por %p370, %p371
      %p373 = scmp.ne.s32.totalorder %s359, %s360
      %p374 = scmp.eq.s32.totalorder %s28, 11
      %p375 = por %p373, %p374
      %p377 = scmp.ne.s32.totalorder %s360, %s376
      %p378 = scmp.eq.s32.totalorder %s28, 0
      %p379 = por %p377, %p378
      %s381 = sadd.s32 %s380, 1
      %p384 = scmp.eq.s32.totalorder %s22, 11
      %p385 = scmp.ne.s32.totalorder %s380, %s382
      %p386 = scmp.eq.s32.totalorder %s22, 0
      %p387 = por %p385, %p386
      %p388 = scmp.ne.s32.totalorder %s380, %s382
      %p389 = scmp.eq.s32.totalorder %s27, 11
      %p390 = por %p388, %p389
      %p391 = scmp.ne.s32.totalorder %s382, %s383
      %p392 = scmp.eq.s32.totalorder %s27, 0
      %p393 = por %p391, %p392
      %p394 = scmp.ne.s32.totalorder %s382, %s383
      %p395 = scmp.eq.s32.totalorder %s28, 11
      %p396 = por %p394, %p395
      %p398 = scmp.ne.s32.totalorder %s383, %s397
      %p399 = scmp.eq.s32.totalorder %s28, 0
      %p400 = por %p398, %p399
      %s402 = sadd.s32 %s401, 1
      %p405 = scmp.eq.s32.totalorder %s22, 11
      %p406 = scmp.ne.s32.totalorder %s401, %s403
      %p407 = scmp.eq.s32.totalorder %s22, 0
      %p408 = por %p406, %p407
      %p409 = scmp.ne.s32.totalorder %s401, %s403
      %p410 = scmp.eq.s32.totalorder %s27, 11
      %p411 = por %p409, %p410
      %p412 = scmp.ne.s32.totalorder %s403, %s404
      %p413 = scmp.eq.s32.totalorder %s27, 0
      %p414 = por %p412, %p413
      %p415 = scmp.ne.s32.totalorder %s403, %s404
      %p416 = scmp.eq.s32.totalorder %s28, 11
      %p417 = por %p415, %p416
      %p419 = scmp.ne.s32.totalorder %s404, %s418
      %p420 = scmp.eq.s32.totalorder %s28, 0
      %p421 = por %p419, %p420
      %s422 = ssub.s32 %s29, %s41
      %p423 = scmp.eq.s32.totalorder %s422, 0
      %s425 = sadd.s32 %s424, 1
      %s426 = scalar_select %p423, %s424, %s425
      %p429 = pneg %p423
      %p430 = scmp.eq.s32.totalorder %s22, 11
      %p431 = por %p429, %p430
      %p432 = scmp.ne.s32.totalorder %s424, %s427
      %p433 = scmp.eq.s32.totalorder %s22, 0
      %p434 = por %p432, %p433
      %p435 = scmp.ne.s32.totalorder %s424, %s427
      %p436 = scmp.eq.s32.totalorder %s27, 11
      %p437 = por %p435, %p436
      %p438 = scmp.ne.s32.totalorder %s427, %s428
      %p439 = scmp.eq.s32.totalorder %s27, 0
      %p440 = por %p438, %p439
      %p441 = scmp.ne.s32.totalorder %s427, %s428
      %p442 = scmp.eq.s32.totalorder %s28, 11
      %p443 = por %p441, %p442
      %p445 = scmp.ne.s32.totalorder %s428, %s444
      %p446 = scmp.eq.s32.totalorder %s28, 0
      %p447 = por %p445, %p446
      %p448 = scmp.le.s32.totalorder 1, %s22
      %p449 = scmp.lt.s32.totalorder %s22, 13
      %p450 = pnand %p448, %p449
      %p451 = pneg %p450
      // Predicated region
      $region9: #{clip_forward.3} parent=5 // pred_check
        _
      $region10: #{clip_forward.3} parent=5 // pred_check_branch
        %453 = sbr.rel (%p450) target = $region12
      $region11: #{clip_forward.3} parent=5 // pred_region
        %s454 = ssub.s32 %s22, 1
        // Predicated region
        $region13: #{clip_forward.3} parent=11 // pred_check
          %p455 = pneg %p60
        $region14: #{clip_forward.3} parent=11 // pred_check_branch
          %457 = sbr.rel (%p455) target = $region16
        $region15: #{clip_forward.3} parent=11 // pred_region
          %s458 = smul.u32 2, %s31
          %p459 = scmp.lt.s32.totalorder %s458, 1
          %s460 = scalar_select %p459, %s458, 1
          %s461 = smul.addr %s460, 8
          %s462 = scalar_lea.vmem %s0, %s461
          %s463 = smul.u32 2, %s31
        $region16: #{clip_forward.3} parent=11 // pred_fallthru
          _
        // Predicated region
        $region17: #{clip_forward.3} parent=11 // pred_check
          %p464 = pneg %p393
        $region18: #{clip_forward.3} parent=11 // pred_check_branch
          %466 = sbr.rel (%p464) target = $region20
        $region19: #{clip_forward.3} parent=11 // pred_region
          _
        $region20: #{clip_forward.3} parent=11 // pred_fallthru
          _
        // Predicated region
        $region21: #{clip_forward.3} parent=11 // pred_check
          %p467 = pneg %p414
        $region22: #{clip_forward.3} parent=11 // pred_check_branch
          %469 = sbr.rel (%p467) target = $region24
        $region23: #{clip_forward.3} parent=11 // pred_region
          _
        $region24: #{clip_forward.3} parent=11 // pred_fallthru
          _
      $region12: #{clip_forward.3} parent=5 // pred_fallthru
        _
      %p470 = scmp.lt.s32.totalorder %s22, 12
      // Predicated region
      $region25: #{clip_forward.3} parent=5 // pred_check
        %p471 = pneg %p470
      $region26: #{clip_forward.3} parent=5 // pred_check_branch
        %473 = sbr.rel (%p471) target = $region28
      $region27: #{clip_forward.3} parent=5 // pred_region
        // Predicated region
        $region29: #{clip_forward.3} parent=27 // pred_check
          %p474 = pneg %p80
        $region30: #{clip_forward.3} parent=27 // pred_check_branch
          %476 = sbr.rel (%p474) target = $region32
        $region31: #{clip_forward.3} parent=27 // pred_region
          %p477 = scmp.lt.s32.totalorder %s30, 11
          %s478 = scalar_select %p477, %s30, 11
          %s479 = scalar_lea.vmem %s1, %s478
        $region32: #{clip_forward.3} parent=27 // pred_fallthru
          _
        // Predicated region
        $region33: #{clip_forward.3} parent=27 // pred_check
          %p480 = pneg %p106
        $region34: #{clip_forward.3} parent=27 // pred_check_branch
          %482 = sbr.rel (%p480) target = $region36
        $region35: #{clip_forward.3} parent=27 // pred_region
          %p483 = scmp.lt.s32.totalorder %s30, 11
          %s484 = scalar_select %p483, %s30, 11
          %s485 = scalar_lea.vmem %s2, %s484
        $region36: #{clip_forward.3} parent=27 // pred_fallthru
          _
        // Predicated region
        $region37: #{clip_forward.3} parent=27 // pred_check
          %p486 = pneg %p132
        $region38: #{clip_forward.3} parent=27 // pred_check_branch
          %488 = sbr.rel (%p486) target = $region40
        $region39: #{clip_forward.3} parent=27 // pred_region
          %p489 = scmp.lt.s32.totalorder %s30, 11
          %s490 = scalar_select %p489, %s30, 11
          %s491 = smul.addr %s490, 16
          %s492 = smul.addr %s491, 4
          %s493 = scalar_lea.vmem %s3, %s492
        $region40: #{clip_forward.3} parent=27 // pred_fallthru
          _
        // Predicated region
        $region41: #{clip_forward.3} parent=27 // pred_check
          %p494 = pneg %p158
        $region42: #{clip_forward.3} parent=27 // pred_check_branch
          %496 = sbr.rel (%p494) target = $region44
        $region43: #{clip_forward.3} parent=27 // pred_region
          %p497 = scmp.lt.s32.totalorder %s30, 11
          %s498 = scalar_select %p497, %s30, 11
          %s499 = smul.addr %s498, 2
          %s500 = scalar_lea.vmem %s4, %s499
        $region44: #{clip_forward.3} parent=27 // pred_fallthru
          _
        // Predicated region
        $region45: #{clip_forward.3} parent=27 // pred_check
          %p501 = pneg %p184
        $region46: #{clip_forward.3} parent=27 // pred_check_branch
          %503 = sbr.rel (%p501) target = $region48
        $region47: #{clip_forward.3} parent=27 // pred_region
          %p504 = scmp.lt.s32.totalorder %s30, 11
          %s505 = scalar_select %p504, %s30, 11
          %s506 = smul.addr %s505, 8
          %s507 = smul.addr %s506, 4
          %s508 = scalar_lea.vmem %s5, %s507
        $region48: #{clip_forward.3} parent=27 // pred_fallthru
          _
        // Predicated region
        $region49: #{clip_forward.3} parent=27 // pred_check
          %p509 = pneg %p210
        $region50: #{clip_forward.3} parent=27 // pred_check_branch
          %511 = sbr.rel (%p509) target = $region52
        $region51: #{clip_forward.3} parent=27 // pred_region
          %p512 = scmp.lt.s32.totalorder %s30, 11
          %s513 = scalar_select %p512, %s30, 11
          %s514 = scalar_lea.vmem %s6, %s513
        $region52: #{clip_forward.3} parent=27 // pred_fallthru
          _
        // Predicated region
        $region53: #{clip_forward.3} parent=27 // pred_check
          %p515 = pneg %p236
        $region54: #{clip_forward.3} parent=27 // pred_check_branch
          %517 = sbr.rel (%p515) target = $region56
        $region55: #{clip_forward.3} parent=27 // pred_region
          %p518 = scmp.lt.s32.totalorder %s30, 11
          %s519 = scalar_select %p518, %s30, 11
          %s520 = scalar_lea.vmem %s7, %s519
        $region56: #{clip_forward.3} parent=27 // pred_fallthru
          _
        // Predicated region
        $region57: #{clip_forward.3} parent=27 // pred_check
          %p521 = pneg %p262
        $region58: #{clip_forward.3} parent=27 // pred_check_branch
          %523 = sbr.rel (%p521) target = $region60
        $region59: #{clip_forward.3} parent=27 // pred_region
          %p524 = scmp.lt.s32.totalorder %s30, 11
          %s525 = scalar_select %p524, %s30, 11
          %s526 = scalar_lea.vmem %s8, %s525
        $region60: #{clip_forward.3} parent=27 // pred_fallthru
          _
        // Predicated region
        $region61: #{clip_forward.3} parent=27 // pred_check
          %p527 = pneg %p288
        $region62: #{clip_forward.3} parent=27 // pred_check_branch
          %529 = sbr.rel (%p527) target = $region64
        $region63: #{clip_forward.3} parent=27 // pred_region
          %p530 = scmp.lt.s32.totalorder %s30, 11
          %s531 = scalar_select %p530, %s30, 11
          %s532 = smul.addr %s531, 16
          %s533 = smul.addr %s532, 4
          %s534 = scalar_lea.vmem %s9, %s533
        $region64: #{clip_forward.3} parent=27 // pred_fallthru
          _
        // Predicated region
        $region65: #{clip_forward.3} parent=27 // pred_check
          %p535 = pneg %p314
        $region66: #{clip_forward.3} parent=27 // pred_check_branch
          %537 = sbr.rel (%p535) target = $region68
        $region67: #{clip_forward.3} parent=27 // pred_region
          %p538 = scmp.lt.s32.totalorder %s30, 11
          %s539 = scalar_select %p538, %s30, 11
          %s540 = smul.addr %s539, 2
          %s541 = scalar_lea.vmem %s10, %s540
        $region68: #{clip_forward.3} parent=27 // pred_fallthru
          _
        // Predicated region
        $region69: #{clip_forward.3} parent=27 // pred_check
          %p542 = pneg %p340
        $region70: #{clip_forward.3} parent=27 // pred_check_branch
          %544 = sbr.rel (%p542) target = $region72
        $region71: #{clip_forward.3} parent=27 // pred_region
          %p545 = scmp.lt.s32.totalorder %s30, 11
          %s546 = scalar_select %p545, %s30, 11
          %s547 = smul.addr %s546, 32
          %s548 = smul.addr %s547, 4
          %s549 = scalar_lea.vmem %s11, %s548
        $region72: #{clip_forward.3} parent=27 // pred_fallthru
          _
        // Predicated region
        $region73: #{clip_forward.3} parent=27 // pred_check
          %p550 = pneg %p366
        $region74: #{clip_forward.3} parent=27 // pred_check_branch
          %552 = sbr.rel (%p550) target = $region76
        $region75: #{clip_forward.3} parent=27 // pred_region
          %p553 = scmp.lt.s32.totalorder %s30, 11
          %s554 = scalar_select %p553, %s30, 11
          %s555 = scalar_lea.vmem %s12, %s554
        $region76: #{clip_forward.3} parent=27 // pred_fallthru
          _
      $region28: #{clip_forward.3} parent=5 // pred_fallthru
        _
      %p556 = scmp.le.s32.totalorder 1, %s22
      %p557 = scmp.lt.s32.totalorder %s22, 13
      %p558 = pnand %p556, %p557
      %p559 = pneg %p558
      // Predicated region
      $region77: #{clip_forward.3} parent=5 // pred_check
        _
      $region78: #{clip_forward.3} parent=5 // pred_check_branch
        %561 = sbr.rel (%p558) target = $region80
      $region79: #{clip_forward.3} parent=5 // pred_region
        %s562 = ssub.s32 %s22, 1
        %s563 = smul.u32 2, %s31
        %p564 = scmp.lt.s32.totalorder %s563, 1
        %s565 = scalar_select %p564, %s563, 1
        %s566 = smul.addr %s565, 8
        %s567 = scalar_lea.vmem %s0, %s566
        %p568 = pneg %p60
        %p569 = pneg %p57
        %p570 = scmp.lt.s32.totalorder %s32, 11
        %s571 = scalar_select %p570, %s32, 11
        %s572 = scalar_lea.vmem %s1, %s571
        %p573 = pneg %p86
        %p574 = pneg %p83
        %p575 = scmp.lt.s32.totalorder %s32, 11
        %s576 = scalar_select %p575, %s32, 11
        %s577 = scalar_lea.vmem %s2, %s576
        %p578 = pneg %p112
        %p579 = pneg %p109
        %p580 = scmp.lt.s32.totalorder %s32, 11
        %s581 = scalar_select %p580, %s32, 11
        %s582 = smul.addr %s581, 16
        %s583 = smul.addr %s582, 4
        %s584 = scalar_lea.vmem %s3, %s583
        %p585 = pneg %p138
        %p586 = pneg %p135
        %p587 = scmp.lt.s32.totalorder %s32, 11
        %s588 = scalar_select %p587, %s32, 11
        %s589 = smul.addr %s588, 2
        %s590 = scalar_lea.vmem %s4, %s589
        %p591 = pneg %p164
        %p592 = pneg %p161
        %p593 = scmp.lt.s32.totalorder %s32, 11
        %s594 = scalar_select %p593, %s32, 11
        %s595 = smul.addr %s594, 8
        %s596 = smul.addr %s595, 4
        %s597 = scalar_lea.vmem %s5, %s596
        %p598 = pneg %p190
        %p599 = pneg %p187
        %p600 = scmp.lt.s32.totalorder %s32, 11
        %s601 = scalar_select %p600, %s32, 11
        %s602 = scalar_lea.vmem %s6, %s601
        %p603 = pneg %p216
        %p604 = pneg %p213
        %p605 = scmp.lt.s32.totalorder %s32, 11
        %s606 = scalar_select %p605, %s32, 11
        %s607 = scalar_lea.vmem %s7, %s606
        %p608 = pneg %p242
        %p609 = pneg %p239
        %p610 = scmp.lt.s32.totalorder %s32, 11
        %s611 = scalar_select %p610, %s32, 11
        %s612 = scalar_lea.vmem %s8, %s611
        %p613 = pneg %p268
        %p614 = pneg %p265
        %p615 = scmp.lt.s32.totalorder %s32, 11
        %s616 = scalar_select %p615, %s32, 11
        %s617 = smul.addr %s616, 16
        %s618 = smul.addr %s617, 4
        %s619 = scalar_lea.vmem %s9, %s618
        %p620 = pneg %p294
        %p621 = pneg %p291
        %p622 = scmp.lt.s32.totalorder %s32, 11
        %s623 = scalar_select %p622, %s32, 11
        %s624 = smul.addr %s623, 2
        %s625 = scalar_lea.vmem %s10, %s624
        %p626 = pneg %p320
        %p627 = pneg %p317
        %p628 = scmp.lt.s32.totalorder %s32, 11
        %s629 = scalar_select %p628, %s32, 11
        %s630 = smul.addr %s629, 32
        %s631 = smul.addr %s630, 4
        %s632 = scalar_lea.vmem %s11, %s631
        %p633 = pneg %p346
        %p634 = pneg %p343
        %p635 = scmp.lt.s32.totalorder %s32, 11
        %s636 = scalar_select %p635, %s32, 11
        %s637 = scalar_lea.vmem %s12, %s636
        %p638 = pneg %p372
        %p639 = pneg %p369
        %p640 = pneg %p393
        %p641 = pneg %p390
        %p642 = pneg %p414
        %p643 = pneg %p411
        %p644 = pneg %p440
        %p645 = pneg %p437
        %s646 = smul.u32 2, %s31
        %p647 = scmp.lt.s32.totalorder %s646, 1
        %s648 = scalar_select %p647, %s646, 1
        %s649 = smul.addr %s648, 8
        %s650 = scalar_lea.vmem %s0, %s649
        %s651 = smul.u32 2, %s31
        %p652 = scmp.lt.s32.totalorder %s32, 11
        %s653 = scalar_select %p652, %s32, 11
        %s654 = scalar_lea.vmem %s1, %s653
        %p655 = scmp.lt.s32.totalorder %s32, 11
        %s656 = scalar_select %p655, %s32, 11
        %s657 = scalar_lea.vmem %s2, %s656
        %p658 = scmp.lt.s32.totalorder %s32, 11
        %s659 = scalar_select %p658, %s32, 11
        %s660 = smul.addr %s659, 16
        %s661 = smul.addr %s660, 4
        %s662 = scalar_lea.vmem %s3, %s661
        %p663 = scmp.lt.s32.totalorder %s32, 11
        %s664 = scalar_select %p663, %s32, 11
        %s665 = smul.addr %s664, 2
        %s666 = scalar_lea.vmem %s4, %s665
        %p667 = scmp.lt.s32.totalorder %s32, 11
        %s668 = scalar_select %p667, %s32, 11
        %s669 = smul.addr %s668, 8
        %s670 = smul.addr %s669, 4
        %s671 = scalar_lea.vmem %s5, %s670
        %p672 = scmp.lt.s32.totalorder %s32, 11
        %s673 = scalar_select %p672, %s32, 11
        %s674 = scalar_lea.vmem %s6, %s673
        %p675 = scmp.lt.s32.totalorder %s32, 11
        %s676 = scalar_select %p675, %s32, 11
        %s677 = scalar_lea.vmem %s7, %s676
        %p678 = scmp.lt.s32.totalorder %s32, 11
        %s679 = scalar_select %p678, %s32, 11
        %s680 = scalar_lea.vmem %s8, %s679
        %p681 = scmp.lt.s32.totalorder %s32, 11
        %s682 = scalar_select %p681, %s32, 11
        %s683 = smul.addr %s682, 16
        %s684 = smul.addr %s683, 4
        %s685 = scalar_lea.vmem %s9, %s684
        %p686 = scmp.lt.s32.totalorder %s32, 11
        %s687 = scalar_select %p686, %s32, 11
        %s688 = smul.addr %s687, 2
        %s689 = scalar_lea.vmem %s10, %s688
        %p690 = scmp.lt.s32.totalorder %s32, 11
        %s691 = scalar_select %p690, %s32, 11
        %s692 = smul.addr %s691, 32
        %s693 = smul.addr %s692, 4
        %s694 = scalar_lea.vmem %s11, %s693
        %p695 = scmp.lt.s32.totalorder %s32, 11
        %s696 = scalar_select %p695, %s32, 11
        %s697 = scalar_lea.vmem %s12, %s696
        %s698 = smul.u32 2, %s31
        %p700 = scmp.eq.s32.totalorder %s32, 0
        // Predicated region
        $region81: #{clip_forward.3} parent=79 // pred_check
          %p701 = pneg %p700
        $region82: #{clip_forward.3} parent=79 // pred_check_branch
          %703 = sbr.rel (%p701) target = $region84
        $region83: #{clip_forward.3} parent=79 // pred_region
          %v704 = vld [vmem:[%s650] sm:$0xff]
          %v705 = vld [vmem:[%s650 + $0x8] sm:$0xff]
          %vm706 = vcmask 523264
          %707 = vst.msk [vmem:[#allocation6] sm:$0xff] %vm706, %v704
          %708 = vst.msk [vmem:[#allocation6 + $0x8] sm:$0xff] %vm706, %v705
        $region84: #{clip_forward.3} parent=79 // pred_fallthru
          _
        %v709 = vld [vmem:[#allocation6] sm:$0xff]
        %v710 = vld [vmem:[#allocation6 + $0x8] sm:$0xff]
        %v711 = vld [vmem:[%s654] sm:$0x1]
        %v712 = vld [vmem:[%s657] sm:$0x1]
        %vm713 = vcmask 523264
        %v714 = vsel %vm713, %v709, 0.0
        %715 = vadd.xlane.f32.xlu0 %v714
        %v716 = vpop.xlane.xlu0 %715
        %v717 = vsel %vm713, %v710, 0.0
        %718 = vadd.xlane.f32.xlu0 %v717
        %v719 = vpop.xlane.xlu0 %718
        %v720 = vrcp.pop 64.0
        %v721 = vmul.f32 %v716, %v720
        %v722 = vmul.f32 %v719, %v720
        %v723 = vsub.f32 %v709, %v721
        %v724 = vsub.f32 %v710, %v722
        %v725 = vmul.f32 %v723, %v723
        %v726 = vmul.f32 %v724, %v724
        %v727 = vsel %vm713, %v725, 0.0
        %728 = vadd.xlane.f32.xlu0 %v727
        %v729 = vpop.xlane.xlu0 %728
        %v730 = vsel %vm713, %v726, 0.0
        %731 = vadd.xlane.f32.xlu0 %v730
        %v732 = vpop.xlane.xlu0 %731
        %v733 = vmul.f32 %v729, %v720
        %v734 = vmul.f32 %v732, %v720
        %v735 = vadd.f32 %v733, 1e-05
        %v736 = vadd.f32 %v734, 1e-05
        %v737 = vrsqrt.pop %v735
        %v738 = vrsqrt.pop %v736
        %v739 = vmul.f32 %v723, %v737
        %v740 = vmul.f32 %v724, %v738
        %v742 = vlaneseq
        %v743 = vshrl.u32 %v742, 7
        %v744 = vsub.s32 0, %v743
        %v745 = vrot.slane %v711, %v744
        %v747 = vmul.f32 %v739, %v745
        %v748 = vmul.f32 %v740, %v745
        %v750 = vlaneseq
        %v751 = vshrl.u32 %v750, 7
        %v752 = vsub.s32 0, %v751
        %v753 = vrot.slane %v712, %v752
        %v755 = vadd.f32 %v747, %v753
        %v756 = vadd.f32 %v748, %v753
        %v757 = vpack.c.bf16 %v756, %v755
        %v758 = vld [vmem:[%s662] sm:$0xff]
        %v759 = vld [vmem:[%s662 + $0x8] sm:$0xff]
        %v760 = vld [vmem:[%s662 + $0x10] sm:$0xff]
        %v761 = vld [vmem:[%s662 + $0x18] sm:$0xff]
        %v762 = vld [vmem:[%s662 + $0x20] sm:$0xff]
        %v763 = vld [vmem:[%s662 + $0x28] sm:$0xff]
        %v764 = vld [vmem:[%s662 + $0x30] sm:$0xff]
        %v765 = vld [vmem:[%s662 + $0x38] sm:$0xff]
        %v766 = vld [vmem:[%s666] sm:$0x3]
        %v768 = vlaneseq
        %v769 = vshrl.u32 %v768, 7
        %v770 = vsub.s32 0, %v769
        %v771 = vrot.slane %v766, %v770
        %v772 = vlaneseq
        %v773 = vshrl.u32 %v772, 7
        %v774 = vsub.s32 1, %v773
        %v775 = vrot.slane %v766, %v774
        %v786 = vunpack.c.l.b16 %v758
        %v787 = vunpack.c.h.b16 %v758
        %v788 = vunpack.c.l.b16 %v759
        %v789 = vunpack.c.h.b16 %v759
        %v790 = vunpack.c.l.b16 %v760
        %v791 = vunpack.c.h.b16 %v760
        %v792 = vunpack.c.l.b16 %v761
        %v793 = vunpack.c.h.b16 %v761
        %v794 = vunpack.c.l.b16 %v762
        %v795 = vunpack.c.h.b16 %v762
        %v796 = vunpack.c.l.b16 %v763
        %v797 = vunpack.c.h.b16 %v763
        %v798 = vunpack.c.l.b16 %v764
        %v799 = vunpack.c.h.b16 %v764
        %v800 = vunpack.c.l.b16 %v765
        %v801 = vunpack.c.h.b16 %v765
        %v802 = vpack.c.b16 %v788, %v786
        %v803 = vpack.c.b16 %v789, %v787
        %v804 = vpack.c.b16 %v792, %v790
        %v805 = vpack.c.b16 %v793, %v791
        %v806 = vpack.c.b16 %v796, %v794
        %v807 = vpack.c.b16 %v797, %v795
        %v808 = vpack.c.b16 %v800, %v798
        %v809 = vpack.c.b16 %v801, %v799
        %v819 = vsel %vm713, %v757, 0
        %821 = vmatprep.subr.bf16.mxu0 %v803
        %822 = vmatpush1.bf16.msra.mxu0 %v802
        %823 = vmatprep.subr.bf16.mxu0 %v805
        %824 = vmatpush1.bf16.msra.mxu0 %v804
        %825 = vmatprep.subr.bf16.mxu0 %v807
        %826 = vmatpush1.bf16.msra.mxu0 %v806
        %827 = vmatprep.subr.bf16.mxu0 %v809
        %828 = vmatpush1.bf16.msra.mxu0 %v808
        %829 = vmatprep.subr.bf16.mxu0 0
        %830 = vmatpush1.bf16.msra.mxu0 0
        %831 = vmatprep.subr.bf16.mxu0 0
        %832 = vmatpush1.bf16.msra.mxu0 0
        %833 = vmatprep.subr.bf16.mxu0 0
        %834 = vmatpush1.bf16.msra.mxu0 0
        %835 = vmatprep.subr.bf16.mxu0 0
        %836 = vmatpush1.bf16.msra.mxu0 0
        %837 = vmatprep.subr.bf16.mxu0 0
        %838 = vmatpush1.bf16.msra.mxu0 0
        %839 = vmatprep.subr.bf16.mxu0 0
        %840 = vmatpush1.bf16.msra.mxu0 0
        %841 = vmatprep.subr.bf16.mxu0 0
        %842 = vmatpush1.bf16.msra.mxu0 0
        %843 = vmatprep.subr.bf16.mxu0 0
        %844 = vmatpush1.bf16.msra.mxu0 0
        %845 = vmatprep.subr.bf16.mxu0 0
        %846 = vmatpush1.bf16.msra.mxu0 0
        %847 = vmatprep.subr.bf16.mxu0 0
        %848 = vmatpush1.bf16.msra.mxu0 0
        %849 = vmatprep.subr.bf16.mxu0 0
        %850 = vmatpush1.bf16.msra.mxu0 0
        %851 = vmatprep.subr.bf16.mxu0 0
        %852 = vmatpush1.bf16.msra.mxu0 0
        %853 = vmatprep.mubr.bf16.mxu0 0
        %854 = vmatmul.mubr.bf16.gmra.mrb[0].mxu0 %v819
        %v855 = vpop.f32.mrb[0].mxu0
        %v856 = vadd.f32 %v771, %v855
        %v857 = vpop.f32.mrb[0].mxu0
        %v858 = vadd.f32 %v775, %v857
        %v859 = vpop.f32.mrb[0].mxu0
        %v860 = vadd.f32 %v771, %v859
        %v861 = vpop.f32.mrb[0].mxu0
        %v862 = vadd.f32 %v775, %v861
        %863 = vdwg.mxu0
        %v864 = vpack.c.bf16 %v856, %v856
        %v865 = vpack.c.bf16 %v860, %v860
        %vm866 = vcmask 125952
        %867 = vst.msk [vmem:[#allocation2] sm:$0xf] %vm866, %v864
        %868 = vst.msk [vmem:[#allocation2 + $0x4] sm:$0xf] %vm866, %v865
        %v871 = vunpack.c.l.b16 %v864
        %v872 = vunpack.c.l.b16 %v865
        %v873 = vpack.c.b16 %v871, %v871
        %v874 = vpack.c.b16 %v872, %v872
        %875 = vrot.lane.b32.xlu0 %v873, 64
        %v876 = vpop.permute.xlu0 %875
        %877 = vrot.lane.b32.xlu0 %v874, 64
        %v878 = vpop.permute.xlu0 %877
        %881 = vst.msk [vmem:[#allocation3] sm:$0xf] %vm866, %v876
        %882 = vst.msk [vmem:[#allocation3 + $0x4] sm:$0xf] %vm866, %v878
        %v883 = vpack.c.bf16 %v858, %v858
        %v884 = vpack.c.bf16 %v862, %v862
        %885 = vst.msk [vmem:[#allocation4] sm:$0xf] %vm866, %v883
        %886 = vst.msk [vmem:[#allocation4 + $0x4] sm:$0xf] %vm866, %v884
        %887 = vrot.lane.b32.xlu0 %v873, 112
        %v888 = vpop.permute.xlu0 %887
        %889 = vrot.lane.b32.xlu0 %v874, 112
        %v890 = vpop.permute.xlu0 %889
        %s893 = scalar_lea.vmem [#allocation2], 8
        %894 = vst.msk [vmem:[%s893] sm:$0xf] %vm866, %v888
        %895 = vst.msk [vmem:[%s893 + $0x4] sm:$0xf] %vm866, %v890
        %896 = vrot.lane.b32.xlu0 %v873, 48
        %v897 = vpop.permute.xlu0 %896
        %898 = vrot.lane.b32.xlu0 %v874, 48
        %v899 = vpop.permute.xlu0 %898
        %s902 = scalar_lea.vmem [#allocation3], 8
        %903 = vst.msk [vmem:[%s902] sm:$0xf] %vm866, %v897
        %904 = vst.msk [vmem:[%s902 + $0x4] sm:$0xf] %vm866, %v899
        %v907 = vunpack.c.l.b16 %v883
        %v908 = vunpack.c.l.b16 %v884
        %v909 = vpack.c.b16 %v907, %v907
        %v910 = vpack.c.b16 %v908, %v908
        %911 = vrot.lane.b32.xlu0 %v909, 112
        %v912 = vpop.permute.xlu0 %911
        %913 = vrot.lane.b32.xlu0 %v910, 112
        %v914 = vpop.permute.xlu0 %913
        %s917 = scalar_lea.vmem [#allocation4], 8
        %918 = vst.msk [vmem:[%s917] sm:$0xf] %vm866, %v912
        %919 = vst.msk [vmem:[%s917 + $0x4] sm:$0xf] %vm866, %v914
        %920 = vrot.lane.b32.xlu0 %v873, 96
        %v921 = vpop.permute.xlu0 %920
        %922 = vrot.lane.b32.xlu0 %v874, 96
        %v923 = vpop.permute.xlu0 %922
        %s926 = scalar_lea.vmem [#allocation2], 16
        %927 = vst.msk [vmem:[%s926] sm:$0xf] %vm866, %v921
        %928 = vst.msk [vmem:[%s926 + $0x4] sm:$0xf] %vm866, %v923
        %929 = vrot.lane.b32.xlu0 %v873, 32
        %v930 = vpop.permute.xlu0 %929
        %931 = vrot.lane.b32.xlu0 %v874, 32
        %v932 = vpop.permute.xlu0 %931
        %s935 = scalar_lea.vmem [#allocation3], 16
        %936 = vst.msk [vmem:[%s935] sm:$0xf] %vm866, %v930
        %937 = vst.msk [vmem:[%s935 + $0x4] sm:$0xf] %vm866, %v932
        %938 = vrot.lane.b32.xlu0 %v909, 96
        %v939 = vpop.permute.xlu0 %938
        %940 = vrot.lane.b32.xlu0 %v910, 96
        %v941 = vpop.permute.xlu0 %940
        %s944 = scalar_lea.vmem [#allocation4], 16
        %945 = vst.msk [vmem:[%s944] sm:$0xf] %vm866, %v939
        %946 = vst.msk [vmem:[%s944 + $0x4] sm:$0xf] %vm866, %v941
        %947 = vrot.lane.b32.xlu0 %v873, 80
        %v948 = vpop.permute.xlu0 %947
        %949 = vrot.lane.b32.xlu0 %v874, 80
        %v950 = vpop.permute.xlu0 %949
        %s953 = scalar_lea.vmem [#allocation2], 24
        %954 = vst.msk [vmem:[%s953] sm:$0xf] %vm866, %v948
        %955 = vst.msk [vmem:[%s953 + $0x4] sm:$0xf] %vm866, %v950
        %956 = vrot.lane.b32.xlu0 %v873, 16
        %v957 = vpop.permute.xlu0 %956
        %958 = vrot.lane.b32.xlu0 %v874, 16
        %v959 = vpop.permute.xlu0 %958
        %s962 = scalar_lea.vmem [#allocation3], 24
        %963 = vst.msk [vmem:[%s962] sm:$0xf] %vm866, %v957
        %964 = vst.msk [vmem:[%s962 + $0x4] sm:$0xf] %vm866, %v959
        %965 = vrot.lane.b32.xlu0 %v909, 80
        %v966 = vpop.permute.xlu0 %965
        %967 = vrot.lane.b32.xlu0 %v910, 80
        %v968 = vpop.permute.xlu0 %967
        %s971 = scalar_lea.vmem [#allocation4], 24
        %972 = vst.msk [vmem:[%s971] sm:$0xf] %vm866, %v966
        %973 = vst.msk [vmem:[%s971 + $0x4] sm:$0xf] %vm866, %v968
        %v974 = vld [vmem:[#allocation2] sm:$0xf]
        %v975 = vld [vmem:[#allocation2 + $0x4] sm:$0xf]
        %v976 = vld [vmem:[#allocation2 + $0x8] sm:$0xf]
        %v977 = vld [vmem:[#allocation2 + $0xc] sm:$0xf]
        %v978 = vld [vmem:[#allocation2 + $0x10] sm:$0xf]
        %v979 = vld [vmem:[#allocation2 + $0x14] sm:$0xf]
        %v980 = vld [vmem:[#allocation2 + $0x18] sm:$0xf]
        %v981 = vld [vmem:[#allocation2 + $0x1c] sm:$0xf]
        %v982 = vld [vmem:[#allocation3] sm:$0xf]
        %v983 = vld [vmem:[#allocation3 + $0x4] sm:$0xf]
        %v984 = vld [vmem:[#allocation3 + $0x8] sm:$0xf]
        %v985 = vld [vmem:[#allocation3 + $0xc] sm:$0xf]
        %v986 = vld [vmem:[#allocation3 + $0x10] sm:$0xf]
        %v987 = vld [vmem:[#allocation3 + $0x14] sm:$0xf]
        %v988 = vld [vmem:[#allocation3 + $0x18] sm:$0xf]
        %v989 = vld [vmem:[#allocation3 + $0x1c] sm:$0xf]
        %v990 = vld [vmem:[#allocation4] sm:$0xf]
        %v991 = vld [vmem:[#allocation4 + $0x4] sm:$0xf]
        %v992 = vld [vmem:[#allocation4 + $0x8] sm:$0xf]
        %v993 = vld [vmem:[#allocation4 + $0xc] sm:$0xf]
        %v994 = vld [vmem:[#allocation4 + $0x10] sm:$0xf]
        %v995 = vld [vmem:[#allocation4 + $0x14] sm:$0xf]
        %v996 = vld [vmem:[#allocation4 + $0x18] sm:$0xf]
        %v997 = vld [vmem:[#allocation4 + $0x1c] sm:$0xf]
        %vm998 = vcmask 130048
        %v1000 = vsel %vm998, %v974, 0
        %v1003 = vsel %vm998, %v982, 0
        %1005 = vmatprep.subr.bf16.mxu0 0
        %1006 = vmatpush1.bf16.xpose.msra.mxu0 %v1003
        %1007 = vmatprep.subr.bf16.mxu0 0
        %1008 = vmatpush1.bf16.xpose.msra.mxu0 0
        %1009 = vmatprep.subr.bf16.mxu0 0
        %1010 = vmatpush1.bf16.xpose.msra.mxu0 0
        %1011 = vmatprep.subr.bf16.mxu0 0
        %1012 = vmatpush1.bf16.xpose.msra.mxu0 0
        %1013 = vmatprep.subr.bf16.mxu0 0
        %1014 = vmatpush1.bf16.xpose.msra.mxu0 0
        %1015 = vmatprep.subr.bf16.mxu0 0
        %1016 = vmatpush1.bf16.xpose.msra.mxu0 0
        %1017 = vmatprep.subr.bf16.mxu0 0
        %1018 = vmatpush1.bf16.xpose.msra.mxu0 0
        %1019 = vmatprep.subr.bf16.mxu0 0
        %1020 = vmatpush1.bf16.xpose.msra.mxu0 0
        %1021 = vmatprep.subr.bf16.mxu0 0
        %1022 = vmatpush1.bf16.xpose.msra.mxu0 0
        %1023 = vmatprep.subr.bf16.mxu0 0
        %1024 = vmatpush1.bf16.xpose.msra.mxu0 0
        %1025 = vmatprep.subr.bf16.mxu0 0
        %1026 = vmatpush1.bf16.xpose.msra.mxu0 0
        %1027 = vmatprep.subr.bf16.mxu0 0
        %1028 = vmatpush1.bf16.xpose.msra.mxu0 0
        %1029 = vmatprep.subr.bf16.mxu0 0
        %1030 = vmatpush1.bf16.xpose.msra.mxu0 0
        %1031 = vmatprep.subr.bf16.mxu0 0
        %1032 = vmatpush1.bf16.xpose.msra.mxu0 0
        %1033 = vmatprep.subr.bf16.mxu0 0
        %1034 = vmatpush1.bf16.xpose.msra.mxu0 0
        %1035 = vmatprep.subr.bf16.mxu0 0
        %1036 = vmatpush1.bf16.xpose.msra.mxu0 0
        %1037 = vmatprep.mubr.bf16.mxu0 0
        %1038 = vmatmul.mubr.bf16.gmra.mrb[0].mxu0 %v1000
        %v1039 = vpop.f32.mrb[0].mxu0
        %v1040 = vadd.f32 0.0, %v1039
        %v1041 = vpop.f32.mrb[0].mxu0
        %v1042 = vpop.f32.mrb[0].mxu0
        %v1043 = vpop.f32.mrb[0].mxu0
        %1044 = vdwg.mxu0
        %v1046 = vsel %vm998, %v975, 0
        %v1049 = vsel %vm998, %v983, 0
        %1051 = vmatprep.subr.bf16.mxu0 0
        %1052 = vmatpush1.bf16.xpose.msra.mxu0 %v1049
        %1053 = vmatprep.subr.bf16.mxu0 0
        %1054 = vmatpush1.bf16.xpose.msra.mxu0 0
        %1055 = vmatprep.subr.bf16.mxu0 0
        %1056 = vmatpush1.bf16.xpose.msra.mxu0 0
        %1057 = vmatprep.subr.bf16.mxu0 0
        %1058 = vmatpush1.bf16.xpose.msra.mxu0 0
        %1059 = vmatprep.subr.bf16.mxu0 0
        %1060 = vmatpush1.bf16.xpose.msra.mxu0 0
        %1061 = vmatprep.subr.bf16.mxu0 0
        %1062 = vmatpush1.bf16.xpose.msra.mxu0 0
        %1063 = vmatprep.subr.bf16.mxu0 0
        %1064 = vmatpush1.bf16.xpose.msra.mxu0 0
        %1065 = vmatprep.subr.bf16.mxu0 0
        %1066 = vmatpush1.bf16.xpose.msra.mxu0 0
        %1067 = vmatprep.subr.bf16.mxu0 0
        %1068 = vmatpush1.bf16.xpose.msra.mxu0 0
        %1069 = vmatprep.subr.bf16.mxu0 0
        %1070 = vmatpush1.bf16.xpose.msra.mxu0 0
        %1071 = vmatprep.subr.bf16.mxu0 0
        %1072 = vmatpush1.bf16.xpose.msra.mxu0 0
        %1073 = vmatprep.subr.bf16.mxu0 0
        %1074 = vmatpush1.bf16.xpose.msra.mxu0 0
        %1075 = vmatprep.subr.bf16.mxu0 0
        %1076 = vmatpush1.bf16.xpose.msra.mxu0 0
        %1077 = vmatprep.subr.bf16.mxu0 0
        %1078 = vmatpush1.bf16.xpose.msra.mxu0 0
        %1079 = vmatprep.subr.bf16.mxu0 0
        %1080 = vmatpush1.bf16.xpose.msra.mxu0 0
        %1081 = vmatprep.subr.bf16.mxu0 0
        %1082 = vmatpush1.bf16.xpose.msra.mxu0 0
        %1083 = vmatprep.mubr.bf16.mxu0 0
        %1084 = vmatmul.mubr.bf16.gmra.mrb[0].mxu0 %v1046
        %v1085 = vpop.f32.mrb[0].mxu0
        %v1086 = vadd.f32 0.0, %v1085
        %v1087 = vpop.f32.mrb[0].mxu0
        %v1088 = vpop.f32.mrb[0].mxu0
        %v1089 = vpop.f32.mrb[0].mxu0
        %1090 = vdwg.mxu0
        %v1092 = vsel %vm998, %v976, 0
        %v1095 = vsel %vm998, %v984, 0
        %1097 = vmatprep.subr.bf16.mxu0 0
        %1098 = vmatpush1.bf16.xpose.msra.mxu0 %v1095
        %1099 = vmatprep.subr.bf16.mxu0 0
        %1100 = vmatpush1.bf16.xpose.msra.mxu0 0
        %1101 = vmatprep.subr.bf16.mxu0 0
        %1102 = vmatpush1.bf16.xpose.msra.mxu0 0
        %1103 = vmatprep.subr.bf16.mxu0 0
        %1104 = vmatpush1.bf16.xpose.msra.mxu0 0
        %1105 = vmatprep.subr.bf16.mxu0 0
        %1106 = vmatpush1.bf16.xpose.msra.mxu0 0
        %1107 = vmatprep.subr.bf16.mxu0 0
        %1108 = vmatpush1.bf16.xpose.msra.mxu0 0
        %1109 = vmatprep.subr.bf16.mxu0 0
        %1110 = vmatpush1.bf16.xpose.msra.mxu0 0
        %1111 = vmatprep.subr.bf16.mxu0 0
        %1112 = vmatpush1.bf16.xpose.msra.mxu0 0
        %1113 = vmatprep.subr.bf16.mxu0 0
        %1114 = vmatpush1.bf16.xpose.msra.mxu0 0
        %1115 = vmatprep.subr.bf16.mxu0 0
        %1116 = vmatpush1.bf16.xpose.msra.mxu0 0
        %1117 = vmatprep.subr.bf16.mxu0 0
        %1118 = vmatpush1.bf16.xpose.msra.mxu0 0
        %1119 = vmatprep.subr.bf16.mxu0 0
        %1120 = vmatpush1.bf16.xpose.msra.mxu0 0
        %1121 = vmatprep.subr.bf16.mxu0 0
        %1122 = vmatpush1.bf16.xpose.msra.mxu0 0
        %1123 = vmatprep.subr.bf16.mxu0 0
        %1124 = vmatpush1.bf16.xpose.msra.mxu0 0
        %1125 = vmatprep.subr.bf16.mxu0 0
        %1126 = vmatpush1.bf16.xpose.msra.mxu0 0
        %1127 = vmatprep.subr.bf16.mxu0 0
        %1128 = vmatpush1.bf16.xpose.msra.mxu0 0
        %1129 = vmatprep.mubr.bf16.mxu0 0
        %1130 = vmatmul.mubr.bf16.gmra.mrb[0].mxu0 %v1092
        %v1131 = vpop.f32.mrb[0].mxu0
        %v1132 = vadd.f32 0.0, %v1131
        %v1133 = vpop.f32.mrb[0].mxu0
        %v1134 = vpop.f32.mrb[0].mxu0
        %v1135 = vpop.f32.mrb[0].mxu0
        %1136 = vdwg.mxu0
        %v1138 = vsel %vm998, %v977, 0
        %v1141 = vsel %vm998, %v985, 0
        %1143 = vmatprep.subr.bf16.mxu0 0
        %1144 = vmatpush1.bf16.xpose.msra.mxu0 %v1141
        %1145 = vmatprep.subr.bf16.mxu0 0
        %1146 = vmatpush1.bf16.xpose.msra.mxu0 0
        %1147 = vmatprep.subr.bf16.mxu0 0
        %1148 = vmatpush1.bf16.xpose.msra.mxu0 0
        %1149 = vmatprep.subr.bf16.mxu0 0
        %1150 = vmatpush1.bf16.xpose.msra.mxu0 0
        %1151 = vmatprep.subr.bf16.mxu0 0
        %1152 = vmatpush1.bf16.xpose.msra.mxu0 0
        %1153 = vmatprep.subr.bf16.mxu0 0
        %1154 = vmatpush1.bf16.xpose.msra.mxu0 0
        %1155 = vmatprep.subr.bf16.mxu0 0
        %1156 = vmatpush1.bf16.xpose.msra.mxu0 0
        %1157 = vmatprep.subr.bf16.mxu0 0
        %1158 = vmatpush1.bf16.xpose.msra.mxu0 0
        %1159 = vmatprep.subr.bf16.mxu0 0
        %1160 = vmatpush1.bf16.xpose.msra.mxu0 0
        %1161 = vmatprep.subr.bf16.mxu0 0
        %1162 = vmatpush1.bf16.xpose.msra.mxu0 0
        %1163 = vmatprep.subr.bf16.mxu0 0
        %1164 = vmatpush1.bf16.xpose.msra.mxu0 0
        %1165 = vmatprep.subr.bf16.mxu0 0
        %1166 = vmatpush1.bf16.xpose.msra.mxu0 0
        %1167 = vmatprep.subr.bf16.mxu0 0
        %1168 = vmatpush1.bf16.xpose.msra.mxu0 0
        %1169 = vmatprep.subr.bf16.mxu0 0
        %1170 = vmatpush1.bf16.xpose.msra.mxu0 0
        %1171 = vmatprep.subr.bf16.mxu0 0
        %1172 = vmatpush1.bf16.xpose.msra.mxu0 0
        %1173 = vmatprep.subr.bf16.mxu0 0
        %1174 = vmatpush1.bf16.xpose.msra.mxu0 0
        %1175 = vmatprep.mubr.bf16.mxu0 0
        %1176 = vmatmul.mubr.bf16.gmra.mrb[0].mxu0 %v1138
        %v1177 = vpop.f32.mrb[0].mxu0
        %v1178 = vadd.f32 0.0, %v1177
        %v1179 = vpop.f32.mrb[0].mxu0
        %v1180 = vpop.f32.mrb[0].mxu0
        %v1181 = vpop.f32.mrb[0].mxu0
        %1182 = vdwg.mxu0
        %v1184 = vsel %vm998, %v978, 0
        %v1187 = vsel %vm998, %v986, 0
        %1189 = vmatprep.subr.bf16.mxu0 0
        %1190 = vmatpush1.bf16.xpose.msra.mxu0 %v1187
        %1191 = vmatprep.subr.bf16.mxu0 0
        %1192 = vmatpush1.bf16.xpose.msra.mxu0 0
        %1193 = vmatprep.subr.bf16.mxu0 0
        %1194 = vmatpush1.bf16.xpose.msra.mxu0 0
        %1195 = vmatprep.subr.bf16.mxu0 0
        %1196 = vmatpush1.bf16.xpose.msra.mxu0 0
        %1197 = vmatprep.subr.bf16.mxu0 0
        %1198 = vmatpush1.bf16.xpose.msra.mxu0 0
        %1199 = vmatprep.subr.bf16.mxu0 0
        %1200 = vmatpush1.bf16.xpose.msra.mxu0 0
        %1201 = vmatprep.subr.bf16.mxu0 0
        %1202 = vmatpush1.bf16.xpose.msra.mxu0 0
        %1203 = vmatprep.subr.bf16.mxu0 0
        %1204 = vmatpush1.bf16.xpose.msra.mxu0 0
        %1205 = vmatprep.subr.bf16.mxu0 0
        %1206 = vmatpush1.bf16.xpose.msra.mxu0 0
        %1207 = vmatprep.subr.bf16.mxu0 0
        %1208 = vmatpush1.bf16.xpose.msra.mxu0 0
        %1209 = vmatprep.subr.bf16.mxu0 0
        %1210 = vmatpush1.bf16.xpose.msra.mxu0 0
        %1211 = vmatprep.subr.bf16.mxu0 0
        %1212 = vmatpush1.bf16.xpose.msra.mxu0 0
        %1213 = vmatprep.subr.bf16.mxu0 0
        %1214 = vmatpush1.bf16.xpose.msra.mxu0 0
        %1215 = vmatprep.subr.bf16.mxu0 0
        %1216 = vmatpush1.bf16.xpose.msra.mxu0 0
        %1217 = vmatprep.subr.bf16.mxu0 0
        %1218 = vmatpush1.bf16.xpose.msra.mxu0 0
        %1219 = vmatprep.subr.bf16.mxu0 0
        %1220 = vmatpush1.bf16.xpose.msra.mxu0 0
        %1221 = vmatprep.mubr.bf16.mxu0 0
        %1222 = vmatmul.mubr.bf16.gmra.mrb[0].mxu0 %v1184
        %v1223 = vpop.f32.mrb[0].mxu0
        %v1224 = vadd.f32 0.0, %v1223
        %v1225 = vpop.f32.mrb[0].mxu0
        %v1226 = vpop.f32.mrb[0].mxu0
        %v1227 = vpop.f32.mrb[0].mxu0
        %1228 = vdwg.mxu0
        %v1230 = vsel %vm998, %v979, 0
        %v1233 = vsel %vm998, %v987, 0
        %1235 = vmatprep.subr.bf16.mxu0 0
        %1236 = vmatpush1.bf16.xpose.msra.mxu0 %v1233
        %1237 = vmatprep.subr.bf16.mxu0 0
        %1238 = vmatpush1.bf16.xpose.msra.mxu0 0
        %1239 = vmatprep.subr.bf16.mxu0 0
        %1240 = vmatpush1.bf16.xpose.msra.mxu0 0
        %1241 = vmatprep.subr.bf16.mxu0 0
        %1242 = vmatpush1.bf16.xpose.msra.mxu0 0
        %1243 = vmatprep.subr.bf16.mxu0 0
        %1244 = vmatpush1.bf16.xpose.msra.mxu0 0
        %1245 = vmatprep.subr.bf16.mxu0 0
        %1246 = vmatpush1.bf16.xpose.msra.mxu0 0
        %1247 = vmatprep.subr.bf16.mxu0 0
        %1248 = vmatpush1.bf16.xpose.msra.mxu0 0
        %1249 = vmatprep.subr.bf16.mxu0 0
        %1250 = vmatpush1.bf16.xpose.msra.mxu0 0
        %1251 = vmatprep.subr.bf16.mxu0 0
        %1252 = vmatpush1.bf16.xpose.msra.mxu0 0
        %1253 = vmatprep.subr.bf16.mxu0 0
        %1254 = vmatpush1.bf16.xpose.msra.mxu0 0
        %1255 = vmatprep.subr.bf16.mxu0 0
        %1256 = vmatpush1.bf16.xpose.msra.mxu0 0
        %1257 = vmatprep.subr.bf16.mxu0 0
        %1258 = vmatpush1.bf16.xpose.msra.mxu0 0
        %1259 = vmatprep.subr.bf16.mxu0 0
        %1260 = vmatpush1.bf16.xpose.msra.mxu0 0
        %1261 = vmatprep.subr.bf16.mxu0 0
        %1262 = vmatpush1.bf16.xpose.msra.mxu0 0
        %1263 = vmatprep.subr.bf16.mxu0 0
        %1264 = vmatpush1.bf16.xpose.msra.mxu0 0
        %1265 = vmatprep.subr.bf16.mxu0 0
        %1266 = vmatpush1.bf16.xpose.msra.mxu0 0
        %1267 = vmatprep.mubr.bf16.mxu0 0
        %1268 = vmatmul.mubr.bf16.gmra.mrb[0].mxu0 %v1230
        %v1269 = vpop.f32.mrb[0].mxu0
        %v1270 = vadd.f32 0.0, %v1269
        %v1271 = vpop.f32.mrb[0].mxu0
        %v1272 = vpop.f32.mrb[0].mxu0
        %v1273 = vpop.f32.mrb[0].mxu0
        %1274 = vdwg.mxu0
        %v1276 = vsel %vm998, %v980, 0
        %v1279 = vsel %vm998, %v988, 0
        %1281 = vmatprep.subr.bf16.mxu0 0
        %1282 = vmatpush1.bf16.xpose.msra.mxu0 %v1279
        %1283 = vmatprep.subr.bf16.mxu0 0
        %1284 = vmatpush1.bf16.xpose.msra.mxu0 0
        %1285 = vmatprep.subr.bf16.mxu0 0
        %1286 = vmatpush1.bf16.xpose.msra.mxu0 0
        %1287 = vmatprep.subr.bf16.mxu0 0
        %1288 = vmatpush1.bf16.xpose.msra.mxu0 0
        %1289 = vmatprep.subr.bf16.mxu0 0
        %1290 = vmatpush1.bf16.xpose.msra.mxu0 0
        %1291 = vmatprep.subr.bf16.mxu0 0
        %1292 = vmatpush1.bf16.xpose.msra.mxu0 0
        %1293 = vmatprep.subr.bf16.mxu0 0
        %1294 = vmatpush1.bf16.xpose.msra.mxu0 0
        %1295 = vmatprep.subr.bf16.mxu0 0
        %1296 = vmatpush1.bf16.xpose.msra.mxu0 0
        %1297 = vmatprep.subr.bf16.mxu0 0
        %1298 = vmatpush1.bf16.xpose.msra.mxu0 0
        %1299 = vmatprep.subr.bf16.mxu0 0
        %1300 = vmatpush1.bf16.xpose.msra.mxu0 0
        %1301 = vmatprep.subr.bf16.mxu0 0
        %1302 = vmatpush1.bf16.xpose.msra.mxu0 0
        %1303 = vmatprep.subr.bf16.mxu0 0
        %1304 = vmatpush1.bf16.xpose.msra.mxu0 0
        %1305 = vmatprep.subr.bf16.mxu0 0
        %1306 = vmatpush1.bf16.xpose.msra.mxu0 0
        %1307 = vmatprep.subr.bf16.mxu0 0
        %1308 = vmatpush1.bf16.xpose.msra.mxu0 0
        %1309 = vmatprep.subr.bf16.mxu0 0
        %1310 = vmatpush1.bf16.xpose.msra.mxu0 0
        %1311 = vmatprep.subr.bf16.mxu0 0
        %1312 = vmatpush1.bf16.xpose.msra.mxu0 0
        %1313 = vmatprep.mubr.bf16.mxu0 0
        %1314 = vmatmul.mubr.bf16.gmra.mrb[0].mxu0 %v1276
        %v1315 = vpop.f32.mrb[0].mxu0
        %v1316 = vadd.f32 0.0, %v1315
        %v1317 = vpop.f32.mrb[0].mxu0
        %v1318 = vpop.f32.mrb[0].mxu0
        %v1319 = vpop.f32.mrb[0].mxu0
        %1320 = vdwg.mxu0
        %v1322 = vsel %vm998, %v981, 0
        %v1325 = vsel %vm998, %v989, 0
        %1327 = vmatprep.subr.bf16.mxu0 0
        %1328 = vmatpush1.bf16.xpose.msra.mxu0 %v1325
        %1329 = vmatprep.subr.bf16.mxu0 0
        %1330 = vmatpush1.bf16.xpose.msra.mxu0 0
        %1331 = vmatprep.subr.bf16.mxu0 0
        %1332 = vmatpush1.bf16.xpose.msra.mxu0 0
        %1333 = vmatprep.subr.bf16.mxu0 0
        %1334 = vmatpush1.bf16.xpose.msra.mxu0 0
        %1335 = vmatprep.subr.bf16.mxu0 0
        %1336 = vmatpush1.bf16.xpose.msra.mxu0 0
        %1337 = vmatprep.subr.bf16.mxu0 0
        %1338 = vmatpush1.bf16.xpose.msra.mxu0 0
        %1339 = vmatprep.subr.bf16.mxu0 0
        %1340 = vmatpush1.bf16.xpose.msra.mxu0 0
        %1341 = vmatprep.subr.bf16.mxu0 0
        %1342 = vmatpush1.bf16.xpose.msra.mxu0 0
        %1343 = vmatprep.subr.bf16.mxu0 0
        %1344 = vmatpush1.bf16.xpose.msra.mxu0 0
        %1345 = vmatprep.subr.bf16.mxu0 0
        %1346 = vmatpush1.bf16.xpose.msra.mxu0 0
        %1347 = vmatprep.subr.bf16.mxu0 0
        %1348 = vmatpush1.bf16.xpose.msra.mxu0 0
        %1349 = vmatprep.subr.bf16.mxu0 0
        %1350 = vmatpush1.bf16.xpose.msra.mxu0 0
        %1351 = vmatprep.subr.bf16.mxu0 0
        %1352 = vmatpush1.bf16.xpose.msra.mxu0 0
        %1353 = vmatprep.subr.bf16.mxu0 0
        %1354 = vmatpush1.bf16.xpose.msra.mxu0 0
        %1355 = vmatprep.subr.bf16.mxu0 0
        %1356 = vmatpush1.bf16.xpose.msra.mxu0 0
        %1357 = vmatprep.subr.bf16.mxu0 0
        %1358 = vmatpush1.bf16.xpose.msra.mxu0 0
        %1359 = vmatprep.mubr.bf16.mxu0 0
        %1360 = vmatmul.mubr.bf16.gmra.mrb[0].mxu0 %v1322
        %v1361 = vpop.f32.mrb[0].mxu0
        %v1362 = vadd.f32 0.0, %v1361
        %v1363 = vpop.f32.mrb[0].mxu0
        %v1364 = vpop.f32.mrb[0].mxu0
        %v1365 = vpop.f32.mrb[0].mxu0
        %1366 = vdwg.mxu0
        %v1367 = vmul.f32 %v1040, 0.25
        %v1368 = vmul.f32 %v1086, 0.25
        %v1369 = vmul.f32 %v1132, 0.25
        %v1370 = vmul.f32 %v1178, 0.25
        %v1371 = vmul.f32 %v1224, 0.25
        %v1372 = vmul.f32 %v1270, 0.25
        %v1373 = vmul.f32 %v1316, 0.25
        %v1374 = vmul.f32 %v1362, 0.25
        %v1375 = vlaneseq
        %v1376 = vand.u32 %v1375, 127
        %v1377 = vlaneseq
        %v1378 = vshrl.u32 %v1377, 7
        %vm1379 = vcmp.gt.s32.totalorder %v1376, %v1378
        %vm1380 = vcmp.ge.s32.totalorder %v1376, 8
        %vm1381 = vmor %vm1379, %vm1380
        %v1382 = vsel %vm1381, 1, 0
        %vm1383 = vcmp.eq.s32.totalorder %v1382, 1
        %v1384 = vsel %vm1383, -1e+30, %v1367
        %v1385 = vsel %vm1383, -1e+30, %v1368
        %v1386 = vsel %vm1383, -1e+30, %v1369
        %v1387 = vsel %vm1383, -1e+30, %v1370
        %v1388 = vsel %vm1383, -1e+30, %v1371
        %v1389 = vsel %vm1383, -1e+30, %v1372
        %v1390 = vsel %vm1383, -1e+30, %v1373
        %v1391 = vsel %vm1383, -1e+30, %v1374
        %vm1392 = vcmask 64512
        %v1393 = vsel %vm1392, %v1384, -inf
        %1394 = vmax.xlane.f32.xlu0 %v1393
        %v1395 = vpop.xlane.xlu0 %1394
        %v1396 = vsel %vm1392, %v1385, -inf
        %1397 = vmax.xlane.f32.xlu0 %v1396
        %v1398 = vpop.xlane.xlu0 %1397
        %v1399 = vsel %vm1392, %v1386, -inf
        %1400 = vmax.xlane.f32.xlu0 %v1399
        %v1401 = vpop.xlane.xlu0 %1400
        %v1402 = vsel %vm1392, %v1387, -inf
        %1403 = vmax.xlane.f32.xlu0 %v1402
        %v1404 = vpop.xlane.xlu0 %1403
        %v1405 = vsel %vm1392, %v1388, -inf
        %1406 = vmax.xlane.f32.xlu0 %v1405
        %v1407 = vpop.xlane.xlu0 %1406
        %v1408 = vsel %vm1392, %v1389, -inf
        %1409 = vmax.xlane.f32.xlu0 %v1408
        %v1410 = vpop.xlane.xlu0 %1409
        %v1411 = vsel %vm1392, %v1390, -inf
        %1412 = vmax.xlane.f32.xlu0 %v1411
        %v1413 = vpop.xlane.xlu0 %1412
        %v1414 = vsel %vm1392, %v1391, -inf
        %1415 = vmax.xlane.f32.xlu0 %v1414
        %v1416 = vpop.xlane.xlu0 %1415
        %v1417 = vsub.f32 %v1384, %v1395
        %v1418 = vsub.f32 %v1385, %v1398
        %v1419 = vsub.f32 %v1386, %v1401
        %v1420 = vsub.f32 %v1387, %v1404
        %v1421 = vsub.f32 %v1388, %v1407
        %v1422 = vsub.f32 %v1389, %v1410
        %v1423 = vsub.f32 %v1390, %v1413
        %v1424 = vsub.f32 %v1391, %v1416
        %v1425 = vmul.f32 %v1417, 1.442695
        %v1426 = vpow.pop %v1425
        %v1427 = vmul.f32 %v1418, 1.442695
        %v1428 = vpow.pop %v1427
        %v1429 = vmul.f32 %v1419, 1.442695
        %v1430 = vpow.pop %v1429
        %v1431 = vmul.f32 %v1420, 1.442695
        %v1432 = vpow.pop %v1431
        %v1433 = vmul.f32 %v1421, 1.442695
        %v1434 = vpow.pop %v1433
        %v1435 = vmul.f32 %v1422, 1.442695
        %v1436 = vpow.pop %v1435
        %v1437 = vmul.f32 %v1423, 1.442695
        %v1438 = vpow.pop %v1437
        %v1439 = vmul.f32 %v1424, 1.442695
        %v1440 = vpow.pop %v1439
        %v1441 = vsel %vm1392, %v1426, 0.0
        %1442 = vadd.xlane.f32.xlu0 %v1441
        %v1443 = vpop.xlane.xlu0 %1442
        %v1444 = vsel %vm1392, %v1428, 0.0
        %1445 = vadd.xlane.f32.xlu0 %v1444
        %v1446 = vpop.xlane.xlu0 %1445
        %v1447 = vsel %vm1392, %v1430, 0.0
        %1448 = vadd.xlane.f32.xlu0 %v1447
        %v1449 = vpop.xlane.xlu0 %1448
        %v1450 = vsel %vm1392, %v1432, 0.0
        %1451 = vadd.xlane.f32.xlu0 %v1450
        %v1452 = vpop.xlane.xlu0 %1451
        %v1453 = vsel %vm1392, %v1434, 0.0
        %1454 = vadd.xlane.f32.xlu0 %v1453
        %v1455 = vpop.xlane.xlu0 %1454
        %v1456 = vsel %vm1392, %v1436, 0.0
        %1457 = vadd.xlane.f32.xlu0 %v1456
        %v1458 = vpop.xlane.xlu0 %1457
        %v1459 = vsel %vm1392, %v1438, 0.0
        %1460 = vadd.xlane.f32.xlu0 %v1459
        %v1461 = vpop.xlane.xlu0 %1460
        %v1462 = vsel %vm1392, %v1440, 0.0
        %1463 = vadd.xlane.f32.xlu0 %v1462
        %v1464 = vpop.xlane.xlu0 %1463
        %v1465 = vrcp.pop %v1443
        %v1466 = vrcp.pop %v1446
        %v1467 = vrcp.pop %v1449
        %v1468 = vrcp.pop %v1452
        %v1469 = vrcp.pop %v1455
        %v1470 = vrcp.pop %v1458
        %v1471 = vrcp.pop %v1461
        %v1472 = vrcp.pop %v1464
        %v1473 = vmul.f32 %v1426, %v1465
        %v1474 = vmul.f32 %v1428, %v1466
        %v1475 = vmul.f32 %v1430, %v1467
        %v1476 = vmul.f32 %v1432, %v1468
        %v1477 = vmul.f32 %v1434, %v1469
        %v1478 = vmul.f32 %v1436, %v1470
        %v1479 = vmul.f32 %v1438, %v1471
        %v1480 = vmul.f32 %v1440, %v1472
        %v1481 = vpack.c.bf16 %v1473, %v1473
        %v1482 = vpack.c.bf16 %v1474, %v1474
        %v1483 = vpack.c.bf16 %v1475, %v1475
        %v1484 = vpack.c.bf16 %v1476, %v1476
        %v1485 = vpack.c.bf16 %v1477, %v1477
        %v1486 = vpack.c.bf16 %v1478, %v1478
        %v1487 = vpack.c.bf16 %v1479, %v1479
        %v1488 = vpack.c.bf16 %v1480, %v1480
        %v1490 = vsel %vm1392, %v1481, 0
        %vm1492 = vcmask 1043456
        %v1494 = vsel %vm1492, %v990, 0
        %1496 = vmatprep.subr.bf16.mxu0 0
        %1497 = vmatpush1.bf16.msra.mxu0 %v1494
        %1498 = vmatprep.subr.bf16.mxu0 0
        %1499 = vmatpush1.bf16.msra.mxu0 0
        %1500 = vmatprep.subr.bf16.mxu0 0
        %1501 = vmatpush1.bf16.msra.mxu0 0
        %1502 = vmatprep.subr.bf16.mxu0 0
        %1503 = vmatpush1.bf16.msra.mxu0 0
        %1504 = vmatprep.subr.bf16.mxu0 0
        %1505 = vmatpush1.bf16.msra.mxu0 0
        %1506 = vmatprep.subr.bf16.mxu0 0
        %1507 = vmatpush1.bf16.msra.mxu0 0
        %1508 = vmatprep.subr.bf16.mxu0 0
        %1509 = vmatpush1.bf16.msra.mxu0 0
        %1510 = vmatprep.subr.bf16.mxu0 0
        %1511 = vmatpush1.bf16.msra.mxu0 0
        %1512 = vmatprep.subr.bf16.mxu0 0
        %1513 = vmatpush1.bf16.msra.mxu0 0
        %1514 = vmatprep.subr.bf16.mxu0 0
        %1515 = vmatpush1.bf16.msra.mxu0 0
        %1516 = vmatprep.subr.bf16.mxu0 0
        %1517 = vmatpush1.bf16.msra.mxu0 0
        %1518 = vmatprep.subr.bf16.mxu0 0
        %1519 = vmatpush1.bf16.msra.mxu0 0
        %1520 = vmatprep.subr.bf16.mxu0 0
        %1521 = vmatpush1.bf16.msra.mxu0 0
        %1522 = vmatprep.subr.bf16.mxu0 0
        %1523 = vmatpush1.bf16.msra.mxu0 0
        %1524 = vmatprep.subr.bf16.mxu0 0
        %1525 = vmatpush1.bf16.msra.mxu0 0
        %1526 = vmatprep.subr.bf16.mxu0 0
        %1527 = vmatpush1.bf16.msra.mxu0 0
        %1528 = vmatprep.mubr.bf16.mxu0 0
        %1529 = vmatmul.mubr.bf16.gmra.mrb[0].mxu0 %v1490
        %v1530 = vpop.f32.mrb[0].mxu0
        %v1531 = vadd.f32 0.0, %v1530
        %v1532 = vpop.f32.mrb[0].mxu0
        %v1533 = vpop.f32.mrb[0].mxu0
        %v1534 = vpop.f32.mrb[0].mxu0
        %1535 = vdwg.mxu0
        %v1537 = vsel %vm1392, %v1482, 0
        %v1540 = vsel %vm1492, %v991, 0
        %1542 = vmatprep.subr.bf16.mxu0 0
        %1543 = vmatpush1.bf16.msra.mxu0 %v1540
        %1544 = vmatprep.subr.bf16.mxu0 0
        %1545 = vmatpush1.bf16.msra.mxu0 0
        %1546 = vmatprep.subr.bf16.mxu0 0
        %1547 = vmatpush1.bf16.msra.mxu0 0
        %1548 = vmatprep.subr.bf16.mxu0 0
        %1549 = vmatpush1.bf16.msra.mxu0 0
        %1550 = vmatprep.subr.bf16.mxu0 0
        %1551 = vmatpush1.bf16.msra.mxu0 0
        %1552 = vmatprep.subr.bf16.mxu0 0
        %1553 = vmatpush1.bf16.msra.mxu0 0
        %1554 = vmatprep.subr.bf16.mxu0 0
        %1555 = vmatpush1.bf16.msra.mxu0 0
        %1556 = vmatprep.subr.bf16.mxu0 0
        %1557 = vmatpush1.bf16.msra.mxu0 0
        %1558 = vmatprep.subr.bf16.mxu0 0
        %1559 = vmatpush1.bf16.msra.mxu0 0
        %1560 = vmatprep.subr.bf16.mxu0 0
        %1561 = vmatpush1.bf16.msra.mxu0 0
        %1562 = vmatprep.subr.bf16.mxu0 0
        %1563 = vmatpush1.bf16.msra.mxu0 0
        %1564 = vmatprep.subr.bf16.mxu0 0
        %1565 = vmatpush1.bf16.msra.mxu0 0
        %1566 = vmatprep.subr.bf16.mxu0 0
        %1567 = vmatpush1.bf16.msra.mxu0 0
        %1568 = vmatprep.subr.bf16.mxu0 0
        %1569 = vmatpush1.bf16.msra.mxu0 0
        %1570 = vmatprep.subr.bf16.mxu0 0
        %1571 = vmatpush1.bf16.msra.mxu0 0
        %1572 = vmatprep.subr.bf16.mxu0 0
        %1573 = vmatpush1.bf16.msra.mxu0 0
        %1574 = vmatprep.mubr.bf16.mxu0 0
        %1575 = vmatmul.mubr.bf16.gmra.mrb[0].mxu0 %v1537
        %v1576 = vpop.f32.mrb[0].mxu0
        %v1577 = vadd.f32 0.0, %v1576
        %v1578 = vpop.f32.mrb[0].mxu0
        %v1579 = vpop.f32.mrb[0].mxu0
        %v1580 = vpop.f32.mrb[0].mxu0
        %1581 = vdwg.mxu0
        %v1583 = vsel %vm1392, %v1483, 0
        %v1586 = vsel %vm1492, %v992, 0
        %1588 = vmatprep.subr.bf16.mxu0 0
        %1589 = vmatpush1.bf16.msra.mxu0 %v1586
        %1590 = vmatprep.subr.bf16.mxu0 0
        %1591 = vmatpush1.bf16.msra.mxu0 0
        %1592 = vmatprep.subr.bf16.mxu0 0
        %1593 = vmatpush1.bf16.msra.mxu0 0
        %1594 = vmatprep.subr.bf16.mxu0 0
        %1595 = vmatpush1.bf16.msra.mxu0 0
        %1596 = vmatprep.subr.bf16.mxu0 0
        %1597 = vmatpush1.bf16.msra.mxu0 0
        %1598 = vmatprep.subr.bf16.mxu0 0
        %1599 = vmatpush1.bf16.msra.mxu0 0
        %1600 = vmatprep.subr.bf16.mxu0 0
        %1601 = vmatpush1.bf16.msra.mxu0 0
        %1602 = vmatprep.subr.bf16.mxu0 0
        %1603 = vmatpush1.bf16.msra.mxu0 0
        %1604 = vmatprep.subr.bf16.mxu0 0
        %1605 = vmatpush1.bf16.msra.mxu0 0
        %1606 = vmatprep.subr.bf16.mxu0 0
        %1607 = vmatpush1.bf16.msra.mxu0 0
        %1608 = vmatprep.subr.bf16.mxu0 0
        %1609 = vmatpush1.bf16.msra.mxu0 0
        %1610 = vmatprep.subr.bf16.mxu0 0
        %1611 = vmatpush1.bf16.msra.mxu0 0
        %1612 = vmatprep.subr.bf16.mxu0 0
        %1613 = vmatpush1.bf16.msra.mxu0 0
        %1614 = vmatprep.subr.bf16.mxu0 0
        %1615 = vmatpush1.bf16.msra.mxu0 0
        %1616 = vmatprep.subr.bf16.mxu0 0
        %1617 = vmatpush1.bf16.msra.mxu0 0
        %1618 = vmatprep.subr.bf16.mxu0 0
        %1619 = vmatpush1.bf16.msra.mxu0 0
        %1620 = vmatprep.mubr.bf16.mxu0 0
        %1621 = vmatmul.mubr.bf16.gmra.mrb[0].mxu0 %v1583
        %v1622 = vpop.f32.mrb[0].mxu0
        %v1623 = vadd.f32 0.0, %v1622
        %v1624 = vpop.f32.mrb[0].mxu0
        %v1625 = vpop.f32.mrb[0].mxu0
        %v1626 = vpop.f32.mrb[0].mxu0
        %1627 = vdwg.mxu0
        %v1629 = vsel %vm1392, %v1484, 0
        %v1632 = vsel %vm1492, %v993, 0
        %1634 = vmatprep.subr.bf16.mxu0 0
        %1635 = vmatpush1.bf16.msra.mxu0 %v1632
        %1636 = vmatprep.subr.bf16.mxu0 0
        %1637 = vmatpush1.bf16.msra.mxu0 0
        %1638 = vmatprep.subr.bf16.mxu0 0
        %1639 = vmatpush1.bf16.msra.mxu0 0
        %1640 = vmatprep.subr.bf16.mxu0 0
        %1641 = vmatpush1.bf16.msra.mxu0 0
        %1642 = vmatprep.subr.bf16.mxu0 0
        %1643 = vmatpush1.bf16.msra.mxu0 0
        %1644 = vmatprep.subr.bf16.mxu0 0
        %1645 = vmatpush1.bf16.msra.mxu0 0
        %1646 = vmatprep.subr.bf16.mxu0 0
        %1647 = vmatpush1.bf16.msra.mxu0 0
        %1648 = vmatprep.subr.bf16.mxu0 0
        %1649 = vmatpush1.bf16.msra.mxu0 0
        %1650 = vmatprep.subr.bf16.mxu0 0
        %1651 = vmatpush1.bf16.msra.mxu0 0
        %1652 = vmatprep.subr.bf16.mxu0 0
        %1653 = vmatpush1.bf16.msra.mxu0 0
        %1654 = vmatprep.subr.bf16.mxu0 0
        %1655 = vmatpush1.bf16.msra.mxu0 0
        %1656 = vmatprep.subr.bf16.mxu0 0
        %1657 = vmatpush1.bf16.msra.mxu0 0
        %1658 = vmatprep.subr.bf16.mxu0 0
        %1659 = vmatpush1.bf16.msra.mxu0 0
        %1660 = vmatprep.subr.bf16.mxu0 0
        %1661 = vmatpush1.bf16.msra.mxu0 0
        %1662 = vmatprep.subr.bf16.mxu0 0
        %1663 = vmatpush1.bf16.msra.mxu0 0
        %1664 = vmatprep.subr.bf16.mxu0 0
        %1665 = vmatpush1.bf16.msra.mxu0 0
        %1666 = vmatprep.mubr.bf16.mxu0 0
        %1667 = vmatmul.mubr.bf16.gmra.mrb[0].mxu0 %v1629
        %v1668 = vpop.f32.mrb[0].mxu0
        %v1669 = vadd.f32 0.0, %v1668
        %v1670 = vpop.f32.mrb[0].mxu0
        %v1671 = vpop.f32.mrb[0].mxu0
        %v1672 = vpop.f32.mrb[0].mxu0
        %1673 = vdwg.mxu0
        %v1675 = vsel %vm1392, %v1485, 0
        %v1678 = vsel %vm1492, %v994, 0
        %1680 = vmatprep.subr.bf16.mxu0 0
        %1681 = vmatpush1.bf16.msra.mxu0 %v1678
        %1682 = vmatprep.subr.bf16.mxu0 0
        %1683 = vmatpush1.bf16.msra.mxu0 0
        %1684 = vmatprep.subr.bf16.mxu0 0
        %1685 = vmatpush1.bf16.msra.mxu0 0
        %1686 = vmatprep.subr.bf16.mxu0 0
        %1687 = vmatpush1.bf16.msra.mxu0 0
        %1688 = vmatprep.subr.bf16.mxu0 0
        %1689 = vmatpush1.bf16.msra.mxu0 0
        %1690 = vmatprep.subr.bf16.mxu0 0
        %1691 = vmatpush1.bf16.msra.mxu0 0
        %1692 = vmatprep.subr.bf16.mxu0 0
        %1693 = vmatpush1.bf16.msra.mxu0 0
        %1694 = vmatprep.subr.bf16.mxu0 0
        %1695 = vmatpush1.bf16.msra.mxu0 0
        %1696 = vmatprep.subr.bf16.mxu0 0
        %1697 = vmatpush1.bf16.msra.mxu0 0
        %1698 = vmatprep.subr.bf16.mxu0 0
        %1699 = vmatpush1.bf16.msra.mxu0 0
        %1700 = vmatprep.subr.bf16.mxu0 0
        %1701 = vmatpush1.bf16.msra.mxu0 0
        %1702 = vmatprep.subr.bf16.mxu0 0
        %1703 = vmatpush1.bf16.msra.mxu0 0
        %1704 = vmatprep.subr.bf16.mxu0 0
        %1705 = vmatpush1.bf16.msra.mxu0 0
        %1706 = vmatprep.subr.bf16.mxu0 0
        %1707 = vmatpush1.bf16.msra.mxu0 0
        %1708 = vmatprep.subr.bf16.mxu0 0
        %1709 = vmatpush1.bf16.msra.mxu0 0
        %1710 = vmatprep.subr.bf16.mxu0 0
        %1711 = vmatpush1.bf16.msra.mxu0 0
        %1712 = vmatprep.mubr.bf16.mxu0 0
        %1713 = vmatmul.mubr.bf16.gmra.mrb[0].mxu0 %v1675
        %v1714 = vpop.f32.mrb[0].mxu0
        %v1715 = vadd.f32 0.0, %v1714
        %v1716 = vpop.f32.mrb[0].mxu0
        %v1717 = vpop.f32.mrb[0].mxu0
        %v1718 = vpop.f32.mrb[0].mxu0
        %1719 = vdwg.mxu0
        %v1721 = vsel %vm1392, %v1486, 0
        %v1724 = vsel %vm1492, %v995, 0
        %1726 = vmatprep.subr.bf16.mxu0 0
        %1727 = vmatpush1.bf16.msra.mxu0 %v1724
        %1728 = vmatprep.subr.bf16.mxu0 0
        %1729 = vmatpush1.bf16.msra.mxu0 0
        %1730 = vmatprep.subr.bf16.mxu0 0
        %1731 = vmatpush1.bf16.msra.mxu0 0
        %1732 = vmatprep.subr.bf16.mxu0 0
        %1733 = vmatpush1.bf16.msra.mxu0 0
        %1734 = vmatprep.subr.bf16.mxu0 0
        %1735 = vmatpush1.bf16.msra.mxu0 0
        %1736 = vmatprep.subr.bf16.mxu0 0
        %1737 = vmatpush1.bf16.msra.mxu0 0
        %1738 = vmatprep.subr.bf16.mxu0 0
        %1739 = vmatpush1.bf16.msra.mxu0 0
        %1740 = vmatprep.subr.bf16.mxu0 0
        %1741 = vmatpush1.bf16.msra.mxu0 0
        %1742 = vmatprep.subr.bf16.mxu0 0
        %1743 = vmatpush1.bf16.msra.mxu0 0
        %1744 = vmatprep.subr.bf16.mxu0 0
        %1745 = vmatpush1.bf16.msra.mxu0 0
        %1746 = vmatprep.subr.bf16.mxu0 0
        %1747 = vmatpush1.bf16.msra.mxu0 0
        %1748 = vmatprep.subr.bf16.mxu0 0
        %1749 = vmatpush1.bf16.msra.mxu0 0
        %1750 = vmatprep.subr.bf16.mxu0 0
        %1751 = vmatpush1.bf16.msra.mxu0 0
        %1752 = vmatprep.subr.bf16.mxu0 0
        %1753 = vmatpush1.bf16.msra.mxu0 0
        %1754 = vmatprep.subr.bf16.mxu0 0
        %1755 = vmatpush1.bf16.msra.mxu0 0
        %1756 = vmatprep.subr.bf16.mxu0 0
        %1757 = vmatpush1.bf16.msra.mxu0 0
        %1758 = vmatprep.mubr.bf16.mxu0 0
        %1759 = vmatmul.mubr.bf16.gmra.mrb[0].mxu0 %v1721
        %v1760 = vpop.f32.mrb[0].mxu0
        %v1761 = vadd.f32 0.0, %v1760
        %v1762 = vpop.f32.mrb[0].mxu0
        %v1763 = vpop.f32.mrb[0].mxu0
        %v1764 = vpop.f32.mrb[0].mxu0
        %1765 = vdwg.mxu0
        %v1767 = vsel %vm1392, %v1487, 0
        %v1770 = vsel %vm1492, %v996, 0
        %1772 = vmatprep.subr.bf16.mxu0 0
        %1773 = vmatpush1.bf16.msra.mxu0 %v1770
        %1774 = vmatprep.subr.bf16.mxu0 0
        %1775 = vmatpush1.bf16.msra.mxu0 0
        %1776 = vmatprep.subr.bf16.mxu0 0
        %1777 = vmatpush1.bf16.msra.mxu0 0
        %1778 = vmatprep.subr.bf16.mxu0 0
        %1779 = vmatpush1.bf16.msra.mxu0 0
        %1780 = vmatprep.subr.bf16.mxu0 0
        %1781 = vmatpush1.bf16.msra.mxu0 0
        %1782 = vmatprep.subr.bf16.mxu0 0
        %1783 = vmatpush1.bf16.msra.mxu0 0
        %1784 = vmatprep.subr.bf16.mxu0 0
        %1785 = vmatpush1.bf16.msra.mxu0 0
        %1786 = vmatprep.subr.bf16.mxu0 0
        %1787 = vmatpush1.bf16.msra.mxu0 0
        %1788 = vmatprep.subr.bf16.mxu0 0
        %1789 = vmatpush1.bf16.msra.mxu0 0
        %1790 = vmatprep.subr.bf16.mxu0 0
        %1791 = vmatpush1.bf16.msra.mxu0 0
        %1792 = vmatprep.subr.bf16.mxu0 0
        %1793 = vmatpush1.bf16.msra.mxu0 0
        %1794 = vmatprep.subr.bf16.mxu0 0
        %1795 = vmatpush1.bf16.msra.mxu0 0
        %1796 = vmatprep.subr.bf16.mxu0 0
        %1797 = vmatpush1.bf16.msra.mxu0 0
        %1798 = vmatprep.subr.bf16.mxu0 0
        %1799 = vmatpush1.bf16.msra.mxu0 0
        %1800 = vmatprep.subr.bf16.mxu0 0
        %1801 = vmatpush1.bf16.msra.mxu0 0
        %1802 = vmatprep.subr.bf16.mxu0 0
        %1803 = vmatpush1.bf16.msra.mxu0 0
        %1804 = vmatprep.mubr.bf16.mxu0 0
        %1805 = vmatmul.mubr.bf16.gmra.mrb[0].mxu0 %v1767
        %v1806 = vpop.f32.mrb[0].mxu0
        %v1807 = vadd.f32 0.0, %v1806
        %v1808 = vpop.f32.mrb[0].mxu0
        %v1809 = vpop.f32.mrb[0].mxu0
        %v1810 = vpop.f32.mrb[0].mxu0
        %1811 = vdwg.mxu0
        %v1813 = vsel %vm1392, %v1488, 0
        %v1816 = vsel %vm1492, %v997, 0
        %1818 = vmatprep.subr.bf16.mxu0 0
        %1819 = vmatpush1.bf16.msra.mxu0 %v1816
        %1820 = vmatprep.subr.bf16.mxu0 0
        %1821 = vmatpush1.bf16.msra.mxu0 0
        %1822 = vmatprep.subr.bf16.mxu0 0
        %1823 = vmatpush1.bf16.msra.mxu0 0
        %1824 = vmatprep.subr.bf16.mxu0 0
        %1825 = vmatpush1.bf16.msra.mxu0 0
        %1826 = vmatprep.subr.bf16.mxu0 0
        %1827 = vmatpush1.bf16.msra.mxu0 0
        %1828 = vmatprep.subr.bf16.mxu0 0
        %1829 = vmatpush1.bf16.msra.mxu0 0
        %1830 = vmatprep.subr.bf16.mxu0 0
        %1831 = vmatpush1.bf16.msra.mxu0 0
        %1832 = vmatprep.subr.bf16.mxu0 0
        %1833 = vmatpush1.bf16.msra.mxu0 0
        %1834 = vmatprep.subr.bf16.mxu0 0
        %1835 = vmatpush1.bf16.msra.mxu0 0
        %1836 = vmatprep.subr.bf16.mxu0 0
        %1837 = vmatpush1.bf16.msra.mxu0 0
        %1838 = vmatprep.subr.bf16.mxu0 0
        %1839 = vmatpush1.bf16.msra.mxu0 0
        %1840 = vmatprep.subr.bf16.mxu0 0
        %1841 = vmatpush1.bf16.msra.mxu0 0
        %1842 = vmatprep.subr.bf16.mxu0 0
        %1843 = vmatpush1.bf16.msra.mxu0 0
        %1844 = vmatprep.subr.bf16.mxu0 0
        %1845 = vmatpush1.bf16.msra.mxu0 0
        %1846 = vmatprep.subr.bf16.mxu0 0
        %1847 = vmatpush1.bf16.msra.mxu0 0
        %1848 = vmatprep.subr.bf16.mxu0 0
        %1849 = vmatpush1.bf16.msra.mxu0 0
        %1850 = vmatprep.mubr.bf16.mxu0 0
        %1851 = vmatmul.mubr.bf16.gmra.mrb[0].mxu0 %v1813
        %v1852 = vpop.f32.mrb[0].mxu0
        %v1853 = vadd.f32 0.0, %v1852
        %v1854 = vpop.f32.mrb[0].mxu0
        %v1855 = vpop.f32.mrb[0].mxu0
        %v1856 = vpop.f32.mrb[0].mxu0
        %1857 = vdwg.mxu0
        %v1858 = vpack.c.bf16 %v1531, %v1531
        %v1859 = vpack.c.bf16 %v1577, %v1577
        %1860 = vst.msk [vmem:[#allocation5] sm:$0xf] %vm866, %v1858
        %1861 = vst.msk [vmem:[#allocation5 + $0x4] sm:$0xf] %vm866, %v1859
        %v1862 = vpack.c.bf16 %v1623, %v1623
        %v1863 = vpack.c.bf16 %v1669, %v1669
        %v1866 = vunpack.c.l.b16 %v1862
        %v1867 = vunpack.c.l.b16 %v1863
        %v1868 = vpack.c.b16 %v1866, %v1866
        %v1869 = vpack.c.b16 %v1867, %v1867
        %1870 = vrot.lane.b32.xlu0 %v1868, 16
        %v1871 = vpop.permute.xlu0 %1870
        %1872 = vrot.lane.b32.xlu0 %v1869, 16
        %v1873 = vpop.permute.xlu0 %1872
        %vm1876 = vcmask 257152
        %1877 = vst.msk [vmem:[#allocation5] sm:$0xf] %vm1876, %v1871
        %1878 = vst.msk [vmem:[#allocation5 + $0x4] sm:$0xf] %vm1876, %v1873
        %v1879 = vpack.c.bf16 %v1715, %v1715
        %v1880 = vpack.c.bf16 %v1761, %v1761
        %v1883 = vunpack.c.l.b16 %v1879
        %v1884 = vunpack.c.l.b16 %v1880
        %v1885 = vpack.c.b16 %v1883, %v1883
        %v1886 = vpack.c.b16 %v1884, %v1884
        %1887 = vrot.lane.b32.xlu0 %v1885, 32
        %v1888 = vpop.permute.xlu0 %1887
        %1889 = vrot.lane.b32.xlu0 %v1886, 32
        %v1890 = vpop.permute.xlu0 %1889
        %vm1893 = vcmask 388352
        %1894 = vst.msk [vmem:[#allocation5] sm:$0xf] %vm1893, %v1888
        %1895 = vst.msk [vmem:[#allocation5 + $0x4] sm:$0xf] %vm1893, %v1890
        %v1896 = vpack.c.bf16 %v1807, %v1807
        %v1897 = vpack.c.bf16 %v1853, %v1853
        %v1900 = vunpack.c.l.b16 %v1896
        %v1901 = vunpack.c.l.b16 %v1897
        %v1902 = vpack.c.b16 %v1900, %v1900
        %v1903 = vpack.c.b16 %v1901, %v1901
        %1904 = vrot.lane.b32.xlu0 %v1902, 48
        %v1905 = vpop.permute.xlu0 %1904
        %1906 = vrot.lane.b32.xlu0 %v1903, 48
        %v1907 = vpop.permute.xlu0 %1906
        %vm1910 = vcmask 519552
        %1911 = vst.msk [vmem:[#allocation5] sm:$0xf] %vm1910, %v1905
        %1912 = vst.msk [vmem:[#allocation5 + $0x4] sm:$0xf] %vm1910, %v1907
        %v1913 = vld [vmem:[#allocation5] sm:$0xf]
        %v1914 = vld [vmem:[#allocation5 + $0x4] sm:$0xf]
        %v1915 = vld [vmem:[%s671] sm:$0xf]
        %v1916 = vld [vmem:[%s671 + $0x4] sm:$0xf]
        %v1917 = vld [vmem:[%s671 + $0x8] sm:$0xf]
        %v1918 = vld [vmem:[%s671 + $0xc] sm:$0xf]
        %v1919 = vld [vmem:[%s671 + $0x10] sm:$0xf]
        %v1920 = vld [vmem:[%s671 + $0x14] sm:$0xf]
        %v1921 = vld [vmem:[%s671 + $0x18] sm:$0xf]
        %v1922 = vld [vmem:[%s671 + $0x1c] sm:$0xf]
        %v1923 = vld [vmem:[%s674] sm:$0x1]
        %v1925 = vlaneseq
        %v1926 = vshrl.u32 %v1925, 7
        %v1927 = vsub.s32 0, %v1926
        %v1928 = vrot.slane %v1923, %v1927
        %v1932 = vunpack.c.l.b16 %v1913
        %v1933 = vunpack.c.l.b16 %v1914
        %v1934 = vpack.c.b16 %v1933, %v1932
        %v1943 = vunpack.c.l.b16 %v1915
        %v1944 = vunpack.c.l.b16 %v1916
        %v1945 = vunpack.c.l.b16 %v1917
        %v1946 = vunpack.c.l.b16 %v1918
        %v1947 = vunpack.c.l.b16 %v1919
        %v1948 = vunpack.c.l.b16 %v1920
        %v1949 = vunpack.c.l.b16 %v1921
        %v1950 = vunpack.c.l.b16 %v1922
        %v1951 = vpack.c.b16 %v1944, %v1943
        %v1952 = vpack.c.b16 %v1946, %v1945
        %v1953 = vpack.c.b16 %v1948, %v1947
        %v1954 = vpack.c.b16 %v1950, %v1949
        %v1960 = vsel %vm713, %v1934, 0
        %1962 = vmatprep.subr.bf16.mxu0 0
        %1963 = vmatpush1.bf16.msra.mxu0 %v1951
        %1964 = vmatprep.subr.bf16.mxu0 0
        %1965 = vmatpush1.bf16.msra.mxu0 %v1952
        %1966 = vmatprep.subr.bf16.mxu0 0
        %1967 = vmatpush1.bf16.msra.mxu0 %v1953
        %1968 = vmatprep.subr.bf16.mxu0 0
        %1969 = vmatpush1.bf16.msra.mxu0 %v1954
        %1970 = vmatprep.subr.bf16.mxu0 0
        %1971 = vmatpush1.bf16.msra.mxu0 0
        %1972 = vmatprep.subr.bf16.mxu0 0
        %1973 = vmatpush1.bf16.msra.mxu0 0
        %1974 = vmatprep.subr.bf16.mxu0 0
        %1975 = vmatpush1.bf16.msra.mxu0 0
        %1976 = vmatprep.subr.bf16.mxu0 0
        %1977 = vmatpush1.bf16.msra.mxu0 0
        %1978 = vmatprep.subr.bf16.mxu0 0
        %1979 = vmatpush1.bf16.msra.mxu0 0
        %1980 = vmatprep.subr.bf16.mxu0 0
        %1981 = vmatpush1.bf16.msra.mxu0 0
        %1982 = vmatprep.subr.bf16.mxu0 0
        %1983 = vmatpush1.bf16.msra.mxu0 0
        %1984 = vmatprep.subr.bf16.mxu0 0
        %1985 = vmatpush1.bf16.msra.mxu0 0
        %1986 = vmatprep.subr.bf16.mxu0 0
        %1987 = vmatpush1.bf16.msra.mxu0 0
        %1988 = vmatprep.subr.bf16.mxu0 0
        %1989 = vmatpush1.bf16.msra.mxu0 0
        %1990 = vmatprep.subr.bf16.mxu0 0
        %1991 = vmatpush1.bf16.msra.mxu0 0
        %1992 = vmatprep.subr.bf16.mxu0 0
        %1993 = vmatpush1.bf16.msra.mxu0 0
        %1994 = vmatprep.mubr.bf16.mxu0 0
        %1995 = vmatmul.mubr.bf16.gmra.mrb[0].mxu0 %v1960
        %v1996 = vpop.f32.mrb[0].mxu0
        %v1997 = vadd.f32 %v1928, %v1996
        %v1998 = vpop.f32.mrb[0].mxu0
        %v1999 = vpop.f32.mrb[0].mxu0
        %v2000 = vadd.f32 %v1928, %v1999
        %v2001 = vpop.f32.mrb[0].mxu0
        %2002 = vdwg.mxu0
        %v2003 = vadd.f32 %v1997, %v709
        %v2004 = vadd.f32 %v2000, %v710
        %v2005 = vld [vmem:[%s677] sm:$0x1]
        %v2006 = vld [vmem:[%s680] sm:$0x1]
        %v2007 = vsel %vm713, %v2003, 0.0
        %2008 = vadd.xlane.f32.xlu0 %v2007
        %v2009 = vpop.xlane.xlu0 %2008
        %v2010 = vsel %vm713, %v2004, 0.0
        %2011 = vadd.xlane.f32.xlu0 %v2010
        %v2012 = vpop.xlane.xlu0 %2011
        %v2013 = vmul.f32 %v2009, %v720
        %v2014 = vmul.f32 %v2012, %v720
        %v2015 = vsub.f32 %v2003, %v2013
        %v2016 = vsub.f32 %v2004, %v2014
        %v2017 = vmul.f32 %v2015, %v2015
        %v2018 = vmul.f32 %v2016, %v2016
        %v2019 = vsel %vm713, %v2017, 0.0
        %2020 = vadd.xlane.f32.xlu0 %v2019
        %v2021 = vpop.xlane.xlu0 %2020
        %v2022 = vsel %vm713, %v2018, 0.0
        %2023 = vadd.xlane.f32.xlu0 %v2022
        %v2024 = vpop.xlane.xlu0 %2023
        %v2025 = vmul.f32 %v2021, %v720
        %v2026 = vmul.f32 %v2024, %v720
        %v2027 = vadd.f32 %v2025, 1e-05
        %v2028 = vadd.f32 %v2026, 1e-05
        %v2029 = vrsqrt.pop %v2027
        %v2030 = vrsqrt.pop %v2028
        %v2031 = vmul.f32 %v2015, %v2029
        %v2032 = vmul.f32 %v2016, %v2030
        %v2034 = vlaneseq
        %v2035 = vshrl.u32 %v2034, 7
        %v2036 = vsub.s32 0, %v2035
        %v2037 = vrot.slane %v2005, %v2036
        %v2039 = vmul.f32 %v2031, %v2037
        %v2040 = vmul.f32 %v2032, %v2037
        %v2042 = vlaneseq
        %v2043 = vshrl.u32 %v2042, 7
        %v2044 = vsub.s32 0, %v2043
        %v2045 = vrot.slane %v2006, %v2044
        %v2047 = vadd.f32 %v2039, %v2045
        %v2048 = vadd.f32 %v2040, %v2045
        %v2049 = vpack.c.bf16 %v2048, %v2047
        %v2050 = vld [vmem:[%s685] sm:$0xff]
        %v2051 = vld [vmem:[%s685 + $0x8] sm:$0xff]
        %v2052 = vld [vmem:[%s685 + $0x10] sm:$0xff]
        %v2053 = vld [vmem:[%s685 + $0x18] sm:$0xff]
        %v2054 = vld [vmem:[%s685 + $0x20] sm:$0xff]
        %v2055 = vld [vmem:[%s685 + $0x28] sm:$0xff]
        %v2056 = vld [vmem:[%s685 + $0x30] sm:$0xff]
        %v2057 = vld [vmem:[%s685 + $0x38] sm:$0xff]
        %v2058 = vld [vmem:[%s689] sm:$0x3]
        %v2060 = vlaneseq
        %v2061 = vshrl.u32 %v2060, 7
        %v2062 = vsub.s32 0, %v2061
        %v2063 = vrot.slane %v2058, %v2062
        %v2064 = vlaneseq
        %v2065 = vshrl.u32 %v2064, 7
        %v2066 = vsub.s32 1, %v2065
        %v2067 = vrot.slane %v2058, %v2066
        %v2078 = vunpack.c.l.b16 %v2050
        %v2079 = vunpack.c.h.b16 %v2050
        %v2080 = vunpack.c.l.b16 %v2051
        %v2081 = vunpack.c.h.b16 %v2051
        %v2082 = vunpack.c.l.b16 %v2052
        %v2083 = vunpack.c.h.b16 %v2052
        %v2084 = vunpack.c.l.b16 %v2053
        %v2085 = vunpack.c.h.b16 %v2053
        %v2086 = vunpack.c.l.b16 %v2054
        %v2087 = vunpack.c.h.b16 %v2054
        %v2088 = vunpack.c.l.b16 %v2055
        %v2089 = vunpack.c.h.b16 %v2055
        %v2090 = vunpack.c.l.b16 %v2056
        %v2091 = vunpack.c.h.b16 %v2056
        %v2092 = vunpack.c.l.b16 %v2057
        %v2093 = vunpack.c.h.b16 %v2057
        %v2094 = vpack.c.b16 %v2080, %v2078
        %v2095 = vpack.c.b16 %v2081, %v2079
        %v2096 = vpack.c.b16 %v2084, %v2082
        %v2097 = vpack.c.b16 %v2085, %v2083
        %v2098 = vpack.c.b16 %v2088, %v2086
        %v2099 = vpack.c.b16 %v2089, %v2087
        %v2100 = vpack.c.b16 %v2092, %v2090
        %v2101 = vpack.c.b16 %v2093, %v2091
        %v2111 = vsel %vm713, %v2049, 0
        %2113 = vmatprep.subr.bf16.mxu0 %v2095
        %2114 = vmatpush1.bf16.msra.mxu0 %v2094
        %2115 = vmatprep.subr.bf16.mxu0 %v2097
        %2116 = vmatpush1.bf16.msra.mxu0 %v2096
        %2117 = vmatprep.subr.bf16.mxu0 %v2099
        %2118 = vmatpush1.bf16.msra.mxu0 %v2098
        %2119 = vmatprep.subr.bf16.mxu0 %v2101
        %2120 = vmatpush1.bf16.msra.mxu0 %v2100
        %2121 = vmatprep.subr.bf16.mxu0 0
        %2122 = vmatpush1.bf16.msra.mxu0 0
        %2123 = vmatprep.subr.bf16.mxu0 0
        %2124 = vmatpush1.bf16.msra.mxu0 0
        %2125 = vmatprep.subr.bf16.mxu0 0
        %2126 = vmatpush1.bf16.msra.mxu0 0
        %2127 = vmatprep.subr.bf16.mxu0 0
        %2128 = vmatpush1.bf16.msra.mxu0 0
        %2129 = vmatprep.subr.bf16.mxu0 0
        %2130 = vmatpush1.bf16.msra.mxu0 0
        %2131 = vmatprep.subr.bf16.mxu0 0
        %2132 = vmatpush1.bf16.msra.mxu0 0
        %2133 = vmatprep.subr.bf16.mxu0 0
        %2134 = vmatpush1.bf16.msra.mxu0 0
        %2135 = vmatprep.subr.bf16.mxu0 0
        %2136 = vmatpush1.bf16.msra.mxu0 0
        %2137 = vmatprep.subr.bf16.mxu0 0
        %2138 = vmatpush1.bf16.msra.mxu0 0
        %2139 = vmatprep.subr.bf16.mxu0 0
        %2140 = vmatpush1.bf16.msra.mxu0 0
        %2141 = vmatprep.subr.bf16.mxu0 0
        %2142 = vmatpush1.bf16.msra.mxu0 0
        %2143 = vmatprep.subr.bf16.mxu0 0
        %2144 = vmatpush1.bf16.msra.mxu0 0
        %2145 = vmatprep.mubr.bf16.mxu0 0
        %2146 = vmatmul.mubr.bf16.gmra.mrb[0].mxu0 %v2111
        %v2147 = vpop.f32.mrb[0].mxu0
        %v2148 = vadd.f32 %v2063, %v2147
        %v2149 = vpop.f32.mrb[0].mxu0
        %v2150 = vadd.f32 %v2067, %v2149
        %v2151 = vpop.f32.mrb[0].mxu0
        %v2152 = vadd.f32 %v2063, %v2151
        %v2153 = vpop.f32.mrb[0].mxu0
        %v2154 = vadd.f32 %v2067, %v2153
        %2155 = vdwg.mxu0
        %v2156 = vmul.f32 %v2148, 1.702
        %v2157 = vmul.f32 %v2150, 1.702
        %v2158 = vmul.f32 %v2152, 1.702
        %v2159 = vmul.f32 %v2154, 1.702
        %v2160 = vxor.u32 %v2156, 2147483648
        %v2161 = vxor.u32 %v2157, 2147483648
        %v2162 = vxor.u32 %v2158, 2147483648
        %v2163 = vxor.u32 %v2159, 2147483648
        %v2164 = vmul.f32 %v2160, 1.442695
        %v2165 = vpow.pop %v2164
        %v2166 = vmul.f32 %v2161, 1.442695
        %v2167 = vpow.pop %v2166
        %v2168 = vmul.f32 %v2162, 1.442695
        %v2169 = vpow.pop %v2168
        %v2170 = vmul.f32 %v2163, 1.442695
        %v2171 = vpow.pop %v2170
        %v2172 = vadd.f32 %v2165, 1.0
        %v2173 = vadd.f32 %v2167, 1.0
        %v2174 = vadd.f32 %v2169, 1.0
        %v2175 = vadd.f32 %v2171, 1.0
        %v2176 = vrcp.pop %v2172
        %v2177 = vmul.f32 1.0, %v2176
        %v2178 = vrcp.pop %v2173
        %v2179 = vmul.f32 1.0, %v2178
        %v2180 = vrcp.pop %v2174
        %v2181 = vmul.f32 1.0, %v2180
        %v2182 = vrcp.pop %v2175
        %v2183 = vmul.f32 1.0, %v2182
        %v2184 = vmul.f32 %v2148, %v2177
        %v2185 = vmul.f32 %v2150, %v2179
        %v2186 = vmul.f32 %v2152, %v2181
        %v2187 = vmul.f32 %v2154, %v2183
        %v2188 = vpack.c.bf16 %v2186, %v2184
        %v2189 = vpack.c.bf16 %v2187, %v2185
        %v2190 = vld [vmem:[%s694] sm:$0xf]
        %v2191 = vld [vmem:[%s694 + $0x4] sm:$0xf]
        %v2192 = vld [vmem:[%s694 + $0x8] sm:$0xf]
        %v2193 = vld [vmem:[%s694 + $0xc] sm:$0xf]
        %v2194 = vld [vmem:[%s694 + $0x10] sm:$0xf]
        %v2195 = vld [vmem:[%s694 + $0x14] sm:$0xf]
        %v2196 = vld [vmem:[%s694 + $0x18] sm:$0xf]
        %v2197 = vld [vmem:[%s694 + $0x1c] sm:$0xf]
        %v2198 = vld [vmem:[%s694 + $0x20] sm:$0xf]
        %v2199 = vld [vmem:[%s694 + $0x24] sm:$0xf]
        %v2200 = vld [vmem:[%s694 + $0x28] sm:$0xf]
        %v2201 = vld [vmem:[%s694 + $0x2c] sm:$0xf]
        %v2202 = vld [vmem:[%s694 + $0x30] sm:$0xf]
        %v2203 = vld [vmem:[%s694 + $0x34] sm:$0xf]
        %v2204 = vld [vmem:[%s694 + $0x38] sm:$0xf]
        %v2205 = vld [vmem:[%s694 + $0x3c] sm:$0xf]
        %v2206 = vld [vmem:[%s694 + $0x40] sm:$0xf]
        %v2207 = vld [vmem:[%s694 + $0x44] sm:$0xf]
        %v2208 = vld [vmem:[%s694 + $0x48] sm:$0xf]
        %v2209 = vld [vmem:[%s694 + $0x4c] sm:$0xf]
        %v2210 = vld [vmem:[%s694 + $0x50] sm:$0xf]
        %v2211 = vld [vmem:[%s694 + $0x54] sm:$0xf]
        %v2212 = vld [vmem:[%s694 + $0x58] sm:$0xf]
        %v2213 = vld [vmem:[%s694 + $0x5c] sm:$0xf]
        %v2214 = vld [vmem:[%s694 + $0x60] sm:$0xf]
        %v2215 = vld [vmem:[%s694 + $0x64] sm:$0xf]
        %v2216 = vld [vmem:[%s694 + $0x68] sm:$0xf]
        %v2217 = vld [vmem:[%s694 + $0x6c] sm:$0xf]
        %v2218 = vld [vmem:[%s694 + $0x70] sm:$0xf]
        %v2219 = vld [vmem:[%s694 + $0x74] sm:$0xf]
        %v2220 = vld [vmem:[%s694 + $0x78] sm:$0xf]
        %v2221 = vld [vmem:[%s694 + $0x7c] sm:$0xf]
        %v2222 = vld [vmem:[%s697] sm:$0x1]
        %v2224 = vlaneseq
        %v2225 = vshrl.u32 %v2224, 7
        %v2226 = vsub.s32 0, %v2225
        %v2227 = vrot.slane %v2222, %v2226
        %v2261 = vunpack.c.l.b16 %v2190
        %v2262 = vunpack.c.l.b16 %v2191
        %v2263 = vunpack.c.l.b16 %v2192
        %v2264 = vunpack.c.l.b16 %v2193
        %v2265 = vunpack.c.l.b16 %v2194
        %v2266 = vunpack.c.l.b16 %v2195
        %v2267 = vunpack.c.l.b16 %v2196
        %v2268 = vunpack.c.l.b16 %v2197
        %v2269 = vunpack.c.l.b16 %v2198
        %v2270 = vunpack.c.l.b16 %v2199
        %v2271 = vunpack.c.l.b16 %v2200
        %v2272 = vunpack.c.l.b16 %v2201
        %v2273 = vunpack.c.l.b16 %v2202
        %v2274 = vunpack.c.l.b16 %v2203
        %v2275 = vunpack.c.l.b16 %v2204
        %v2276 = vunpack.c.l.b16 %v2205
        %v2277 = vunpack.c.l.b16 %v2206
        %v2278 = vunpack.c.l.b16 %v2207
        %v2279 = vunpack.c.l.b16 %v2208
        %v2280 = vunpack.c.l.b16 %v2209
        %v2281 = vunpack.c.l.b16 %v2210
        %v2282 = vunpack.c.l.b16 %v2211
        %v2283 = vunpack.c.l.b16 %v2212
        %v2284 = vunpack.c.l.b16 %v2213
        %v2285 = vunpack.c.l.b16 %v2214
        %v2286 = vunpack.c.l.b16 %v2215
        %v2287 = vunpack.c.l.b16 %v2216
        %v2288 = vunpack.c.l.b16 %v2217
        %v2289 = vunpack.c.l.b16 %v2218
        %v2290 = vunpack.c.l.b16 %v2219
        %v2291 = vunpack.c.l.b16 %v2220
        %v2292 = vunpack.c.l.b16 %v2221
        %v2293 = vpack.c.b16 %v2262, %v2261
        %v2294 = vpack.c.b16 %v2264, %v2263
        %v2295 = vpack.c.b16 %v2266, %v2265
        %v2296 = vpack.c.b16 %v2268, %v2267
        %v2297 = vpack.c.b16 %v2270, %v2269
        %v2298 = vpack.c.b16 %v2272, %v2271
        %v2299 = vpack.c.b16 %v2274, %v2273
        %v2300 = vpack.c.b16 %v2276, %v2275
        %v2301 = vpack.c.b16 %v2278, %v2277
        %v2302 = vpack.c.b16 %v2280, %v2279
        %v2303 = vpack.c.b16 %v2282, %v2281
        %v2304 = vpack.c.b16 %v2284, %v2283
        %v2305 = vpack.c.b16 %v2286, %v2285
        %v2306 = vpack.c.b16 %v2288, %v2287
        %v2307 = vpack.c.b16 %v2290, %v2289
        %v2308 = vpack.c.b16 %v2292, %v2291
        %2325 = vmatprep.subr.bf16.mxu0 0
        %2326 = vmatpush1.bf16.msra.mxu0 %v2293
        %2327 = vmatprep.subr.bf16.mxu0 0
        %2328 = vmatpush1.bf16.msra.mxu0 %v2294
        %2329 = vmatprep.subr.bf16.mxu0 0
        %2330 = vmatpush1.bf16.msra.mxu0 %v2295
        %2331 = vmatprep.subr.bf16.mxu0 0
        %2332 = vmatpush1.bf16.msra.mxu0 %v2296
        %2333 = vmatprep.subr.bf16.mxu0 0
        %2334 = vmatpush1.bf16.msra.mxu0 %v2297
        %2335 = vmatprep.subr.bf16.mxu0 0
        %2336 = vmatpush1.bf16.msra.mxu0 %v2298
        %2337 = vmatprep.subr.bf16.mxu0 0
        %2338 = vmatpush1.bf16.msra.mxu0 %v2299
        %2339 = vmatprep.subr.bf16.mxu0 0
        %2340 = vmatpush1.bf16.msra.mxu0 %v2300
        %2341 = vmatprep.subr.bf16.mxu0 0
        %2342 = vmatpush1.bf16.msra.mxu0 %v2301
        %2343 = vmatprep.subr.bf16.mxu0 0
        %2344 = vmatpush1.bf16.msra.mxu0 %v2302
        %2345 = vmatprep.subr.bf16.mxu0 0
        %2346 = vmatpush1.bf16.msra.mxu0 %v2303
        %2347 = vmatprep.subr.bf16.mxu0 0
        %2348 = vmatpush1.bf16.msra.mxu0 %v2304
        %2349 = vmatprep.subr.bf16.mxu0 0
        %2350 = vmatpush1.bf16.msra.mxu0 %v2305
        %2351 = vmatprep.subr.bf16.mxu0 0
        %2352 = vmatpush1.bf16.msra.mxu0 %v2306
        %2353 = vmatprep.subr.bf16.mxu0 0
        %2354 = vmatpush1.bf16.msra.mxu0 %v2307
        %2355 = vmatprep.subr.bf16.mxu0 0
        %2356 = vmatpush1.bf16.msra.mxu0 %v2308
        %2357 = vmatprep.mubr.bf16.mxu0 %v2189
        %2358 = vmatmul.mubr.bf16.gmra.mrb[0].mxu0 %v2188
        %v2359 = vpop.f32.mrb[0].mxu0
        %v2360 = vadd.f32 %v2227, %v2359
        %v2361 = vpop.f32.mrb[0].mxu0
        %v2362 = vpop.f32.mrb[0].mxu0
        %v2363 = vadd.f32 %v2227, %v2362
        %v2364 = vpop.f32.mrb[0].mxu0
        %2365 = vdwg.mxu0
        %v2366 = vadd.f32 %v2360, %v2003
        %v2367 = vadd.f32 %v2363, %v2004
        %p2368 = scmp.eq.s32.totalorder %s32, 11
        %p2369 = scmp.ne.s32.totalorder %s32, 11
        // Predicated region
        $region85: #{clip_forward.3} parent=79 // pred_check
          %p2370 = pneg %p2369
        $region86: #{clip_forward.3} parent=79 // pred_check_branch
          %2372 = sbr.rel (%p2370) target = $region88
        $region87: #{clip_forward.3} parent=79 // pred_region
          %2373 = vst.msk [vmem:[#allocation6] sm:$0xff] %vm713, %v2366
          %2374 = vst.msk [vmem:[#allocation6 + $0x8] sm:$0xff] %vm713, %v2367
        $region88: #{clip_forward.3} parent=79 // pred_fallthru
          _
        // Predicated region
        $region89: #{clip_forward.3} parent=79 // pred_check
          %p2375 = pneg %p2368
        $region90: #{clip_forward.3} parent=79 // pred_check_branch
          %2377 = sbr.rel (%p2375) target = $region92
        $region91: #{clip_forward.3} parent=79 // pred_region
          %v2378 = vld [vmem:[%s13] sm:$0x1]
          %v2379 = vld [vmem:[%s14] sm:$0x1]
          %v2380 = vsel %vm713, %v2366, 0.0
          %2381 = vadd.xlane.f32.xlu0 %v2380
          %v2382 = vpop.xlane.xlu0 %2381
          %v2383 = vsel %vm713, %v2367, 0.0
          %2384 = vadd.xlane.f32.xlu0 %v2383
          %v2385 = vpop.xlane.xlu0 %2384
          %v2386 = vmul.f32 %v2382, %v720
          %v2387 = vmul.f32 %v2385, %v720
          %v2388 = vsub.f32 %v2366, %v2386
          %v2389 = vsub.f32 %v2367, %v2387
          %v2390 = vmul.f32 %v2388, %v2388
          %v2391 = vmul.f32 %v2389, %v2389
          %v2392 = vsel %vm713, %v2390, 0.0
          %2393 = vadd.xlane.f32.xlu0 %v2392
          %v2394 = vpop.xlane.xlu0 %2393
          %v2395 = vsel %vm713, %v2391, 0.0
          %2396 = vadd.xlane.f32.xlu0 %v2395
          %v2397 = vpop.xlane.xlu0 %2396
          %v2398 = vmul.f32 %v2394, %v720
          %v2399 = vmul.f32 %v2397, %v720
          %v2400 = vadd.f32 %v2398, 1e-05
          %v2401 = vadd.f32 %v2399, 1e-05
          %v2402 = vrsqrt.pop %v2400
          %v2403 = vrsqrt.pop %v2401
          %v2404 = vmul.f32 %v2388, %v2402
          %v2405 = vmul.f32 %v2389, %v2403
          %v2407 = vlaneseq
          %v2408 = vshrl.u32 %v2407, 7
          %v2409 = vsub.s32 0, %v2408
          %v2410 = vrot.slane %v2378, %v2409
          %v2412 = vmul.f32 %v2404, %v2410
          %v2413 = vmul.f32 %v2405, %v2410
          %v2415 = vlaneseq
          %v2416 = vshrl.u32 %v2415, 7
          %v2417 = vsub.s32 0, %v2416
          %v2418 = vrot.slane %v2379, %v2417
          %v2420 = vadd.f32 %v2412, %v2418
          %v2421 = vadd.f32 %v2413, %v2418
          %2422 = vst.msk [vmem:[#allocation6] sm:$0xff] %vm713, %v2420
          %2423 = vst.msk [vmem:[#allocation6 + $0x8] sm:$0xff] %vm713, %v2421
        $region92: #{clip_forward.3} parent=79 // pred_fallthru
          _
        // Predicated region
        $region93: #{clip_forward.3} parent=79 // pred_check
          %p2424 = pneg %p437
        $region94: #{clip_forward.3} parent=79 // pred_check_branch
          %2426 = sbr.rel (%p2424) target = $region96
        $region95: #{clip_forward.3} parent=79 // pred_region
          %s2427 = smul.u32 2, %s31
          %s2429 = ssub.s32 256, 256
          %2430 = vsyncadd [#allocation7], %s2429
          %s2431 = smul.addr %s2427, 128
          %s2432 = scalar_lea.hbm %s15, %s2431
          %s2433 = sshll.u32 [#allocation6], 4
          %s2434 = int_to_ptr.vmem [resolvable:$true] %s2433
          %2439 = dma.vmem_to_hbm [thread:$0]  %s2434, 256, %s2432, [#allocation7], 128, 128, 8
        $region96: #{clip_forward.3} parent=79 // pred_fallthru
          _
        // Predicated region
        $region97: #{clip_forward.3} parent=79 // pred_check
          %p2440 = pneg %p437
        $region98: #{clip_forward.3} parent=79 // pred_check_branch
          %2442 = sbr.rel (%p2440) target = $region100
        $region99: #{clip_forward.3} parent=79 // pred_region
          %2443 = dma.done [#allocation7], 256
        $region100: #{clip_forward.3} parent=79 // pred_fallthru
          _
      $region80: #{clip_forward.3} parent=5 // pred_fallthru
        _
      %p2444 = scmp.le.s32.totalorder 2, %s22
      // Predicated region
      $region101: #{clip_forward.3} parent=5 // pred_check
        %p2445 = pneg %p2444
      $region102: #{clip_forward.3} parent=5 // pred_check_branch
        %2447 = sbr.rel (%p2445) target = $region104
      $region103: #{clip_forward.3} parent=5 // pred_region
        %s2448 = ssub.s32 %s22, 2
      $region104: #{clip_forward.3} parent=5 // pred_fallthru
        _
    $region6: #{clip_forward.3} parent=1 // loop_footer
      %s26 = sadd.s32 1, %s22
    $region7: #{clip_forward.3} parent=1 // loop_footer_branch
      %21 = sbr.rel target = $region3
    $region8: #{clip_forward.3} parent=1 // loop_exit
      _
    %2449 = vsyncpa [#allocation7], 1
    %s2450 = scalar_lea.sflag [#allocation7], 1
    %2451 = vsyncpa %s2450, 1

</llo_original>
